<compile_context>
chip_gen: v7x
topology: tpu7x:2x2x1
jax: 0.10.0
libtpu: 0.0.40
codegen_flags: <defaults>
</compile_context>

<pallas_src>
import functools
import math

import jax
import jax.numpy as jnp
from jax.experimental import pallas as pl
from jax.experimental.pallas import tpu as pltpu
from jax.scipy.linalg import block_diag

F32 = jnp.float32

# ----------------------------- config (small) ------------------------------
INPUT_DIMS = (8, 4, 4)          # per-modality feature dims
HIDDEN_DIMS = (16, 8, 8)        # per-modality LSTHM cell dims
SUM_IN = sum(INPUT_DIMS)        # 16
SUM_HIDDEN = sum(HIDDEN_DIMS)   # 32  (total_in_size of RecurrentFusion)
STEPS = 3
COMPRESSED_DIM = 16
COMPRESSION_CELL_DIM = 24
HLT_MEM_INIT_CELL_DIM = 24
OUTPUT_CELL_DIM = 24
OUTPUT_DIM = 4
BATCH = 2
TIME = 4

VMEM_SPEC = pl.BlockSpec(memory_space=pltpu.MemorySpace.VMEM)


# --------------------------- in-kernel helpers ------------------------------
def _gates(sums, dim):
    # Gate slices at 32-lane offsets of the 128-wide fused matmul result.
    # (Sub-128 lane slices -> masked selects; negligible at these sizes and
    #  keeps the MXU pass itself fully lane-dense.)
    f_t = jax.nn.sigmoid(sums[:, :dim])
    i_t = jax.nn.sigmoid(sums[:, dim:2 * dim])
    o_t = jax.nn.sigmoid(sums[:, 2 * dim:3 * dim])
    ch_t = jnp.tanh(sums[:, 3 * dim:])
    return f_t, i_t, o_t, ch_t


def _softmax_lastdim(x):
    m = jnp.max(x, axis=-1, keepdims=True)
    e = jnp.exp(x - m)
    return e * pl.reciprocal(jnp.sum(e, axis=-1, keepdims=True), approx=True)


# ------------------------------ fused kernel --------------------------------
def _rmfn_fused_kernel(
    x_ref, cfuse_ref,
    wx_ref, wh_ref, wz_ref, bl_ref,
    miw1_ref, mib1_ref, miw2_ref, mib2_ref,
    hww_ref, hwb_ref, huw_ref, hub_ref,
    fww_ref, fwb_ref, fuw_ref, fub_ref,
    cpw1_ref, cpb1_ref, cpw2_ref, cpb2_ref,
    fow1_ref, fob1_ref, fow2_ref, fob2_ref,
    out_ref,
    *, batch, tsteps, hidden, zdim, steps, apply_log_softmax):
    dot = functools.partial(jnp.dot, preferred_element_type=jnp.float32)

    # ---- hoisted out of the recurrence: input projection for ALL timesteps
    # (T*B, sum_in) @ (sum_in, 4*H) + combined LSTHM bias -> (T*B, 4*H=128)
    xw_all = dot(x_ref[...], wx_ref[...]) + bl_ref[...]

    # ---- hoisted: c_hlt = hlt_memory_init(model_input); model_input is the
    # constant zeros tensor in the reference code -> loop-invariant.
    model_input = jnp.zeros((batch, hidden), F32)
    mi_h = jnp.maximum(dot(model_input, miw1_ref[...]) + mib1_ref[...], 0.0)
    c_hlt0 = jax.nn.sigmoid(dot(mi_h, miw2_ref[...]) + mib2_ref[...])

    # weights loaded once; VMEM/vreg resident for the whole recurrence
    wh = wh_ref[...]
    wz = wz_ref[...]
    hww, hwb = hww_ref[...], hwb_ref[...]
    huw, hub = huw_ref[...], hub_ref[...]
    fww, fwb = fww_ref[...], fwb_ref[...]
    fuw, fub = fuw_ref[...], fub_ref[...]
    cpw1, cpb1 = cpw1_ref[...], cpb1_ref[...]
    cpw2, cpb2 = cpw2_ref[...], cpb2_ref[...]
    cfuse_all = cfuse_ref[...]

    c_cat = jnp.zeros((batch, hidden), F32)   # [c1|c2|c3] layout
    h_cat = jnp.zeros((batch, hidden), F32)   # [h1|h2|h3] layout
    z = jnp.zeros((batch, zdim), F32)

    total = []
    # T is a small static constant: fully unrolled inside the single launch.
    for t in range(tsteps):
        # ----- the three modality LSTHM cells as ONE 128-wide matmul -----
        sums = (xw_all[t * batch:(t + 1) * batch]
                + dot(h_cat, wh) + dot(z, wz))
        f_t, i_t, o_t, ch_t = _gates(sums, hidden)
        c_cat = f_t * c_cat + i_t * ch_t
        h_cat = jnp.tanh(c_cat) * o_t

        # ----- RecurrentFusion: hlt stage -----
        c_hlt = c_hlt0
        h_hlt = jnp.zeros((batch, hidden), F32)
        inp = model_input
        output_hlt = []
        for _ in range(steps):
            s = dot(inp, hww) + hwb + dot(h_hlt, huw) + hub
            f2, i2, o2, ch2 = _gates(s, hidden)
            c_hlt = f2 * c_hlt + i2 * ch2
            h_hlt = _softmax_lastdim(jnp.tanh(c_hlt) * o2)
            inp = model_input * h_hlt
            output_hlt.append(inp)

        # ----- RecurrentFusion: fuse stage -----
        c_fuse = cfuse_all[t * batch:(t + 1) * batch]
        h_fuse = jnp.zeros((batch, hidden), F32)
        output_fuse = []
        for i in range(steps):
            s = dot(output_hlt[i], fww) + fwb + dot(h_fuse, fuw) + fub
            f3, i3, o3, ch3 = _gates(s, hidden)
            c_fuse = f3 * c_fuse + i3 * ch3
            h_fuse = jnp.tanh(c_fuse) * o3
            output_fuse.append(h_fuse)

        # ----- compression SimpleNet + softmax (fused, no extra launch) -----
        zc = jnp.concatenate(output_fuse, axis=1)                  # (B, S*H)
        zh = jnp.maximum(dot(zc, cpw1) + cpb1, 0.0)
        z = _softmax_lastdim(jax.nn.sigmoid(dot(zh, cpw2) + cpb2))  # (B, zdim)

        total.append(jnp.concatenate([z, h_cat], axis=1))          # (B, zdim+H)

    # ----- fc_out batched over all timesteps (no recurrence on this path) ----
    tot = jnp.concatenate(total, axis=0)                           # (T*B, 48)
    oh = jnp.maximum(dot(tot, fow1_ref[...]) + fob1_ref[...], 0.0)
    logits = dot(oh, fow2_ref[...]) + fob2_ref[...]                # (T*B, O)
    if apply_log_softmax:
        m = jnp.max(logits, axis=-1, keepdims=True)
        sh = logits - m
        logits = sh - jnp.log(jnp.sum(jnp.exp(sh), axis=-1, keepdims=True))
    out_ref[...] = logits


# ----------------------------- parameter init -------------------------------
def _init_linear(key, fan_in, fan_out):
    k = 1.0 / math.sqrt(fan_in)            # matches torch nn.Linear default
    kw, kb = jax.random.split(key)
    w = jax.random.uniform(kw, (fan_in, fan_out), F32, -k, k)
    b = jax.random.uniform(kb, (1, fan_out), F32, -k, k)
    return w, b


def _fuse_lsthm(per_modality):
    """Fold the per-modality LSTHM weights into one lane-dense (*, 128) matmul.

    Columns are grouped as [F | I | O | CH], each SUM_HIDDEN wide, and within a
    group modalities sit at their cumulative hidden offsets, so the fused
    computation is exactly equivalent to running the three cells separately.
    """
    wx_g, wh_g, wz_g, b_g = [], [], [], []
    for g in range(4):
        wx_g.append(block_diag(*[p["wx"][:, g * hd:(g + 1) * hd]
                                 for p, hd in zip(per_modality, HIDDEN_DIMS)]))
        wh_g.append(block_diag(*[p["wh"][:, g * hd:(g + 1) * hd]
                                 for p, hd in zip(per_modality, HIDDEN_DIMS)]))
        wz_g.append(jnp.concatenate([p["wz"][:, g * hd:(g + 1) * hd]
                                     for p, hd in zip(per_modality, HIDDEN_DIMS)],
                                    axis=1))
        b_g.append(jnp.concatenate([p["b"][:, g * hd:(g + 1) * hd]
                                    for p, hd in zip(per_modality, HIDDEN_DIMS)],
                                   axis=1))
    return {"wx": jnp.concatenate(wx_g, axis=1),   # (SUM_IN, 4*SUM_HIDDEN)
            "wh": jnp.concatenate(wh_g, axis=1),   # (SUM_HIDDEN, 4*SUM_HIDDEN)
            "wz": jnp.concatenate(wz_g, axis=1),   # (COMPRESSED, 4*SUM_HIDDEN)
            "b": jnp.concatenate(b_g, axis=1)}     # (1, 4*SUM_HIDDEN)


def init_params(key):
    keys = iter(jax.random.split(key, 32))
    params = {}

    lsthm = []
    for in_d, hd in zip(INPUT_DIMS, HIDDEN_DIMS):
        wx, bx = _init_linear(next(keys), in_d, 4 * hd)
        wh, bh = _init_linear(next(keys), hd, 4 * hd)
        wz, bz = _init_linear(next(keys), COMPRESSED_DIM, 4 * hd)
        lsthm.append({"wx": wx, "wh": wh, "wz": wz, "b": bx + bh + bz})
    params["lsthm_fused"] = _fuse_lsthm(lsthm)

    w1, b1 = _init_linear(next(keys), SUM_HIDDEN, HLT_MEM_INIT_CELL_DIM)
    w2, b2 = _init_linear(next(keys), HLT_MEM_INIT_CELL_DIM, SUM_HIDDEN)
    params["hlt_mem_init"] = {"w1": w1, "b1": b1, "w2": w2, "b2": b2}

    for name in ("hlt_w", "hlt_u", "fuse_w", "fuse_u"):
        w, b = _init_linear(next(keys), SUM_HIDDEN, 4 * SUM_HIDDEN)
        params[name] = {"w": w, "b": b}

    w1, b1 = _init_linear(next(keys), STEPS * SUM_HIDDEN, COMPRESSION_CELL_DIM)
    w2, b2 = _init_linear(next(keys), COMPRESSION_CELL_DIM, COMPRESSED_DIM)
    params["compression"] = {"w1": w1, "b1": b1, "w2": w2, "b2": b2}

    w1, b1 = _init_linear(next(keys), COMPRESSED_DIM + SUM_HIDDEN, OUTPUT_CELL_DIM)
    w2, b2 = _init_linear(next(keys), OUTPUT_CELL_DIM, OUTPUT_DIM)
    params["fc_out"] = {"w1": w1, "b1": b1, "w2": w2, "b2": b2}
    return params


# ------------------------------ forward glue ---------------------------------
def rmfn_forward(params, in_modalities, key):
    in_modalities = in_modalities[:-2]          # last two entries dropped
    bsz = in_modalities[0].shape[0]
    tsteps = in_modalities[0].shape[1]

    # Time-major concat of all modality inputs: (T*B, SUM_IN).  One-time data
    # re-org outside the kernel; feeds the hoisted x @ Wx matmul.
    x_cat = jnp.concatenate(
        [jnp.transpose(x, (1, 0, 2)) for x in in_modalities], axis=-1
    ).reshape(tsteps * bsz, SUM_IN)

    # torch.rand -> deterministic uniform [0, 1) per timestep (time-major rows)
    c_fuse = jax.random.uniform(key, (tsteps * bsz, SUM_HIDDEN), F32)

    fused = params["lsthm_fused"]
    mi, cp, fo = params["hlt_mem_init"], params["compression"], params["fc_out"]

    out = pl.pallas_call(
        functools.partial(
            _rmfn_fused_kernel,
            batch=bsz, tsteps=tsteps, hidden=SUM_HIDDEN, zdim=COMPRESSED_DIM,
            steps=STEPS, apply_log_softmax=(OUTPUT_DIM != 1)),
        out_shape=jax.ShapeDtypeStruct((tsteps * bsz, OUTPUT_DIM), F32),
        in_specs=[VMEM_SPEC] * 26,
        out_specs=VMEM_SPEC,
    )(x_cat, c_fuse,
      fused["wx"], fused["wh"], fused["wz"], fused["b"],
      mi["w1"], mi["b1"], mi["w2"], mi["b2"],
      params["hlt_w"]["w"], params["hlt_w"]["b"],
      params["hlt_u"]["w"], params["hlt_u"]["b"],
      params["fuse_w"]["w"], params["fuse_w"]["b"],
      params["fuse_u"]["w"], params["fuse_u"]["b"],
      cp["w1"], cp["b1"], cp["w2"], cp["b2"],
      fo["w1"], fo["b1"], fo["w2"], fo["b2"])

    # (T*B, O) -> (B, T, O)   (matches torch.stack(..., dim=-2) ordering)
    return jnp.transpose(out.reshape(tsteps, bsz, OUTPUT_DIM), (1, 0, 2))


# --------------------------------- main --------------------------------------
if __name__ == "__main__":
    key = jax.random.PRNGKey(0)
    pkey, dkey, rkey = jax.random.split(key, 3)

    params = init_params(pkey)

    dkeys = jax.random.split(dkey, len(INPUT_DIMS) + 2)
    in_modalities = [
        jax.random.normal(dkeys[i], (BATCH, TIME, d), F32)
        for i, d in enumerate(INPUT_DIMS)
    ]
    # two trailing tensors (e.g. lengths / labels) that forward() slices off
    in_modalities.append(jax.random.normal(dkeys[-2], (BATCH, TIME), F32))
    in_modalities.append(jax.random.normal(dkeys[-1], (BATCH,), F32))

    out = jax.jit(rmfn_forward)(params, tuple(in_modalities), rkey)
    out = jax.block_until_ready(out)

    assert out.shape == (BATCH, TIME, OUTPUT_DIM), out.shape
    assert bool(jnp.all(jnp.isfinite(out)))
    print("KERNEL_OK")
</pallas_src>

<mosaic_0001>
module attributes {stable_mosaic.version = 11 : i64} {
  func.func @_rmfn_fused_kernel(%arg0: memref<8x16xf32, #tpu.memory_space<vmem>>, %arg1: memref<8x32xf32, #tpu.memory_space<vmem>>, %arg2: memref<16x128xf32, #tpu.memory_space<vmem>>, %arg3: memref<32x128xf32, #tpu.memory_space<vmem>>, %arg4: memref<16x128xf32, #tpu.memory_space<vmem>>, %arg5: memref<1x128xf32, #tpu.memory_space<vmem>>, %arg6: memref<32x24xf32, #tpu.memory_space<vmem>>, %arg7: memref<1x24xf32, #tpu.memory_space<vmem>>, %arg8: memref<24x32xf32, #tpu.memory_space<vmem>>, %arg9: memref<1x32xf32, #tpu.memory_space<vmem>>, %arg10: memref<32x128xf32, #tpu.memory_space<vmem>>, %arg11: memref<1x128xf32, #tpu.memory_space<vmem>>, %arg12: memref<32x128xf32, #tpu.memory_space<vmem>>, %arg13: memref<1x128xf32, #tpu.memory_space<vmem>>, %arg14: memref<32x128xf32, #tpu.memory_space<vmem>>, %arg15: memref<1x128xf32, #tpu.memory_space<vmem>>, %arg16: memref<32x128xf32, #tpu.memory_space<vmem>>, %arg17: memref<1x128xf32, #tpu.memory_space<vmem>>, %arg18: memref<96x24xf32, #tpu.memory_space<vmem>>, %arg19: memref<1x24xf32, #tpu.memory_space<vmem>>, %arg20: memref<24x16xf32, #tpu.memory_space<vmem>>, %arg21: memref<1x16xf32, #tpu.memory_space<vmem>>, %arg22: memref<48x24xf32, #tpu.memory_space<vmem>>, %arg23: memref<1x24xf32, #tpu.memory_space<vmem>>, %arg24: memref<24x4xf32, #tpu.memory_space<vmem>>, %arg25: memref<1x4xf32, #tpu.memory_space<vmem>>, %arg26: memref<8x4xf32, #tpu.memory_space<vmem>>) attributes {dimension_semantics = [], scalar_prefetch = 0 : i64, scratch_operands = 0 : i64, tpu.core_type = #tpu.core_type<tc>} {
    %c0 = arith.constant 0 : index
    %c0_0 = arith.constant 0 : index
    %0 = vector.load %arg0[%c0, %c0_0] : memref<8x16xf32, #tpu.memory_space<vmem>>, vector<8x16xf32>
    %c0_1 = arith.constant 0 : index
    %c0_2 = arith.constant 0 : index
    %1 = vector.load %arg2[%c0_1, %c0_2] : memref<16x128xf32, #tpu.memory_space<vmem>>, vector<16x128xf32>
    %cst = arith.constant dense<0.000000e+00> : vector<8x128xf32>
    %2 = tpu.matmul %0, %1, %cst {dimension_numbers = #tpu.dot_dimension_numbers<[1], [0], [0], [1], [0, 0, 1, 1], [], []>} : vector<8x16xf32>, vector<16x128xf32>, vector<8x128xf32> -> vector<8x128xf32>
    %c0_3 = arith.constant 0 : index
    %c0_4 = arith.constant 0 : index
    %3 = vector.load %arg5[%c0_3, %c0_4] : memref<1x128xf32, #tpu.memory_space<vmem>>, vector<1x128xf32>
    %4 = vector.broadcast %3 : vector<1x128xf32> to vector<8x128xf32>
    %5 = arith.addf %2, %4 : vector<8x128xf32>
    %cst_5 = arith.constant 0.000000e+00 : f32
    %6 = vector.broadcast %cst_5 : f32 to vector<2x32xf32>
    %c0_6 = arith.constant 0 : index
    %c0_7 = arith.constant 0 : index
    %7 = vector.load %arg6[%c0_6, %c0_7] : memref<32x24xf32, #tpu.memory_space<vmem>>, vector<32x24xf32>
    %cst_8 = arith.constant dense<0.000000e+00> : vector<2x24xf32>
    %8 = tpu.matmul %6, %7, %cst_8 {dimension_numbers = #tpu.dot_dimension_numbers<[1], [0], [0], [1], [0, 0, 1, 1], [], []>} : vector<2x32xf32>, vector<32x24xf32>, vector<2x24xf32> -> vector<2x24xf32>
    %c0_9 = arith.constant 0 : index
    %c0_10 = arith.constant 0 : index
    %9 = vector.load %arg7[%c0_9, %c0_10] : memref<1x24xf32, #tpu.memory_space<vmem>>, vector<1x24xf32>
    %10 = vector.broadcast %9 : vector<1x24xf32> to vector<2x24xf32>
    %11 = arith.addf %8, %10 : vector<2x24xf32>
    %cst_11 = arith.constant 0.000000e+00 : f32
    %12 = vector.broadcast %cst_11 : f32 to vector<2x24xf32>
    %13 = arith.maximumf %11, %12 : vector<2x24xf32>
    %c0_12 = arith.constant 0 : index
    %c0_13 = arith.constant 0 : index
    %14 = vector.load %arg8[%c0_12, %c0_13] : memref<24x32xf32, #tpu.memory_space<vmem>>, vector<24x32xf32>
    %cst_14 = arith.constant dense<0.000000e+00> : vector<2x32xf32>
    %15 = tpu.matmul %13, %14, %cst_14 {dimension_numbers = #tpu.dot_dimension_numbers<[1], [0], [0], [1], [0, 0, 1, 1], [], []>} : vector<2x24xf32>, vector<24x32xf32>, vector<2x32xf32> -> vector<2x32xf32>
    %c0_15 = arith.constant 0 : index
    %c0_16 = arith.constant 0 : index
    %16 = vector.load %arg9[%c0_15, %c0_16] : memref<1x32xf32, #tpu.memory_space<vmem>>, vector<1x32xf32>
    %17 = vector.broadcast %16 : vector<1x32xf32> to vector<2x32xf32>
    %18 = arith.addf %15, %17 : vector<2x32xf32>
    %19 = arith.negf %18 : vector<2x32xf32>
    %20 = math.exp %19 : vector<2x32xf32>
    %cst_17 = arith.constant 1.000000e+00 : f32
    %21 = vector.broadcast %cst_17 : f32 to vector<2x32xf32>
    %22 = arith.addf %21, %20 : vector<2x32xf32>
    %23 = arith.divf %21, %22 : vector<2x32xf32>
    %c0_18 = arith.constant 0 : index
    %c0_19 = arith.constant 0 : index
    %24 = vector.load %arg3[%c0_18, %c0_19] : memref<32x128xf32, #tpu.memory_space<vmem>>, vector<32x128xf32>
    %c0_20 = arith.constant 0 : index
    %c0_21 = arith.constant 0 : index
    %25 = vector.load %arg4[%c0_20, %c0_21] : memref<16x128xf32, #tpu.memory_space<vmem>>, vector<16x128xf32>
    %c0_22 = arith.constant 0 : index
    %c0_23 = arith.constant 0 : index
    %26 = vector.load %arg10[%c0_22, %c0_23] : memref<32x128xf32, #tpu.memory_space<vmem>>, vector<32x128xf32>
    %c0_24 = arith.constant 0 : index
    %c0_25 = arith.constant 0 : index
    %27 = vector.load %arg11[%c0_24, %c0_25] : memref<1x128xf32, #tpu.memory_space<vmem>>, vector<1x128xf32>
    %c0_26 = arith.constant 0 : index
    %c0_27 = arith.constant 0 : index
    %28 = vector.load %arg12[%c0_26, %c0_27] : memref<32x128xf32, #tpu.memory_space<vmem>>, vector<32x128xf32>
    %c0_28 = arith.constant 0 : index
    %c0_29 = arith.constant 0 : index
    %29 = vector.load %arg13[%c0_28, %c0_29] : memref<1x128xf32, #tpu.memory_space<vmem>>, vector<1x128xf32>
    %c0_30 = arith.constant 0 : index
    %c0_31 = arith.constant 0 : index
    %30 = vector.load %arg14[%c0_30, %c0_31] : memref<32x128xf32, #tpu.memory_space<vmem>>, vector<32x128xf32>
    %c0_32 = arith.constant 0 : index
    %c0_33 = arith.constant 0 : index
    %31 = vector.load %arg15[%c0_32, %c0_33] : memref<1x128xf32, #tpu.memory_space<vmem>>, vector<1x128xf32>
    %c0_34 = arith.constant 0 : index
    %c0_35 = arith.constant 0 : index
    %32 = vector.load %arg16[%c0_34, %c0_35] : memref<32x128xf32, #tpu.memory_space<vmem>>, vector<32x128xf32>
    %c0_36 = arith.constant 0 : index
    %c0_37 = arith.constant 0 : index
    %33 = vector.load %arg17[%c0_36, %c0_37] : memref<1x128xf32, #tpu.memory_space<vmem>>, vector<1x128xf32>
    %c0_38 = arith.constant 0 : index
    %c0_39 = arith.constant 0 : index
    %34 = vector.load %arg18[%c0_38, %c0_39] : memref<96x24xf32, #tpu.memory_space<vmem>>, vector<96x24xf32>
    %c0_40 = arith.constant 0 : index
    %c0_41 = arith.constant 0 : index
    %35 = vector.load %arg19[%c0_40, %c0_41] : memref<1x24xf32, #tpu.memory_space<vmem>>, vector<1x24xf32>
    %c0_42 = arith.constant 0 : index
    %c0_43 = arith.constant 0 : index
    %36 = vector.load %arg20[%c0_42, %c0_43] : memref<24x16xf32, #tpu.memory_space<vmem>>, vector<24x16xf32>
    %c0_44 = arith.constant 0 : index
    %c0_45 = arith.constant 0 : index
    %37 = vector.load %arg21[%c0_44, %c0_45] : memref<1x16xf32, #tpu.memory_space<vmem>>, vector<1x16xf32>
    %c0_46 = arith.constant 0 : index
    %c0_47 = arith.constant 0 : index
    %38 = vector.load %arg1[%c0_46, %c0_47] : memref<8x32xf32, #tpu.memory_space<vmem>>, vector<8x32xf32>
    %cst_48 = arith.constant 0.000000e+00 : f32
    %39 = vector.broadcast %cst_48 : f32 to vector<2x32xf32>
    %cst_49 = arith.constant 0.000000e+00 : f32
    %40 = vector.broadcast %cst_49 : f32 to vector<2x32xf32>
    %cst_50 = arith.constant 0.000000e+00 : f32
    %41 = vector.broadcast %cst_50 : f32 to vector<2x16xf32>
    %42 = vector.extract_strided_slice %5 {offsets = [0, 0], sizes = [2, 128], strides = [1, 1]} : vector<8x128xf32> to vector<2x128xf32>
    %cst_51 = arith.constant dense<0.000000e+00> : vector<2x128xf32>
    %43 = tpu.matmul %40, %24, %cst_51 {dimension_numbers = #tpu.dot_dimension_numbers<[1], [0], [0], [1], [0, 0, 1, 1], [], []>} : vector<2x32xf32>, vector<32x128xf32>, vector<2x128xf32> -> vector<2x128xf32>
    %44 = arith.addf %42, %43 : vector<2x128xf32>
    %cst_52 = arith.constant dense<0.000000e+00> : vector<2x128xf32>
    %45 = tpu.matmul %41, %25, %cst_52 {dimension_numbers = #tpu.dot_dimension_numbers<[1], [0], [0], [1], [0, 0, 1, 1], [], []>} : vector<2x16xf32>, vector<16x128xf32>, vector<2x128xf32> -> vector<2x128xf32>
    %46 = arith.addf %44, %45 : vector<2x128xf32>
    %47 = vector.extract_strided_slice %46 {offsets = [0, 0], sizes = [2, 32], strides = [1, 1]} : vector<2x128xf32> to vector<2x32xf32>
    %48 = arith.negf %47 : vector<2x32xf32>
    %49 = math.exp %48 : vector<2x32xf32>
    %cst_53 = arith.constant 1.000000e+00 : f32
    %50 = vector.broadcast %cst_53 : f32 to vector<2x32xf32>
    %51 = arith.addf %50, %49 : vector<2x32xf32>
    %52 = arith.divf %50, %51 : vector<2x32xf32>
    %53 = vector.extract_strided_slice %46 {offsets = [0, 32], sizes = [2, 32], strides = [1, 1]} : vector<2x128xf32> to vector<2x32xf32>
    %54 = arith.negf %53 : vector<2x32xf32>
    %55 = math.exp %54 : vector<2x32xf32>
    %cst_54 = arith.constant 1.000000e+00 : f32
    %56 = vector.broadcast %cst_54 : f32 to vector<2x32xf32>
    %57 = arith.addf %56, %55 : vector<2x32xf32>
    %58 = arith.divf %56, %57 : vector<2x32xf32>
    %59 = vector.extract_strided_slice %46 {offsets = [0, 64], sizes = [2, 32], strides = [1, 1]} : vector<2x128xf32> to vector<2x32xf32>
    %60 = arith.negf %59 : vector<2x32xf32>
    %61 = math.exp %60 : vector<2x32xf32>
    %cst_55 = arith.constant 1.000000e+00 : f32
    %62 = vector.broadcast %cst_55 : f32 to vector<2x32xf32>
    %63 = arith.addf %62, %61 : vector<2x32xf32>
    %64 = arith.divf %62, %63 : vector<2x32xf32>
    %65 = vector.extract_strided_slice %46 {offsets = [0, 96], sizes = [2, 32], strides = [1, 1]} : vector<2x128xf32> to vector<2x32xf32>
    %66 = math.tanh %65 : vector<2x32xf32>
    %67 = arith.mulf %52, %39 : vector<2x32xf32>
    %68 = arith.mulf %58, %66 : vector<2x32xf32>
    %69 = arith.addf %67, %68 : vector<2x32xf32>
    %70 = math.tanh %69 : vector<2x32xf32>
    %71 = arith.mulf %70, %64 : vector<2x32xf32>
    %cst_56 = arith.constant 0.000000e+00 : f32
    %72 = vector.broadcast %cst_56 : f32 to vector<2x32xf32>
    %cst_57 = arith.constant dense<0.000000e+00> : vector<2x128xf32>
    %73 = tpu.matmul %6, %26, %cst_57 {dimension_numbers = #tpu.dot_dimension_numbers<[1], [0], [0], [1], [0, 0, 1, 1], [], []>} : vector<2x32xf32>, vector<32x128xf32>, vector<2x128xf32> -> vector<2x128xf32>
    %74 = vector.broadcast %27 : vector<1x128xf32> to vector<2x128xf32>
    %75 = arith.addf %73, %74 : vector<2x128xf32>
    %cst_58 = arith.constant dense<0.000000e+00> : vector<2x128xf32>
    %76 = tpu.matmul %72, %28, %cst_58 {dimension_numbers = #tpu.dot_dimension_numbers<[1], [0], [0], [1], [0, 0, 1, 1], [], []>} : vector<2x32xf32>, vector<32x128xf32>, vector<2x128xf32> -> vector<2x128xf32>
    %77 = arith.addf %75, %76 : vector<2x128xf32>
    %78 = vector.broadcast %29 : vector<1x128xf32> to vector<2x128xf32>
    %79 = arith.addf %77, %78 : vector<2x128xf32>
    %80 = vector.extract_strided_slice %79 {offsets = [0, 0], sizes = [2, 32], strides = [1, 1]} : vector<2x128xf32> to vector<2x32xf32>
    %81 = arith.negf %80 : vector<2x32xf32>
    %82 = math.exp %81 : vector<2x32xf32>
    %cst_59 = arith.constant 1.000000e+00 : f32
    %83 = vector.broadcast %cst_59 : f32 to vector<2x32xf32>
    %84 = arith.addf %83, %82 : vector<2x32xf32>
    %85 = arith.divf %83, %84 : vector<2x32xf32>
    %86 = vector.extract_strided_slice %79 {offsets = [0, 32], sizes = [2, 32], strides = [1, 1]} : vector<2x128xf32> to vector<2x32xf32>
    %87 = arith.negf %86 : vector<2x32xf32>
    %88 = math.exp %87 : vector<2x32xf32>
    %cst_60 = arith.constant 1.000000e+00 : f32
    %89 = vector.broadcast %cst_60 : f32 to vector<2x32xf32>
    %90 = arith.addf %89, %88 : vector<2x32xf32>
    %91 = arith.divf %89, %90 : vector<2x32xf32>
    %92 = vector.extract_strided_slice %79 {offsets = [0, 64], sizes = [2, 32], strides = [1, 1]} : vector<2x128xf32> to vector<2x32xf32>
    %93 = arith.negf %92 : vector<2x32xf32>
    %94 = math.exp %93 : vector<2x32xf32>
    %cst_61 = arith.constant 1.000000e+00 : f32
    %95 = vector.broadcast %cst_61 : f32 to vector<2x32xf32>
    %96 = arith.addf %95, %94 : vector<2x32xf32>
    %97 = arith.divf %95, %96 : vector<2x32xf32>
    %98 = vector.extract_strided_slice %79 {offsets = [0, 96], sizes = [2, 32], strides = [1, 1]} : vector<2x128xf32> to vector<2x32xf32>
    %99 = math.tanh %98 : vector<2x32xf32>
    %100 = arith.mulf %85, %23 : vector<2x32xf32>
    %101 = arith.mulf %91, %99 : vector<2x32xf32>
    %102 = arith.addf %100, %101 : vector<2x32xf32>
    %103 = math.tanh %102 : vector<2x32xf32>
    %104 = arith.mulf %103, %97 : vector<2x32xf32>
    %cst_62 = arith.constant dense<0xFF800000> : vector<2xf32>
    %105 = vector.multi_reduction <maximumf>, %104, %cst_62 [1] : vector<2x32xf32> to vector<2xf32>
    %106 = vector.shape_cast %105 : vector<2xf32> to vector<2x1xf32>
    %107 = vector.broadcast %106 : vector<2x1xf32> to vector<2x32xf32>
    %108 = arith.subf %104, %107 : vector<2x32xf32>
    %109 = math.exp %108 : vector<2x32xf32>
    %cst_63 = arith.constant dense<0.000000e+00> : vector<2xf32>
    %110 = vector.multi_reduction <add>, %109, %cst_63 [1] : vector<2x32xf32> to vector<2xf32>
    %111 = vector.shape_cast %110 : vector<2xf32> to vector<2x1xf32>
    %112 = tpu.reciprocal %111 {approx = true} : vector<2x1xf32> -> vector<2x1xf32>
    %113 = vector.broadcast %112 : vector<2x1xf32> to vector<2x32xf32>
    %114 = arith.mulf %109, %113 : vector<2x32xf32>
    %115 = arith.mulf %6, %114 : vector<2x32xf32>
    %cst_64 = arith.constant dense<0.000000e+00> : vector<2x128xf32>
    %116 = tpu.matmul %115, %26, %cst_64 {dimension_numbers = #tpu.dot_dimension_numbers<[1], [0], [0], [1], [0, 0, 1, 1], [], []>} : vector<2x32xf32>, vector<32x128xf32>, vector<2x128xf32> -> vector<2x128xf32>
    %117 = vector.broadcast %27 : vector<1x128xf32> to vector<2x128xf32>
    %118 = arith.addf %116, %117 : vector<2x128xf32>
    %cst_65 = arith.constant dense<0.000000e+00> : vector<2x128xf32>
    %119 = tpu.matmul %114, %28, %cst_65 {dimension_numbers = #tpu.dot_dimension_numbers<[1], [0], [0], [1], [0, 0, 1, 1], [], []>} : vector<2x32xf32>, vector<32x128xf32>, vector<2x128xf32> -> vector<2x128xf32>
    %120 = arith.addf %118, %119 : vector<2x128xf32>
    %121 = vector.broadcast %29 : vector<1x128xf32> to vector<2x128xf32>
    %122 = arith.addf %120, %121 : vector<2x128xf32>
    %123 = vector.extract_strided_slice %122 {offsets = [0, 0], sizes = [2, 32], strides = [1, 1]} : vector<2x128xf32> to vector<2x32xf32>
    %124 = arith.negf %123 : vector<2x32xf32>
    %125 = math.exp %124 : vector<2x32xf32>
    %cst_66 = arith.constant 1.000000e+00 : f32
    %126 = vector.broadcast %cst_66 : f32 to vector<2x32xf32>
    %127 = arith.addf %126, %125 : vector<2x32xf32>
    %128 = arith.divf %126, %127 : vector<2x32xf32>
    %129 = vector.extract_strided_slice %122 {offsets = [0, 32], sizes = [2, 32], strides = [1, 1]} : vector<2x128xf32> to vector<2x32xf32>
    %130 = arith.negf %129 : vector<2x32xf32>
    %131 = math.exp %130 : vector<2x32xf32>
    %cst_67 = arith.constant 1.000000e+00 : f32
    %132 = vector.broadcast %cst_67 : f32 to vector<2x32xf32>
    %133 = arith.addf %132, %131 : vector<2x32xf32>
    %134 = arith.divf %132, %133 : vector<2x32xf32>
    %135 = vector.extract_strided_slice %122 {offsets = [0, 64], sizes = [2, 32], strides = [1, 1]} : vector<2x128xf32> to vector<2x32xf32>
    %136 = arith.negf %135 : vector<2x32xf32>
    %137 = math.exp %136 : vector<2x32xf32>
    %cst_68 = arith.constant 1.000000e+00 : f32
    %138 = vector.broadcast %cst_68 : f32 to vector<2x32xf32>
    %139 = arith.addf %138, %137 : vector<2x32xf32>
    %140 = arith.divf %138, %139 : vector<2x32xf32>
    %141 = vector.extract_strided_slice %122 {offsets = [0, 96], sizes = [2, 32], strides = [1, 1]} : vector<2x128xf32> to vector<2x32xf32>
    %142 = math.tanh %141 : vector<2x32xf32>
    %143 = arith.mulf %128, %102 : vector<2x32xf32>
    %144 = arith.mulf %134, %142 : vector<2x32xf32>
    %145 = arith.addf %143, %144 : vector<2x32xf32>
    %146 = math.tanh %145 : vector<2x32xf32>
    %147 = arith.mulf %146, %140 : vector<2x32xf32>
    %cst_69 = arith.constant dense<0xFF800000> : vector<2xf32>
    %148 = vector.multi_reduction <maximumf>, %147, %cst_69 [1] : vector<2x32xf32> to vector<2xf32>
    %149 = vector.shape_cast %148 : vector<2xf32> to vector<2x1xf32>
    %150 = vector.broadcast %149 : vector<2x1xf32> to vector<2x32xf32>
    %151 = arith.subf %147, %150 : vector<2x32xf32>
    %152 = math.exp %151 : vector<2x32xf32>
    %cst_70 = arith.constant dense<0.000000e+00> : vector<2xf32>
    %153 = vector.multi_reduction <add>, %152, %cst_70 [1] : vector<2x32xf32> to vector<2xf32>
    %154 = vector.shape_cast %153 : vector<2xf32> to vector<2x1xf32>
    %155 = tpu.reciprocal %154 {approx = true} : vector<2x1xf32> -> vector<2x1xf32>
    %156 = vector.broadcast %155 : vector<2x1xf32> to vector<2x32xf32>
    %157 = arith.mulf %152, %156 : vector<2x32xf32>
    %158 = arith.mulf %6, %157 : vector<2x32xf32>
    %cst_71 = arith.constant dense<0.000000e+00> : vector<2x128xf32>
    %159 = tpu.matmul %158, %26, %cst_71 {dimension_numbers = #tpu.dot_dimension_numbers<[1], [0], [0], [1], [0, 0, 1, 1], [], []>} : vector<2x32xf32>, vector<32x128xf32>, vector<2x128xf32> -> vector<2x128xf32>
    %160 = vector.broadcast %27 : vector<1x128xf32> to vector<2x128xf32>
    %161 = arith.addf %159, %160 : vector<2x128xf32>
    %cst_72 = arith.constant dense<0.000000e+00> : vector<2x128xf32>
    %162 = tpu.matmul %157, %28, %cst_72 {dimension_numbers = #tpu.dot_dimension_numbers<[1], [0], [0], [1], [0, 0, 1, 1], [], []>} : vector<2x32xf32>, vector<32x128xf32>, vector<2x128xf32> -> vector<2x128xf32>
    %163 = arith.addf %161, %162 : vector<2x128xf32>
    %164 = vector.broadcast %29 : vector<1x128xf32> to vector<2x128xf32>
    %165 = arith.addf %163, %164 : vector<2x128xf32>
    %166 = vector.extract_strided_slice %165 {offsets = [0, 0], sizes = [2, 32], strides = [1, 1]} : vector<2x128xf32> to vector<2x32xf32>
    %167 = arith.negf %166 : vector<2x32xf32>
    %168 = math.exp %167 : vector<2x32xf32>
    %cst_73 = arith.constant 1.000000e+00 : f32
    %169 = vector.broadcast %cst_73 : f32 to vector<2x32xf32>
    %170 = arith.addf %169, %168 : vector<2x32xf32>
    %171 = arith.divf %169, %170 : vector<2x32xf32>
    %172 = vector.extract_strided_slice %165 {offsets = [0, 32], sizes = [2, 32], strides = [1, 1]} : vector<2x128xf32> to vector<2x32xf32>
    %173 = arith.negf %172 : vector<2x32xf32>
    %174 = math.exp %173 : vector<2x32xf32>
    %cst_74 = arith.constant 1.000000e+00 : f32
    %175 = vector.broadcast %cst_74 : f32 to vector<2x32xf32>
    %176 = arith.addf %175, %174 : vector<2x32xf32>
    %177 = arith.divf %175, %176 : vector<2x32xf32>
    %178 = vector.extract_strided_slice %165 {offsets = [0, 64], sizes = [2, 32], strides = [1, 1]} : vector<2x128xf32> to vector<2x32xf32>
    %179 = arith.negf %178 : vector<2x32xf32>
    %180 = math.exp %179 : vector<2x32xf32>
    %cst_75 = arith.constant 1.000000e+00 : f32
    %181 = vector.broadcast %cst_75 : f32 to vector<2x32xf32>
    %182 = arith.addf %181, %180 : vector<2x32xf32>
    %183 = arith.divf %181, %182 : vector<2x32xf32>
    %184 = vector.extract_strided_slice %165 {offsets = [0, 96], sizes = [2, 32], strides = [1, 1]} : vector<2x128xf32> to vector<2x32xf32>
    %185 = math.tanh %184 : vector<2x32xf32>
    %186 = arith.mulf %171, %145 : vector<2x32xf32>
    %187 = arith.mulf %177, %185 : vector<2x32xf32>
    %188 = arith.addf %186, %187 : vector<2x32xf32>
    %189 = math.tanh %188 : vector<2x32xf32>
    %190 = arith.mulf %189, %183 : vector<2x32xf32>
    %cst_76 = arith.constant dense<0xFF800000> : vector<2xf32>
    %191 = vector.multi_reduction <maximumf>, %190, %cst_76 [1] : vector<2x32xf32> to vector<2xf32>
    %192 = vector.shape_cast %191 : vector<2xf32> to vector<2x1xf32>
    %193 = vector.broadcast %192 : vector<2x1xf32> to vector<2x32xf32>
    %194 = arith.subf %190, %193 : vector<2x32xf32>
    %195 = math.exp %194 : vector<2x32xf32>
    %cst_77 = arith.constant dense<0.000000e+00> : vector<2xf32>
    %196 = vector.multi_reduction <add>, %195, %cst_77 [1] : vector<2x32xf32> to vector<2xf32>
    %197 = vector.shape_cast %196 : vector<2xf32> to vector<2x1xf32>
    %198 = tpu.reciprocal %197 {approx = true} : vector<2x1xf32> -> vector<2x1xf32>
    %199 = vector.broadcast %198 : vector<2x1xf32> to vector<2x32xf32>
    %200 = arith.mulf %195, %199 : vector<2x32xf32>
    %201 = arith.mulf %6, %200 : vector<2x32xf32>
    %202 = vector.extract_strided_slice %38 {offsets = [0, 0], sizes = [2, 32], strides = [1, 1]} : vector<8x32xf32> to vector<2x32xf32>
    %cst_78 = arith.constant 0.000000e+00 : f32
    %203 = vector.broadcast %cst_78 : f32 to vector<2x32xf32>
    %cst_79 = arith.constant dense<0.000000e+00> : vector<2x128xf32>
    %204 = tpu.matmul %115, %30, %cst_79 {dimension_numbers = #tpu.dot_dimension_numbers<[1], [0], [0], [1], [0, 0, 1, 1], [], []>} : vector<2x32xf32>, vector<32x128xf32>, vector<2x128xf32> -> vector<2x128xf32>
    %205 = vector.broadcast %31 : vector<1x128xf32> to vector<2x128xf32>
    %206 = arith.addf %204, %205 : vector<2x128xf32>
    %cst_80 = arith.constant dense<0.000000e+00> : vector<2x128xf32>
    %207 = tpu.matmul %203, %32, %cst_80 {dimension_numbers = #tpu.dot_dimension_numbers<[1], [0], [0], [1], [0, 0, 1, 1], [], []>} : vector<2x32xf32>, vector<32x128xf32>, vector<2x128xf32> -> vector<2x128xf32>
    %208 = arith.addf %206, %207 : vector<2x128xf32>
    %209 = vector.broadcast %33 : vector<1x128xf32> to vector<2x128xf32>
    %210 = arith.addf %208, %209 : vector<2x128xf32>
    %211 = vector.extract_strided_slice %210 {offsets = [0, 0], sizes = [2, 32], strides = [1, 1]} : vector<2x128xf32> to vector<2x32xf32>
    %212 = arith.negf %211 : vector<2x32xf32>
    %213 = math.exp %212 : vector<2x32xf32>
    %cst_81 = arith.constant 1.000000e+00 : f32
    %214 = vector.broadcast %cst_81 : f32 to vector<2x32xf32>
    %215 = arith.addf %214, %213 : vector<2x32xf32>
    %216 = arith.divf %214, %215 : vector<2x32xf32>
    %217 = vector.extract_strided_slice %210 {offsets = [0, 32], sizes = [2, 32], strides = [1, 1]} : vector<2x128xf32> to vector<2x32xf32>
    %218 = arith.negf %217 : vector<2x32xf32>
    %219 = math.exp %218 : vector<2x32xf32>
    %cst_82 = arith.constant 1.000000e+00 : f32
    %220 = vector.broadcast %cst_82 : f32 to vector<2x32xf32>
    %221 = arith.addf %220, %219 : vector<2x32xf32>
    %222 = arith.divf %220, %221 : vector<2x32xf32>
    %223 = vector.extract_strided_slice %210 {offsets = [0, 64], sizes = [2, 32], strides = [1, 1]} : vector<2x128xf32> to vector<2x32xf32>
    %224 = arith.negf %223 : vector<2x32xf32>
    %225 = math.exp %224 : vector<2x32xf32>
    %cst_83 = arith.constant 1.000000e+00 : f32
    %226 = vector.broadcast %cst_83 : f32 to vector<2x32xf32>
    %227 = arith.addf %226, %225 : vector<2x32xf32>
    %228 = arith.divf %226, %227 : vector<2x32xf32>
    %229 = vector.extract_strided_slice %210 {offsets = [0, 96], sizes = [2, 32], strides = [1, 1]} : vector<2x128xf32> to vector<2x32xf32>
    %230 = math.tanh %229 : vector<2x32xf32>
    %231 = arith.mulf %216, %202 : vector<2x32xf32>
    %232 = arith.mulf %222, %230 : vector<2x32xf32>
    %233 = arith.addf %231, %232 : vector<2x32xf32>
    %234 = math.tanh %233 : vector<2x32xf32>
    %235 = arith.mulf %234, %228 : vector<2x32xf32>
    %cst_84 = arith.constant dense<0.000000e+00> : vector<2x128xf32>
    %236 = tpu.matmul %158, %30, %cst_84 {dimension_numbers = #tpu.dot_dimension_numbers<[1], [0], [0], [1], [0, 0, 1, 1], [], []>} : vector<2x32xf32>, vector<32x128xf32>, vector<2x128xf32> -> vector<2x128xf32>
    %237 = vector.broadcast %31 : vector<1x128xf32> to vector<2x128xf32>
    %238 = arith.addf %236, %237 : vector<2x128xf32>
    %cst_85 = arith.constant dense<0.000000e+00> : vector<2x128xf32>
    %239 = tpu.matmul %235, %32, %cst_85 {dimension_numbers = #tpu.dot_dimension_numbers<[1], [0], [0], [1], [0, 0, 1, 1], [], []>} : vector<2x32xf32>, vector<32x128xf32>, vector<2x128xf32> -> vector<2x128xf32>
    %240 = arith.addf %238, %239 : vector<2x128xf32>
    %241 = vector.broadcast %33 : vector<1x128xf32> to vector<2x128xf32>
    %242 = arith.addf %240, %241 : vector<2x128xf32>
    %243 = vector.extract_strided_slice %242 {offsets = [0, 0], sizes = [2, 32], strides = [1, 1]} : vector<2x128xf32> to vector<2x32xf32>
    %244 = arith.negf %243 : vector<2x32xf32>
    %245 = math.exp %244 : vector<2x32xf32>
    %cst_86 = arith.constant 1.000000e+00 : f32
    %246 = vector.broadcast %cst_86 : f32 to vector<2x32xf32>
    %247 = arith.addf %246, %245 : vector<2x32xf32>
    %248 = arith.divf %246, %247 : vector<2x32xf32>
    %249 = vector.extract_strided_slice %242 {offsets = [0, 32], sizes = [2, 32], strides = [1, 1]} : vector<2x128xf32> to vector<2x32xf32>
    %250 = arith.negf %249 : vector<2x32xf32>
    %251 = math.exp %250 : vector<2x32xf32>
    %cst_87 = arith.constant 1.000000e+00 : f32
    %252 = vector.broadcast %cst_87 : f32 to vector<2x32xf32>
    %253 = arith.addf %252, %251 : vector<2x32xf32>
    %254 = arith.divf %252, %253 : vector<2x32xf32>
    %255 = vector.extract_strided_slice %242 {offsets = [0, 64], sizes = [2, 32], strides = [1, 1]} : vector<2x128xf32> to vector<2x32xf32>
    %256 = arith.negf %255 : vector<2x32xf32>
    %257 = math.exp %256 : vector<2x32xf32>
    %cst_88 = arith.constant 1.000000e+00 : f32
    %258 = vector.broadcast %cst_88 : f32 to vector<2x32xf32>
    %259 = arith.addf %258, %257 : vector<2x32xf32>
    %260 = arith.divf %258, %259 : vector<2x32xf32>
    %261 = vector.extract_strided_slice %242 {offsets = [0, 96], sizes = [2, 32], strides = [1, 1]} : vector<2x128xf32> to vector<2x32xf32>
    %262 = math.tanh %261 : vector<2x32xf32>
    %263 = arith.mulf %248, %233 : vector<2x32xf32>
    %264 = arith.mulf %254, %262 : vector<2x32xf32>
    %265 = arith.addf %263, %264 : vector<2x32xf32>
    %266 = math.tanh %265 : vector<2x32xf32>
    %267 = arith.mulf %266, %260 : vector<2x32xf32>
    %cst_89 = arith.constant dense<0.000000e+00> : vector<2x128xf32>
    %268 = tpu.matmul %201, %30, %cst_89 {dimension_numbers = #tpu.dot_dimension_numbers<[1], [0], [0], [1], [0, 0, 1, 1], [], []>} : vector<2x32xf32>, vector<32x128xf32>, vector<2x128xf32> -> vector<2x128xf32>
    %269 = vector.broadcast %31 : vector<1x128xf32> to vector<2x128xf32>
    %270 = arith.addf %268, %269 : vector<2x128xf32>
    %cst_90 = arith.constant dense<0.000000e+00> : vector<2x128xf32>
    %271 = tpu.matmul %267, %32, %cst_90 {dimension_numbers = #tpu.dot_dimension_numbers<[1], [0], [0], [1], [0, 0, 1, 1], [], []>} : vector<2x32xf32>, vector<32x128xf32>, vector<2x128xf32> -> vector<2x128xf32>
    %272 = arith.addf %270, %271 : vector<2x128xf32>
    %273 = vector.broadcast %33 : vector<1x128xf32> to vector<2x128xf32>
    %274 = arith.addf %272, %273 : vector<2x128xf32>
    %275 = vector.extract_strided_slice %274 {offsets = [0, 0], sizes = [2, 32], strides = [1, 1]} : vector<2x128xf32> to vector<2x32xf32>
    %276 = arith.negf %275 : vector<2x32xf32>
    %277 = math.exp %276 : vector<2x32xf32>
    %cst_91 = arith.constant 1.000000e+00 : f32
    %278 = vector.broadcast %cst_91 : f32 to vector<2x32xf32>
    %279 = arith.addf %278, %277 : vector<2x32xf32>
    %280 = arith.divf %278, %279 : vector<2x32xf32>
    %281 = vector.extract_strided_slice %274 {offsets = [0, 32], sizes = [2, 32], strides = [1, 1]} : vector<2x128xf32> to vector<2x32xf32>
    %282 = arith.negf %281 : vector<2x32xf32>
    %283 = math.exp %282 : vector<2x32xf32>
    %cst_92 = arith.constant 1.000000e+00 : f32
    %284 = vector.broadcast %cst_92 : f32 to vector<2x32xf32>
    %285 = arith.addf %284, %283 : vector<2x32xf32>
    %286 = arith.divf %284, %285 : vector<2x32xf32>
    %287 = vector.extract_strided_slice %274 {offsets = [0, 64], sizes = [2, 32], strides = [1, 1]} : vector<2x128xf32> to vector<2x32xf32>
    %288 = arith.negf %287 : vector<2x32xf32>
    %289 = math.exp %288 : vector<2x32xf32>
    %cst_93 = arith.constant 1.000000e+00 : f32
    %290 = vector.broadcast %cst_93 : f32 to vector<2x32xf32>
    %291 = arith.addf %290, %289 : vector<2x32xf32>
    %292 = arith.divf %290, %291 : vector<2x32xf32>
    %293 = vector.extract_strided_slice %274 {offsets = [0, 96], sizes = [2, 32], strides = [1, 1]} : vector<2x128xf32> to vector<2x32xf32>
    %294 = math.tanh %293 : vector<2x32xf32>
    %295 = arith.mulf %280, %265 : vector<2x32xf32>
    %296 = arith.mulf %286, %294 : vector<2x32xf32>
    %297 = arith.addf %295, %296 : vector<2x32xf32>
    %298 = math.tanh %297 : vector<2x32xf32>
    %299 = arith.mulf %298, %292 : vector<2x32xf32>
    %300 = tpu.concatenate %235, %267, %299 in 1 : vector<2x32xf32>, vector<2x32xf32>, vector<2x32xf32> -> vector<2x96xf32>
    %cst_94 = arith.constant dense<0.000000e+00> : vector<2x24xf32>
    %301 = tpu.matmul %300, %34, %cst_94 {dimension_numbers = #tpu.dot_dimension_numbers<[1], [0], [0], [1], [0, 0, 1, 1], [], []>} : vector<2x96xf32>, vector<96x24xf32>, vector<2x24xf32> -> vector<2x24xf32>
    %302 = vector.broadcast %35 : vector<1x24xf32> to vector<2x24xf32>
    %303 = arith.addf %301, %302 : vector<2x24xf32>
    %cst_95 = arith.constant 0.000000e+00 : f32
    %304 = vector.broadcast %cst_95 : f32 to vector<2x24xf32>
    %305 = arith.maximumf %303, %304 : vector<2x24xf32>
    %cst_96 = arith.constant dense<0.000000e+00> : vector<2x16xf32>
    %306 = tpu.matmul %305, %36, %cst_96 {dimension_numbers = #tpu.dot_dimension_numbers<[1], [0], [0], [1], [0, 0, 1, 1], [], []>} : vector<2x24xf32>, vector<24x16xf32>, vector<2x16xf32> -> vector<2x16xf32>
    %307 = vector.broadcast %37 : vector<1x16xf32> to vector<2x16xf32>
    %308 = arith.addf %306, %307 : vector<2x16xf32>
    %309 = arith.negf %308 : vector<2x16xf32>
    %310 = math.exp %309 : vector<2x16xf32>
    %cst_97 = arith.constant 1.000000e+00 : f32
    %311 = vector.broadcast %cst_97 : f32 to vector<2x16xf32>
    %312 = arith.addf %311, %310 : vector<2x16xf32>
    %313 = arith.divf %311, %312 : vector<2x16xf32>
    %cst_98 = arith.constant dense<0xFF800000> : vector<2xf32>
    %314 = vector.multi_reduction <maximumf>, %313, %cst_98 [1] : vector<2x16xf32> to vector<2xf32>
    %315 = vector.shape_cast %314 : vector<2xf32> to vector<2x1xf32>
    %316 = vector.broadcast %315 : vector<2x1xf32> to vector<2x16xf32>
    %317 = arith.subf %313, %316 : vector<2x16xf32>
    %318 = math.exp %317 : vector<2x16xf32>
    %cst_99 = arith.constant dense<0.000000e+00> : vector<2xf32>
    %319 = vector.multi_reduction <add>, %318, %cst_99 [1] : vector<2x16xf32> to vector<2xf32>
    %320 = vector.shape_cast %319 : vector<2xf32> to vector<2x1xf32>
    %321 = tpu.reciprocal %320 {approx = true} : vector<2x1xf32> -> vector<2x1xf32>
    %322 = vector.broadcast %321 : vector<2x1xf32> to vector<2x16xf32>
    %323 = arith.mulf %318, %322 : vector<2x16xf32>
    %324 = tpu.concatenate %323, %71 in 1 : vector<2x16xf32>, vector<2x32xf32> -> vector<2x48xf32>
    %325 = vector.extract_strided_slice %5 {offsets = [2, 0], sizes = [2, 128], strides = [1, 1]} : vector<8x128xf32> to vector<2x128xf32>
    %cst_100 = arith.constant dense<0.000000e+00> : vector<2x128xf32>
    %326 = tpu.matmul %71, %24, %cst_100 {dimension_numbers = #tpu.dot_dimension_numbers<[1], [0], [0], [1], [0, 0, 1, 1], [], []>} : vector<2x32xf32>, vector<32x128xf32>, vector<2x128xf32> -> vector<2x128xf32>
    %327 = arith.addf %325, %326 : vector<2x128xf32>
    %cst_101 = arith.constant dense<0.000000e+00> : vector<2x128xf32>
    %328 = tpu.matmul %323, %25, %cst_101 {dimension_numbers = #tpu.dot_dimension_numbers<[1], [0], [0], [1], [0, 0, 1, 1], [], []>} : vector<2x16xf32>, vector<16x128xf32>, vector<2x128xf32> -> vector<2x128xf32>
    %329 = arith.addf %327, %328 : vector<2x128xf32>
    %330 = vector.extract_strided_slice %329 {offsets = [0, 0], sizes = [2, 32], strides = [1, 1]} : vector<2x128xf32> to vector<2x32xf32>
    %331 = arith.negf %330 : vector<2x32xf32>
    %332 = math.exp %331 : vector<2x32xf32>
    %cst_102 = arith.constant 1.000000e+00 : f32
    %333 = vector.broadcast %cst_102 : f32 to vector<2x32xf32>
    %334 = arith.addf %333, %332 : vector<2x32xf32>
    %335 = arith.divf %333, %334 : vector<2x32xf32>
    %336 = vector.extract_strided_slice %329 {offsets = [0, 32], sizes = [2, 32], strides = [1, 1]} : vector<2x128xf32> to vector<2x32xf32>
    %337 = arith.negf %336 : vector<2x32xf32>
    %338 = math.exp %337 : vector<2x32xf32>
    %cst_103 = arith.constant 1.000000e+00 : f32
    %339 = vector.broadcast %cst_103 : f32 to vector<2x32xf32>
    %340 = arith.addf %339, %338 : vector<2x32xf32>
    %341 = arith.divf %339, %340 : vector<2x32xf32>
    %342 = vector.extract_strided_slice %329 {offsets = [0, 64], sizes = [2, 32], strides = [1, 1]} : vector<2x128xf32> to vector<2x32xf32>
    %343 = arith.negf %342 : vector<2x32xf32>
    %344 = math.exp %343 : vector<2x32xf32>
    %cst_104 = arith.constant 1.000000e+00 : f32
    %345 = vector.broadcast %cst_104 : f32 to vector<2x32xf32>
    %346 = arith.addf %345, %344 : vector<2x32xf32>
    %347 = arith.divf %345, %346 : vector<2x32xf32>
    %348 = vector.extract_strided_slice %329 {offsets = [0, 96], sizes = [2, 32], strides = [1, 1]} : vector<2x128xf32> to vector<2x32xf32>
    %349 = math.tanh %348 : vector<2x32xf32>
    %350 = arith.mulf %335, %69 : vector<2x32xf32>
    %351 = arith.mulf %341, %349 : vector<2x32xf32>
    %352 = arith.addf %350, %351 : vector<2x32xf32>
    %353 = math.tanh %352 : vector<2x32xf32>
    %354 = arith.mulf %353, %347 : vector<2x32xf32>
    %cst_105 = arith.constant 0.000000e+00 : f32
    %355 = vector.broadcast %cst_105 : f32 to vector<2x32xf32>
    %cst_106 = arith.constant dense<0.000000e+00> : vector<2x128xf32>
    %356 = tpu.matmul %6, %26, %cst_106 {dimension_numbers = #tpu.dot_dimension_numbers<[1], [0], [0], [1], [0, 0, 1, 1], [], []>} : vector<2x32xf32>, vector<32x128xf32>, vector<2x128xf32> -> vector<2x128xf32>
    %357 = vector.broadcast %27 : vector<1x128xf32> to vector<2x128xf32>
    %358 = arith.addf %356, %357 : vector<2x128xf32>
    %cst_107 = arith.constant dense<0.000000e+00> : vector<2x128xf32>
    %359 = tpu.matmul %355, %28, %cst_107 {dimension_numbers = #tpu.dot_dimension_numbers<[1], [0], [0], [1], [0, 0, 1, 1], [], []>} : vector<2x32xf32>, vector<32x128xf32>, vector<2x128xf32> -> vector<2x128xf32>
    %360 = arith.addf %358, %359 : vector<2x128xf32>
    %361 = vector.broadcast %29 : vector<1x128xf32> to vector<2x128xf32>
    %362 = arith.addf %360, %361 : vector<2x128xf32>
    %363 = vector.extract_strided_slice %362 {offsets = [0, 0], sizes = [2, 32], strides = [1, 1]} : vector<2x128xf32> to vector<2x32xf32>
    %364 = arith.negf %363 : vector<2x32xf32>
    %365 = math.exp %364 : vector<2x32xf32>
    %cst_108 = arith.constant 1.000000e+00 : f32
    %366 = vector.broadcast %cst_108 : f32 to vector<2x32xf32>
    %367 = arith.addf %366, %365 : vector<2x32xf32>
    %368 = arith.divf %366, %367 : vector<2x32xf32>
    %369 = vector.extract_strided_slice %362 {offsets = [0, 32], sizes = [2, 32], strides = [1, 1]} : vector<2x128xf32> to vector<2x32xf32>
    %370 = arith.negf %369 : vector<2x32xf32>
    %371 = math.exp %370 : vector<2x32xf32>
    %cst_109 = arith.constant 1.000000e+00 : f32
    %372 = vector.broadcast %cst_109 : f32 to vector<2x32xf32>
    %373 = arith.addf %372, %371 : vector<2x32xf32>
    %374 = arith.divf %372, %373 : vector<2x32xf32>
    %375 = vector.extract_strided_slice %362 {offsets = [0, 64], sizes = [2, 32], strides = [1, 1]} : vector<2x128xf32> to vector<2x32xf32>
    %376 = arith.negf %375 : vector<2x32xf32>
    %377 = math.exp %376 : vector<2x32xf32>
    %cst_110 = arith.constant 1.000000e+00 : f32
    %378 = vector.broadcast %cst_110 : f32 to vector<2x32xf32>
    %379 = arith.addf %378, %377 : vector<2x32xf32>
    %380 = arith.divf %378, %379 : vector<2x32xf32>
    %381 = vector.extract_strided_slice %362 {offsets = [0, 96], sizes = [2, 32], strides = [1, 1]} : vector<2x128xf32> to vector<2x32xf32>
    %382 = math.tanh %381 : vector<2x32xf32>
    %383 = arith.mulf %368, %23 : vector<2x32xf32>
    %384 = arith.mulf %374, %382 : vector<2x32xf32>
    %385 = arith.addf %383, %384 : vector<2x32xf32>
    %386 = math.tanh %385 : vector<2x32xf32>
    %387 = arith.mulf %386, %380 : vector<2x32xf32>
    %cst_111 = arith.constant dense<0xFF800000> : vector<2xf32>
    %388 = vector.multi_reduction <maximumf>, %387, %cst_111 [1] : vector<2x32xf32> to vector<2xf32>
    %389 = vector.shape_cast %388 : vector<2xf32> to vector<2x1xf32>
    %390 = vector.broadcast %389 : vector<2x1xf32> to vector<2x32xf32>
    %391 = arith.subf %387, %390 : vector<2x32xf32>
    %392 = math.exp %391 : vector<2x32xf32>
    %cst_112 = arith.constant dense<0.000000e+00> : vector<2xf32>
    %393 = vector.multi_reduction <add>, %392, %cst_112 [1] : vector<2x32xf32> to vector<2xf32>
    %394 = vector.shape_cast %393 : vector<2xf32> to vector<2x1xf32>
    %395 = tpu.reciprocal %394 {approx = true} : vector<2x1xf32> -> vector<2x1xf32>
    %396 = vector.broadcast %395 : vector<2x1xf32> to vector<2x32xf32>
    %397 = arith.mulf %392, %396 : vector<2x32xf32>
    %398 = arith.mulf %6, %397 : vector<2x32xf32>
    %cst_113 = arith.constant dense<0.000000e+00> : vector<2x128xf32>
    %399 = tpu.matmul %398, %26, %cst_113 {dimension_numbers = #tpu.dot_dimension_numbers<[1], [0], [0], [1], [0, 0, 1, 1], [], []>} : vector<2x32xf32>, vector<32x128xf32>, vector<2x128xf32> -> vector<2x128xf32>
    %400 = vector.broadcast %27 : vector<1x128xf32> to vector<2x128xf32>
    %401 = arith.addf %399, %400 : vector<2x128xf32>
    %cst_114 = arith.constant dense<0.000000e+00> : vector<2x128xf32>
    %402 = tpu.matmul %397, %28, %cst_114 {dimension_numbers = #tpu.dot_dimension_numbers<[1], [0], [0], [1], [0, 0, 1, 1], [], []>} : vector<2x32xf32>, vector<32x128xf32>, vector<2x128xf32> -> vector<2x128xf32>
    %403 = arith.addf %401, %402 : vector<2x128xf32>
    %404 = vector.broadcast %29 : vector<1x128xf32> to vector<2x128xf32>
    %405 = arith.addf %403, %404 : vector<2x128xf32>
    %406 = vector.extract_strided_slice %405 {offsets = [0, 0], sizes = [2, 32], strides = [1, 1]} : vector<2x128xf32> to vector<2x32xf32>
    %407 = arith.negf %406 : vector<2x32xf32>
    %408 = math.exp %407 : vector<2x32xf32>
    %cst_115 = arith.constant 1.000000e+00 : f32
    %409 = vector.broadcast %cst_115 : f32 to vector<2x32xf32>
    %410 = arith.addf %409, %408 : vector<2x32xf32>
    %411 = arith.divf %409, %410 : vector<2x32xf32>
    %412 = vector.extract_strided_slice %405 {offsets = [0, 32], sizes = [2, 32], strides = [1, 1]} : vector<2x128xf32> to vector<2x32xf32>
    %413 = arith.negf %412 : vector<2x32xf32>
    %414 = math.exp %413 : vector<2x32xf32>
    %cst_116 = arith.constant 1.000000e+00 : f32
    %415 = vector.broadcast %cst_116 : f32 to vector<2x32xf32>
    %416 = arith.addf %415, %414 : vector<2x32xf32>
    %417 = arith.divf %415, %416 : vector<2x32xf32>
    %418 = vector.extract_strided_slice %405 {offsets = [0, 64], sizes = [2, 32], strides = [1, 1]} : vector<2x128xf32> to vector<2x32xf32>
    %419 = arith.negf %418 : vector<2x32xf32>
    %420 = math.exp %419 : vector<2x32xf32>
    %cst_117 = arith.constant 1.000000e+00 : f32
    %421 = vector.broadcast %cst_117 : f32 to vector<2x32xf32>
    %422 = arith.addf %421, %420 : vector<2x32xf32>
    %423 = arith.divf %421, %422 : vector<2x32xf32>
    %424 = vector.extract_strided_slice %405 {offsets = [0, 96], sizes = [2, 32], strides = [1, 1]} : vector<2x128xf32> to vector<2x32xf32>
    %425 = math.tanh %424 : vector<2x32xf32>
    %426 = arith.mulf %411, %385 : vector<2x32xf32>
    %427 = arith.mulf %417, %425 : vector<2x32xf32>
    %428 = arith.addf %426, %427 : vector<2x32xf32>
    %429 = math.tanh %428 : vector<2x32xf32>
    %430 = arith.mulf %429, %423 : vector<2x32xf32>
    %cst_118 = arith.constant dense<0xFF800000> : vector<2xf32>
    %431 = vector.multi_reduction <maximumf>, %430, %cst_118 [1] : vector<2x32xf32> to vector<2xf32>
    %432 = vector.shape_cast %431 : vector<2xf32> to vector<2x1xf32>
    %433 = vector.broadcast %432 : vector<2x1xf32> to vector<2x32xf32>
    %434 = arith.subf %430, %433 : vector<2x32xf32>
    %435 = math.exp %434 : vector<2x32xf32>
    %cst_119 = arith.constant dense<0.000000e+00> : vector<2xf32>
    %436 = vector.multi_reduction <add>, %435, %cst_119 [1] : vector<2x32xf32> to vector<2xf32>
    %437 = vector.shape_cast %436 : vector<2xf32> to vector<2x1xf32>
    %438 = tpu.reciprocal %437 {approx = true} : vector<2x1xf32> -> vector<2x1xf32>
    %439 = vector.broadcast %438 : vector<2x1xf32> to vector<2x32xf32>
    %440 = arith.mulf %435, %439 : vector<2x32xf32>
    %441 = arith.mulf %6, %440 : vector<2x32xf32>
    %cst_120 = arith.constant dense<0.000000e+00> : vector<2x128xf32>
    %442 = tpu.matmul %441, %26, %cst_120 {dimension_numbers = #tpu.dot_dimension_numbers<[1], [0], [0], [1], [0, 0, 1, 1], [], []>} : vector<2x32xf32>, vector<32x128xf32>, vector<2x128xf32> -> vector<2x128xf32>
    %443 = vector.broadcast %27 : vector<1x128xf32> to vector<2x128xf32>
    %444 = arith.addf %442, %443 : vector<2x128xf32>
    %cst_121 = arith.constant dense<0.000000e+00> : vector<2x128xf32>
    %445 = tpu.matmul %440, %28, %cst_121 {dimension_numbers = #tpu.dot_dimension_numbers<[1], [0], [0], [1], [0, 0, 1, 1], [], []>} : vector<2x32xf32>, vector<32x128xf32>, vector<2x128xf32> -> vector<2x128xf32>
    %446 = arith.addf %444, %445 : vector<2x128xf32>
    %447 = vector.broadcast %29 : vector<1x128xf32> to vector<2x128xf32>
    %448 = arith.addf %446, %447 : vector<2x128xf32>
    %449 = vector.extract_strided_slice %448 {offsets = [0, 0], sizes = [2, 32], strides = [1, 1]} : vector<2x128xf32> to vector<2x32xf32>
    %450 = arith.negf %449 : vector<2x32xf32>
    %451 = math.exp %450 : vector<2x32xf32>
    %cst_122 = arith.constant 1.000000e+00 : f32
    %452 = vector.broadcast %cst_122 : f32 to vector<2x32xf32>
    %453 = arith.addf %452, %451 : vector<2x32xf32>
    %454 = arith.divf %452, %453 : vector<2x32xf32>
    %455 = vector.extract_strided_slice %448 {offsets = [0, 32], sizes = [2, 32], strides = [1, 1]} : vector<2x128xf32> to vector<2x32xf32>
    %456 = arith.negf %455 : vector<2x32xf32>
    %457 = math.exp %456 : vector<2x32xf32>
    %cst_123 = arith.constant 1.000000e+00 : f32
    %458 = vector.broadcast %cst_123 : f32 to vector<2x32xf32>
    %459 = arith.addf %458, %457 : vector<2x32xf32>
    %460 = arith.divf %458, %459 : vector<2x32xf32>
    %461 = vector.extract_strided_slice %448 {offsets = [0, 64], sizes = [2, 32], strides = [1, 1]} : vector<2x128xf32> to vector<2x32xf32>
    %462 = arith.negf %461 : vector<2x32xf32>
    %463 = math.exp %462 : vector<2x32xf32>
    %cst_124 = arith.constant 1.000000e+00 : f32
    %464 = vector.broadcast %cst_124 : f32 to vector<2x32xf32>
    %465 = arith.addf %464, %463 : vector<2x32xf32>
    %466 = arith.divf %464, %465 : vector<2x32xf32>
    %467 = vector.extract_strided_slice %448 {offsets = [0, 96], sizes = [2, 32], strides = [1, 1]} : vector<2x128xf32> to vector<2x32xf32>
    %468 = math.tanh %467 : vector<2x32xf32>
    %469 = arith.mulf %454, %428 : vector<2x32xf32>
    %470 = arith.mulf %460, %468 : vector<2x32xf32>
    %471 = arith.addf %469, %470 : vector<2x32xf32>
    %472 = math.tanh %471 : vector<2x32xf32>
    %473 = arith.mulf %472, %466 : vector<2x32xf32>
    %cst_125 = arith.constant dense<0xFF800000> : vector<2xf32>
    %474 = vector.multi_reduction <maximumf>, %473, %cst_125 [1] : vector<2x32xf32> to vector<2xf32>
    %475 = vector.shape_cast %474 : vector<2xf32> to vector<2x1xf32>
    %476 = vector.broadcast %475 : vector<2x1xf32> to vector<2x32xf32>
    %477 = arith.subf %473, %476 : vector<2x32xf32>
    %478 = math.exp %477 : vector<2x32xf32>
    %cst_126 = arith.constant dense<0.000000e+00> : vector<2xf32>
    %479 = vector.multi_reduction <add>, %478, %cst_126 [1] : vector<2x32xf32> to vector<2xf32>
    %480 = vector.shape_cast %479 : vector<2xf32> to vector<2x1xf32>
    %481 = tpu.reciprocal %480 {approx = true} : vector<2x1xf32> -> vector<2x1xf32>
    %482 = vector.broadcast %481 : vector<2x1xf32> to vector<2x32xf32>
    %483 = arith.mulf %478, %482 : vector<2x32xf32>
    %484 = arith.mulf %6, %483 : vector<2x32xf32>
    %485 = vector.extract_strided_slice %38 {offsets = [2, 0], sizes = [2, 32], strides = [1, 1]} : vector<8x32xf32> to vector<2x32xf32>
    %cst_127 = arith.constant 0.000000e+00 : f32
    %486 = vector.broadcast %cst_127 : f32 to vector<2x32xf32>
    %cst_128 = arith.constant dense<0.000000e+00> : vector<2x128xf32>
    %487 = tpu.matmul %398, %30, %cst_128 {dimension_numbers = #tpu.dot_dimension_numbers<[1], [0], [0], [1], [0, 0, 1, 1], [], []>} : vector<2x32xf32>, vector<32x128xf32>, vector<2x128xf32> -> vector<2x128xf32>
    %488 = vector.broadcast %31 : vector<1x128xf32> to vector<2x128xf32>
    %489 = arith.addf %487, %488 : vector<2x128xf32>
    %cst_129 = arith.constant dense<0.000000e+00> : vector<2x128xf32>
    %490 = tpu.matmul %486, %32, %cst_129 {dimension_numbers = #tpu.dot_dimension_numbers<[1], [0], [0], [1], [0, 0, 1, 1], [], []>} : vector<2x32xf32>, vector<32x128xf32>, vector<2x128xf32> -> vector<2x128xf32>
    %491 = arith.addf %489, %490 : vector<2x128xf32>
    %492 = vector.broadcast %33 : vector<1x128xf32> to vector<2x128xf32>
    %493 = arith.addf %491, %492 : vector<2x128xf32>
    %494 = vector.extract_strided_slice %493 {offsets = [0, 0], sizes = [2, 32], strides = [1, 1]} : vector<2x128xf32> to vector<2x32xf32>
    %495 = arith.negf %494 : vector<2x32xf32>
    %496 = math.exp %495 : vector<2x32xf32>
    %cst_130 = arith.constant 1.000000e+00 : f32
    %497 = vector.broadcast %cst_130 : f32 to vector<2x32xf32>
    %498 = arith.addf %497, %496 : vector<2x32xf32>
    %499 = arith.divf %497, %498 : vector<2x32xf32>
    %500 = vector.extract_strided_slice %493 {offsets = [0, 32], sizes = [2, 32], strides = [1, 1]} : vector<2x128xf32> to vector<2x32xf32>
    %501 = arith.negf %500 : vector<2x32xf32>
    %502 = math.exp %501 : vector<2x32xf32>
    %cst_131 = arith.constant 1.000000e+00 : f32
    %503 = vector.broadcast %cst_131 : f32 to vector<2x32xf32>
    %504 = arith.addf %503, %502 : vector<2x32xf32>
    %505 = arith.divf %503, %504 : vector<2x32xf32>
    %506 = vector.extract_strided_slice %493 {offsets = [0, 64], sizes = [2, 32], strides = [1, 1]} : vector<2x128xf32> to vector<2x32xf32>
    %507 = arith.negf %506 : vector<2x32xf32>
    %508 = math.exp %507 : vector<2x32xf32>
    %cst_132 = arith.constant 1.000000e+00 : f32
    %509 = vector.broadcast %cst_132 : f32 to vector<2x32xf32>
    %510 = arith.addf %509, %508 : vector<2x32xf32>
    %511 = arith.divf %509, %510 : vector<2x32xf32>
    %512 = vector.extract_strided_slice %493 {offsets = [0, 96], sizes = [2, 32], strides = [1, 1]} : vector<2x128xf32> to vector<2x32xf32>
    %513 = math.tanh %512 : vector<2x32xf32>
    %514 = arith.mulf %499, %485 : vector<2x32xf32>
    %515 = arith.mulf %505, %513 : vector<2x32xf32>
    %516 = arith.addf %514, %515 : vector<2x32xf32>
    %517 = math.tanh %516 : vector<2x32xf32>
    %518 = arith.mulf %517, %511 : vector<2x32xf32>
    %cst_133 = arith.constant dense<0.000000e+00> : vector<2x128xf32>
    %519 = tpu.matmul %441, %30, %cst_133 {dimension_numbers = #tpu.dot_dimension_numbers<[1], [0], [0], [1], [0, 0, 1, 1], [], []>} : vector<2x32xf32>, vector<32x128xf32>, vector<2x128xf32> -> vector<2x128xf32>
    %520 = vector.broadcast %31 : vector<1x128xf32> to vector<2x128xf32>
    %521 = arith.addf %519, %520 : vector<2x128xf32>
    %cst_134 = arith.constant dense<0.000000e+00> : vector<2x128xf32>
    %522 = tpu.matmul %518, %32, %cst_134 {dimension_numbers = #tpu.dot_dimension_numbers<[1], [0], [0], [1], [0, 0, 1, 1], [], []>} : vector<2x32xf32>, vector<32x128xf32>, vector<2x128xf32> -> vector<2x128xf32>
    %523 = arith.addf %521, %522 : vector<2x128xf32>
    %524 = vector.broadcast %33 : vector<1x128xf32> to vector<2x128xf32>
    %525 = arith.addf %523, %524 : vector<2x128xf32>
    %526 = vector.extract_strided_slice %525 {offsets = [0, 0], sizes = [2, 32], strides = [1, 1]} : vector<2x128xf32> to vector<2x32xf32>
    %527 = arith.negf %526 : vector<2x32xf32>
    %528 = math.exp %527 : vector<2x32xf32>
    %cst_135 = arith.constant 1.000000e+00 : f32
    %529 = vector.broadcast %cst_135 : f32 to vector<2x32xf32>
    %530 = arith.addf %529, %528 : vector<2x32xf32>
    %531 = arith.divf %529, %530 : vector<2x32xf32>
    %532 = vector.extract_strided_slice %525 {offsets = [0, 32], sizes = [2, 32], strides = [1, 1]} : vector<2x128xf32> to vector<2x32xf32>
    %533 = arith.negf %532 : vector<2x32xf32>
    %534 = math.exp %533 : vector<2x32xf32>
    %cst_136 = arith.constant 1.000000e+00 : f32
    %535 = vector.broadcast %cst_136 : f32 to vector<2x32xf32>
    %536 = arith.addf %535, %534 : vector<2x32xf32>
    %537 = arith.divf %535, %536 : vector<2x32xf32>
    %538 = vector.extract_strided_slice %525 {offsets = [0, 64], sizes = [2, 32], strides = [1, 1]} : vector<2x128xf32> to vector<2x32xf32>
    %539 = arith.negf %538 : vector<2x32xf32>
    %540 = math.exp %539 : vector<2x32xf32>
    %cst_137 = arith.constant 1.000000e+00 : f32
    %541 = vector.broadcast %cst_137 : f32 to vector<2x32xf32>
    %542 = arith.addf %541, %540 : vector<2x32xf32>
    %543 = arith.divf %541, %542 : vector<2x32xf32>
    %544 = vector.extract_strided_slice %525 {offsets = [0, 96], sizes = [2, 32], strides = [1, 1]} : vector<2x128xf32> to vector<2x32xf32>
    %545 = math.tanh %544 : vector<2x32xf32>
    %546 = arith.mulf %531, %516 : vector<2x32xf32>
    %547 = arith.mulf %537, %545 : vector<2x32xf32>
    %548 = arith.addf %546, %547 : vector<2x32xf32>
    %549 = math.tanh %548 : vector<2x32xf32>
    %550 = arith.mulf %549, %543 : vector<2x32xf32>
    %cst_138 = arith.constant dense<0.000000e+00> : vector<2x128xf32>
    %551 = tpu.matmul %484, %30, %cst_138 {dimension_numbers = #tpu.dot_dimension_numbers<[1], [0], [0], [1], [0, 0, 1, 1], [], []>} : vector<2x32xf32>, vector<32x128xf32>, vector<2x128xf32> -> vector<2x128xf32>
    %552 = vector.broadcast %31 : vector<1x128xf32> to vector<2x128xf32>
    %553 = arith.addf %551, %552 : vector<2x128xf32>
    %cst_139 = arith.constant dense<0.000000e+00> : vector<2x128xf32>
    %554 = tpu.matmul %550, %32, %cst_139 {dimension_numbers = #tpu.dot_dimension_numbers<[1], [0], [0], [1], [0, 0, 1, 1], [], []>} : vector<2x32xf32>, vector<32x128xf32>, vector<2x128xf32> -> vector<2x128xf32>
    %555 = arith.addf %553, %554 : vector<2x128xf32>
    %556 = vector.broadcast %33 : vector<1x128xf32> to vector<2x128xf32>
    %557 = arith.addf %555, %556 : vector<2x128xf32>
    %558 = vector.extract_strided_slice %557 {offsets = [0, 0], sizes = [2, 32], strides = [1, 1]} : vector<2x128xf32> to vector<2x32xf32>
    %559 = arith.negf %558 : vector<2x32xf32>
    %560 = math.exp %559 : vector<2x32xf32>
    %cst_140 = arith.constant 1.000000e+00 : f32
    %561 = vector.broadcast %cst_140 : f32 to vector<2x32xf32>
    %562 = arith.addf %561, %560 : vector<2x32xf32>
    %563 = arith.divf %561, %562 : vector<2x32xf32>
    %564 = vector.extract_strided_slice %557 {offsets = [0, 32], sizes = [2, 32], strides = [1, 1]} : vector<2x128xf32> to vector<2x32xf32>
    %565 = arith.negf %564 : vector<2x32xf32>
    %566 = math.exp %565 : vector<2x32xf32>
    %cst_141 = arith.constant 1.000000e+00 : f32
    %567 = vector.broadcast %cst_141 : f32 to vector<2x32xf32>
    %568 = arith.addf %567, %566 : vector<2x32xf32>
    %569 = arith.divf %567, %568 : vector<2x32xf32>
    %570 = vector.extract_strided_slice %557 {offsets = [0, 64], sizes = [2, 32], strides = [1, 1]} : vector<2x128xf32> to vector<2x32xf32>
    %571 = arith.negf %570 : vector<2x32xf32>
    %572 = math.exp %571 : vector<2x32xf32>
    %cst_142 = arith.constant 1.000000e+00 : f32
    %573 = vector.broadcast %cst_142 : f32 to vector<2x32xf32>
    %574 = arith.addf %573, %572 : vector<2x32xf32>
    %575 = arith.divf %573, %574 : vector<2x32xf32>
    %576 = vector.extract_strided_slice %557 {offsets = [0, 96], sizes = [2, 32], strides = [1, 1]} : vector<2x128xf32> to vector<2x32xf32>
    %577 = math.tanh %576 : vector<2x32xf32>
    %578 = arith.mulf %563, %548 : vector<2x32xf32>
    %579 = arith.mulf %569, %577 : vector<2x32xf32>
    %580 = arith.addf %578, %579 : vector<2x32xf32>
    %581 = math.tanh %580 : vector<2x32xf32>
    %582 = arith.mulf %581, %575 : vector<2x32xf32>
    %583 = tpu.concatenate %518, %550, %582 in 1 : vector<2x32xf32>, vector<2x32xf32>, vector<2x32xf32> -> vector<2x96xf32>
    %cst_143 = arith.constant dense<0.000000e+00> : vector<2x24xf32>
    %584 = tpu.matmul %583, %34, %cst_143 {dimension_numbers = #tpu.dot_dimension_numbers<[1], [0], [0], [1], [0, 0, 1, 1], [], []>} : vector<2x96xf32>, vector<96x24xf32>, vector<2x24xf32> -> vector<2x24xf32>
    %585 = vector.broadcast %35 : vector<1x24xf32> to vector<2x24xf32>
    %586 = arith.addf %584, %585 : vector<2x24xf32>
    %cst_144 = arith.constant 0.000000e+00 : f32
    %587 = vector.broadcast %cst_144 : f32 to vector<2x24xf32>
    %588 = arith.maximumf %586, %587 : vector<2x24xf32>
    %cst_145 = arith.constant dense<0.000000e+00> : vector<2x16xf32>
    %589 = tpu.matmul %588, %36, %cst_145 {dimension_numbers = #tpu.dot_dimension_numbers<[1], [0], [0], [1], [0, 0, 1, 1], [], []>} : vector<2x24xf32>, vector<24x16xf32>, vector<2x16xf32> -> vector<2x16xf32>
    %590 = vector.broadcast %37 : vector<1x16xf32> to vector<2x16xf32>
    %591 = arith.addf %589, %590 : vector<2x16xf32>
    %592 = arith.negf %591 : vector<2x16xf32>
    %593 = math.exp %592 : vector<2x16xf32>
    %cst_146 = arith.constant 1.000000e+00 : f32
    %594 = vector.broadcast %cst_146 : f32 to vector<2x16xf32>
    %595 = arith.addf %594, %593 : vector<2x16xf32>
    %596 = arith.divf %594, %595 : vector<2x16xf32>
    %cst_147 = arith.constant dense<0xFF800000> : vector<2xf32>
    %597 = vector.multi_reduction <maximumf>, %596, %cst_147 [1] : vector<2x16xf32> to vector<2xf32>
    %598 = vector.shape_cast %597 : vector<2xf32> to vector<2x1xf32>
    %599 = vector.broadcast %598 : vector<2x1xf32> to vector<2x16xf32>
    %600 = arith.subf %596, %599 : vector<2x16xf32>
    %601 = math.exp %600 : vector<2x16xf32>
    %cst_148 = arith.constant dense<0.000000e+00> : vector<2xf32>
    %602 = vector.multi_reduction <add>, %601, %cst_148 [1] : vector<2x16xf32> to vector<2xf32>
    %603 = vector.shape_cast %602 : vector<2xf32> to vector<2x1xf32>
    %604 = tpu.reciprocal %603 {approx = true} : vector<2x1xf32> -> vector<2x1xf32>
    %605 = vector.broadcast %604 : vector<2x1xf32> to vector<2x16xf32>
    %606 = arith.mulf %601, %605 : vector<2x16xf32>
    %607 = tpu.concatenate %606, %354 in 1 : vector<2x16xf32>, vector<2x32xf32> -> vector<2x48xf32>
    %608 = vector.extract_strided_slice %5 {offsets = [4, 0], sizes = [2, 128], strides = [1, 1]} : vector<8x128xf32> to vector<2x128xf32>
    %cst_149 = arith.constant dense<0.000000e+00> : vector<2x128xf32>
    %609 = tpu.matmul %354, %24, %cst_149 {dimension_numbers = #tpu.dot_dimension_numbers<[1], [0], [0], [1], [0, 0, 1, 1], [], []>} : vector<2x32xf32>, vector<32x128xf32>, vector<2x128xf32> -> vector<2x128xf32>
    %610 = arith.addf %608, %609 : vector<2x128xf32>
    %cst_150 = arith.constant dense<0.000000e+00> : vector<2x128xf32>
    %611 = tpu.matmul %606, %25, %cst_150 {dimension_numbers = #tpu.dot_dimension_numbers<[1], [0], [0], [1], [0, 0, 1, 1], [], []>} : vector<2x16xf32>, vector<16x128xf32>, vector<2x128xf32> -> vector<2x128xf32>
    %612 = arith.addf %610, %611 : vector<2x128xf32>
    %613 = vector.extract_strided_slice %612 {offsets = [0, 0], sizes = [2, 32], strides = [1, 1]} : vector<2x128xf32> to vector<2x32xf32>
    %614 = arith.negf %613 : vector<2x32xf32>
    %615 = math.exp %614 : vector<2x32xf32>
    %cst_151 = arith.constant 1.000000e+00 : f32
    %616 = vector.broadcast %cst_151 : f32 to vector<2x32xf32>
    %617 = arith.addf %616, %615 : vector<2x32xf32>
    %618 = arith.divf %616, %617 : vector<2x32xf32>
    %619 = vector.extract_strided_slice %612 {offsets = [0, 32], sizes = [2, 32], strides = [1, 1]} : vector<2x128xf32> to vector<2x32xf32>
    %620 = arith.negf %619 : vector<2x32xf32>
    %621 = math.exp %620 : vector<2x32xf32>
    %cst_152 = arith.constant 1.000000e+00 : f32
    %622 = vector.broadcast %cst_152 : f32 to vector<2x32xf32>
    %623 = arith.addf %622, %621 : vector<2x32xf32>
    %624 = arith.divf %622, %623 : vector<2x32xf32>
    %625 = vector.extract_strided_slice %612 {offsets = [0, 64], sizes = [2, 32], strides = [1, 1]} : vector<2x128xf32> to vector<2x32xf32>
    %626 = arith.negf %625 : vector<2x32xf32>
    %627 = math.exp %626 : vector<2x32xf32>
    %cst_153 = arith.constant 1.000000e+00 : f32
    %628 = vector.broadcast %cst_153 : f32 to vector<2x32xf32>
    %629 = arith.addf %628, %627 : vector<2x32xf32>
    %630 = arith.divf %628, %629 : vector<2x32xf32>
    %631 = vector.extract_strided_slice %612 {offsets = [0, 96], sizes = [2, 32], strides = [1, 1]} : vector<2x128xf32> to vector<2x32xf32>
    %632 = math.tanh %631 : vector<2x32xf32>
    %633 = arith.mulf %618, %352 : vector<2x32xf32>
    %634 = arith.mulf %624, %632 : vector<2x32xf32>
    %635 = arith.addf %633, %634 : vector<2x32xf32>
    %636 = math.tanh %635 : vector<2x32xf32>
    %637 = arith.mulf %636, %630 : vector<2x32xf32>
    %cst_154 = arith.constant 0.000000e+00 : f32
    %638 = vector.broadcast %cst_154 : f32 to vector<2x32xf32>
    %cst_155 = arith.constant dense<0.000000e+00> : vector<2x128xf32>
    %639 = tpu.matmul %6, %26, %cst_155 {dimension_numbers = #tpu.dot_dimension_numbers<[1], [0], [0], [1], [0, 0, 1, 1], [], []>} : vector<2x32xf32>, vector<32x128xf32>, vector<2x128xf32> -> vector<2x128xf32>
    %640 = vector.broadcast %27 : vector<1x128xf32> to vector<2x128xf32>
    %641 = arith.addf %639, %640 : vector<2x128xf32>
    %cst_156 = arith.constant dense<0.000000e+00> : vector<2x128xf32>
    %642 = tpu.matmul %638, %28, %cst_156 {dimension_numbers = #tpu.dot_dimension_numbers<[1], [0], [0], [1], [0, 0, 1, 1], [], []>} : vector<2x32xf32>, vector<32x128xf32>, vector<2x128xf32> -> vector<2x128xf32>
    %643 = arith.addf %641, %642 : vector<2x128xf32>
    %644 = vector.broadcast %29 : vector<1x128xf32> to vector<2x128xf32>
    %645 = arith.addf %643, %644 : vector<2x128xf32>
    %646 = vector.extract_strided_slice %645 {offsets = [0, 0], sizes = [2, 32], strides = [1, 1]} : vector<2x128xf32> to vector<2x32xf32>
    %647 = arith.negf %646 : vector<2x32xf32>
    %648 = math.exp %647 : vector<2x32xf32>
    %cst_157 = arith.constant 1.000000e+00 : f32
    %649 = vector.broadcast %cst_157 : f32 to vector<2x32xf32>
    %650 = arith.addf %649, %648 : vector<2x32xf32>
    %651 = arith.divf %649, %650 : vector<2x32xf32>
    %652 = vector.extract_strided_slice %645 {offsets = [0, 32], sizes = [2, 32], strides = [1, 1]} : vector<2x128xf32> to vector<2x32xf32>
    %653 = arith.negf %652 : vector<2x32xf32>
    %654 = math.exp %653 : vector<2x32xf32>
    %cst_158 = arith.constant 1.000000e+00 : f32
    %655 = vector.broadcast %cst_158 : f32 to vector<2x32xf32>
    %656 = arith.addf %655, %654 : vector<2x32xf32>
    %657 = arith.divf %655, %656 : vector<2x32xf32>
    %658 = vector.extract_strided_slice %645 {offsets = [0, 64], sizes = [2, 32], strides = [1, 1]} : vector<2x128xf32> to vector<2x32xf32>
    %659 = arith.negf %658 : vector<2x32xf32>
    %660 = math.exp %659 : vector<2x32xf32>
    %cst_159 = arith.constant 1.000000e+00 : f32
    %661 = vector.broadcast %cst_159 : f32 to vector<2x32xf32>
    %662 = arith.addf %661, %660 : vector<2x32xf32>
    %663 = arith.divf %661, %662 : vector<2x32xf32>
    %664 = vector.extract_strided_slice %645 {offsets = [0, 96], sizes = [2, 32], strides = [1, 1]} : vector<2x128xf32> to vector<2x32xf32>
    %665 = math.tanh %664 : vector<2x32xf32>
    %666 = arith.mulf %651, %23 : vector<2x32xf32>
    %667 = arith.mulf %657, %665 : vector<2x32xf32>
    %668 = arith.addf %666, %667 : vector<2x32xf32>
    %669 = math.tanh %668 : vector<2x32xf32>
    %670 = arith.mulf %669, %663 : vector<2x32xf32>
    %cst_160 = arith.constant dense<0xFF800000> : vector<2xf32>
    %671 = vector.multi_reduction <maximumf>, %670, %cst_160 [1] : vector<2x32xf32> to vector<2xf32>
    %672 = vector.shape_cast %671 : vector<2xf32> to vector<2x1xf32>
    %673 = vector.broadcast %672 : vector<2x1xf32> to vector<2x32xf32>
    %674 = arith.subf %670, %673 : vector<2x32xf32>
    %675 = math.exp %674 : vector<2x32xf32>
    %cst_161 = arith.constant dense<0.000000e+00> : vector<2xf32>
    %676 = vector.multi_reduction <add>, %675, %cst_161 [1] : vector<2x32xf32> to vector<2xf32>
    %677 = vector.shape_cast %676 : vector<2xf32> to vector<2x1xf32>
    %678 = tpu.reciprocal %677 {approx = true} : vector<2x1xf32> -> vector<2x1xf32>
    %679 = vector.broadcast %678 : vector<2x1xf32> to vector<2x32xf32>
    %680 = arith.mulf %675, %679 : vector<2x32xf32>
    %681 = arith.mulf %6, %680 : vector<2x32xf32>
    %cst_162 = arith.constant dense<0.000000e+00> : vector<2x128xf32>
    %682 = tpu.matmul %681, %26, %cst_162 {dimension_numbers = #tpu.dot_dimension_numbers<[1], [0], [0], [1], [0, 0, 1, 1], [], []>} : vector<2x32xf32>, vector<32x128xf32>, vector<2x128xf32> -> vector<2x128xf32>
    %683 = vector.broadcast %27 : vector<1x128xf32> to vector<2x128xf32>
    %684 = arith.addf %682, %683 : vector<2x128xf32>
    %cst_163 = arith.constant dense<0.000000e+00> : vector<2x128xf32>
    %685 = tpu.matmul %680, %28, %cst_163 {dimension_numbers = #tpu.dot_dimension_numbers<[1], [0], [0], [1], [0, 0, 1, 1], [], []>} : vector<2x32xf32>, vector<32x128xf32>, vector<2x128xf32> -> vector<2x128xf32>
    %686 = arith.addf %684, %685 : vector<2x128xf32>
    %687 = vector.broadcast %29 : vector<1x128xf32> to vector<2x128xf32>
    %688 = arith.addf %686, %687 : vector<2x128xf32>
    %689 = vector.extract_strided_slice %688 {offsets = [0, 0], sizes = [2, 32], strides = [1, 1]} : vector<2x128xf32> to vector<2x32xf32>
    %690 = arith.negf %689 : vector<2x32xf32>
    %691 = math.exp %690 : vector<2x32xf32>
    %cst_164 = arith.constant 1.000000e+00 : f32
    %692 = vector.broadcast %cst_164 : f32 to vector<2x32xf32>
    %693 = arith.addf %692, %691 : vector<2x32xf32>
    %694 = arith.divf %692, %693 : vector<2x32xf32>
    %695 = vector.extract_strided_slice %688 {offsets = [0, 32], sizes = [2, 32], strides = [1, 1]} : vector<2x128xf32> to vector<2x32xf32>
    %696 = arith.negf %695 : vector<2x32xf32>
    %697 = math.exp %696 : vector<2x32xf32>
    %cst_165 = arith.constant 1.000000e+00 : f32
    %698 = vector.broadcast %cst_165 : f32 to vector<2x32xf32>
    %699 = arith.addf %698, %697 : vector<2x32xf32>
    %700 = arith.divf %698, %699 : vector<2x32xf32>
    %701 = vector.extract_strided_slice %688 {offsets = [0, 64], sizes = [2, 32], strides = [1, 1]} : vector<2x128xf32> to vector<2x32xf32>
    %702 = arith.negf %701 : vector<2x32xf32>
    %703 = math.exp %702 : vector<2x32xf32>
    %cst_166 = arith.constant 1.000000e+00 : f32
    %704 = vector.broadcast %cst_166 : f32 to vector<2x32xf32>
    %705 = arith.addf %704, %703 : vector<2x32xf32>
    %706 = arith.divf %704, %705 : vector<2x32xf32>
    %707 = vector.extract_strided_slice %688 {offsets = [0, 96], sizes = [2, 32], strides = [1, 1]} : vector<2x128xf32> to vector<2x32xf32>
    %708 = math.tanh %707 : vector<2x32xf32>
    %709 = arith.mulf %694, %668 : vector<2x32xf32>
    %710 = arith.mulf %700, %708 : vector<2x32xf32>
    %711 = arith.addf %709, %710 : vector<2x32xf32>
    %712 = math.tanh %711 : vector<2x32xf32>
    %713 = arith.mulf %712, %706 : vector<2x32xf32>
    %cst_167 = arith.constant dense<0xFF800000> : vector<2xf32>
    %714 = vector.multi_reduction <maximumf>, %713, %cst_167 [1] : vector<2x32xf32> to vector<2xf32>
    %715 = vector.shape_cast %714 : vector<2xf32> to vector<2x1xf32>
    %716 = vector.broadcast %715 : vector<2x1xf32> to vector<2x32xf32>
    %717 = arith.subf %713, %716 : vector<2x32xf32>
    %718 = math.exp %717 : vector<2x32xf32>
    %cst_168 = arith.constant dense<0.000000e+00> : vector<2xf32>
    %719 = vector.multi_reduction <add>, %718, %cst_168 [1] : vector<2x32xf32> to vector<2xf32>
    %720 = vector.shape_cast %719 : vector<2xf32> to vector<2x1xf32>
    %721 = tpu.reciprocal %720 {approx = true} : vector<2x1xf32> -> vector<2x1xf32>
    %722 = vector.broadcast %721 : vector<2x1xf32> to vector<2x32xf32>
    %723 = arith.mulf %718, %722 : vector<2x32xf32>
    %724 = arith.mulf %6, %723 : vector<2x32xf32>
    %cst_169 = arith.constant dense<0.000000e+00> : vector<2x128xf32>
    %725 = tpu.matmul %724, %26, %cst_169 {dimension_numbers = #tpu.dot_dimension_numbers<[1], [0], [0], [1], [0, 0, 1, 1], [], []>} : vector<2x32xf32>, vector<32x128xf32>, vector<2x128xf32> -> vector<2x128xf32>
    %726 = vector.broadcast %27 : vector<1x128xf32> to vector<2x128xf32>
    %727 = arith.addf %725, %726 : vector<2x128xf32>
    %cst_170 = arith.constant dense<0.000000e+00> : vector<2x128xf32>
    %728 = tpu.matmul %723, %28, %cst_170 {dimension_numbers = #tpu.dot_dimension_numbers<[1], [0], [0], [1], [0, 0, 1, 1], [], []>} : vector<2x32xf32>, vector<32x128xf32>, vector<2x128xf32> -> vector<2x128xf32>
    %729 = arith.addf %727, %728 : vector<2x128xf32>
    %730 = vector.broadcast %29 : vector<1x128xf32> to vector<2x128xf32>
    %731 = arith.addf %729, %730 : vector<2x128xf32>
    %732 = vector.extract_strided_slice %731 {offsets = [0, 0], sizes = [2, 32], strides = [1, 1]} : vector<2x128xf32> to vector<2x32xf32>
    %733 = arith.negf %732 : vector<2x32xf32>
    %734 = math.exp %733 : vector<2x32xf32>
    %cst_171 = arith.constant 1.000000e+00 : f32
    %735 = vector.broadcast %cst_171 : f32 to vector<2x32xf32>
    %736 = arith.addf %735, %734 : vector<2x32xf32>
    %737 = arith.divf %735, %736 : vector<2x32xf32>
    %738 = vector.extract_strided_slice %731 {offsets = [0, 32], sizes = [2, 32], strides = [1, 1]} : vector<2x128xf32> to vector<2x32xf32>
    %739 = arith.negf %738 : vector<2x32xf32>
    %740 = math.exp %739 : vector<2x32xf32>
    %cst_172 = arith.constant 1.000000e+00 : f32
    %741 = vector.broadcast %cst_172 : f32 to vector<2x32xf32>
    %742 = arith.addf %741, %740 : vector<2x32xf32>
    %743 = arith.divf %741, %742 : vector<2x32xf32>
    %744 = vector.extract_strided_slice %731 {offsets = [0, 64], sizes = [2, 32], strides = [1, 1]} : vector<2x128xf32> to vector<2x32xf32>
    %745 = arith.negf %744 : vector<2x32xf32>
    %746 = math.exp %745 : vector<2x32xf32>
    %cst_173 = arith.constant 1.000000e+00 : f32
    %747 = vector.broadcast %cst_173 : f32 to vector<2x32xf32>
    %748 = arith.addf %747, %746 : vector<2x32xf32>
    %749 = arith.divf %747, %748 : vector<2x32xf32>
    %750 = vector.extract_strided_slice %731 {offsets = [0, 96], sizes = [2, 32], strides = [1, 1]} : vector<2x128xf32> to vector<2x32xf32>
    %751 = math.tanh %750 : vector<2x32xf32>
    %752 = arith.mulf %737, %711 : vector<2x32xf32>
    %753 = arith.mulf %743, %751 : vector<2x32xf32>
    %754 = arith.addf %752, %753 : vector<2x32xf32>
    %755 = math.tanh %754 : vector<2x32xf32>
    %756 = arith.mulf %755, %749 : vector<2x32xf32>
    %cst_174 = arith.constant dense<0xFF800000> : vector<2xf32>
    %757 = vector.multi_reduction <maximumf>, %756, %cst_174 [1] : vector<2x32xf32> to vector<2xf32>
    %758 = vector.shape_cast %757 : vector<2xf32> to vector<2x1xf32>
    %759 = vector.broadcast %758 : vector<2x1xf32> to vector<2x32xf32>
    %760 = arith.subf %756, %759 : vector<2x32xf32>
    %761 = math.exp %760 : vector<2x32xf32>
    %cst_175 = arith.constant dense<0.000000e+00> : vector<2xf32>
    %762 = vector.multi_reduction <add>, %761, %cst_175 [1] : vector<2x32xf32> to vector<2xf32>
    %763 = vector.shape_cast %762 : vector<2xf32> to vector<2x1xf32>
    %764 = tpu.reciprocal %763 {approx = true} : vector<2x1xf32> -> vector<2x1xf32>
    %765 = vector.broadcast %764 : vector<2x1xf32> to vector<2x32xf32>
    %766 = arith.mulf %761, %765 : vector<2x32xf32>
    %767 = arith.mulf %6, %766 : vector<2x32xf32>
    %768 = vector.extract_strided_slice %38 {offsets = [4, 0], sizes = [2, 32], strides = [1, 1]} : vector<8x32xf32> to vector<2x32xf32>
    %cst_176 = arith.constant 0.000000e+00 : f32
    %769 = vector.broadcast %cst_176 : f32 to vector<2x32xf32>
    %cst_177 = arith.constant dense<0.000000e+00> : vector<2x128xf32>
    %770 = tpu.matmul %681, %30, %cst_177 {dimension_numbers = #tpu.dot_dimension_numbers<[1], [0], [0], [1], [0, 0, 1, 1], [], []>} : vector<2x32xf32>, vector<32x128xf32>, vector<2x128xf32> -> vector<2x128xf32>
    %771 = vector.broadcast %31 : vector<1x128xf32> to vector<2x128xf32>
    %772 = arith.addf %770, %771 : vector<2x128xf32>
    %cst_178 = arith.constant dense<0.000000e+00> : vector<2x128xf32>
    %773 = tpu.matmul %769, %32, %cst_178 {dimension_numbers = #tpu.dot_dimension_numbers<[1], [0], [0], [1], [0, 0, 1, 1], [], []>} : vector<2x32xf32>, vector<32x128xf32>, vector<2x128xf32> -> vector<2x128xf32>
    %774 = arith.addf %772, %773 : vector<2x128xf32>
    %775 = vector.broadcast %33 : vector<1x128xf32> to vector<2x128xf32>
    %776 = arith.addf %774, %775 : vector<2x128xf32>
    %777 = vector.extract_strided_slice %776 {offsets = [0, 0], sizes = [2, 32], strides = [1, 1]} : vector<2x128xf32> to vector<2x32xf32>
    %778 = arith.negf %777 : vector<2x32xf32>
    %779 = math.exp %778 : vector<2x32xf32>
    %cst_179 = arith.constant 1.000000e+00 : f32
    %780 = vector.broadcast %cst_179 : f32 to vector<2x32xf32>
    %781 = arith.addf %780, %779 : vector<2x32xf32>
    %782 = arith.divf %780, %781 : vector<2x32xf32>
    %783 = vector.extract_strided_slice %776 {offsets = [0, 32], sizes = [2, 32], strides = [1, 1]} : vector<2x128xf32> to vector<2x32xf32>
    %784 = arith.negf %783 : vector<2x32xf32>
    %785 = math.exp %784 : vector<2x32xf32>
    %cst_180 = arith.constant 1.000000e+00 : f32
    %786 = vector.broadcast %cst_180 : f32 to vector<2x32xf32>
    %787 = arith.addf %786, %785 : vector<2x32xf32>
    %788 = arith.divf %786, %787 : vector<2x32xf32>
    %789 = vector.extract_strided_slice %776 {offsets = [0, 64], sizes = [2, 32], strides = [1, 1]} : vector<2x128xf32> to vector<2x32xf32>
    %790 = arith.negf %789 : vector<2x32xf32>
    %791 = math.exp %790 : vector<2x32xf32>
    %cst_181 = arith.constant 1.000000e+00 : f32
    %792 = vector.broadcast %cst_181 : f32 to vector<2x32xf32>
    %793 = arith.addf %792, %791 : vector<2x32xf32>
    %794 = arith.divf %792, %793 : vector<2x32xf32>
    %795 = vector.extract_strided_slice %776 {offsets = [0, 96], sizes = [2, 32], strides = [1, 1]} : vector<2x128xf32> to vector<2x32xf32>
    %796 = math.tanh %795 : vector<2x32xf32>
    %797 = arith.mulf %782, %768 : vector<2x32xf32>
    %798 = arith.mulf %788, %796 : vector<2x32xf32>
    %799 = arith.addf %797, %798 : vector<2x32xf32>
    %800 = math.tanh %799 : vector<2x32xf32>
    %801 = arith.mulf %800, %794 : vector<2x32xf32>
    %cst_182 = arith.constant dense<0.000000e+00> : vector<2x128xf32>
    %802 = tpu.matmul %724, %30, %cst_182 {dimension_numbers = #tpu.dot_dimension_numbers<[1], [0], [0], [1], [0, 0, 1, 1], [], []>} : vector<2x32xf32>, vector<32x128xf32>, vector<2x128xf32> -> vector<2x128xf32>
    %803 = vector.broadcast %31 : vector<1x128xf32> to vector<2x128xf32>
    %804 = arith.addf %802, %803 : vector<2x128xf32>
    %cst_183 = arith.constant dense<0.000000e+00> : vector<2x128xf32>
    %805 = tpu.matmul %801, %32, %cst_183 {dimension_numbers = #tpu.dot_dimension_numbers<[1], [0], [0], [1], [0, 0, 1, 1], [], []>} : vector<2x32xf32>, vector<32x128xf32>, vector<2x128xf32> -> vector<2x128xf32>
    %806 = arith.addf %804, %805 : vector<2x128xf32>
    %807 = vector.broadcast %33 : vector<1x128xf32> to vector<2x128xf32>
    %808 = arith.addf %806, %807 : vector<2x128xf32>
    %809 = vector.extract_strided_slice %808 {offsets = [0, 0], sizes = [2, 32], strides = [1, 1]} : vector<2x128xf32> to vector<2x32xf32>
    %810 = arith.negf %809 : vector<2x32xf32>
    %811 = math.exp %810 : vector<2x32xf32>
    %cst_184 = arith.constant 1.000000e+00 : f32
    %812 = vector.broadcast %cst_184 : f32 to vector<2x32xf32>
    %813 = arith.addf %812, %811 : vector<2x32xf32>
    %814 = arith.divf %812, %813 : vector<2x32xf32>
    %815 = vector.extract_strided_slice %808 {offsets = [0, 32], sizes = [2, 32], strides = [1, 1]} : vector<2x128xf32> to vector<2x32xf32>
    %816 = arith.negf %815 : vector<2x32xf32>
    %817 = math.exp %816 : vector<2x32xf32>
    %cst_185 = arith.constant 1.000000e+00 : f32
    %818 = vector.broadcast %cst_185 : f32 to vector<2x32xf32>
    %819 = arith.addf %818, %817 : vector<2x32xf32>
    %820 = arith.divf %818, %819 : vector<2x32xf32>
    %821 = vector.extract_strided_slice %808 {offsets = [0, 64], sizes = [2, 32], strides = [1, 1]} : vector<2x128xf32> to vector<2x32xf32>
    %822 = arith.negf %821 : vector<2x32xf32>
    %823 = math.exp %822 : vector<2x32xf32>
    %cst_186 = arith.constant 1.000000e+00 : f32
    %824 = vector.broadcast %cst_186 : f32 to vector<2x32xf32>
    %825 = arith.addf %824, %823 : vector<2x32xf32>
    %826 = arith.divf %824, %825 : vector<2x32xf32>
    %827 = vector.extract_strided_slice %808 {offsets = [0, 96], sizes = [2, 32], strides = [1, 1]} : vector<2x128xf32> to vector<2x32xf32>
    %828 = math.tanh %827 : vector<2x32xf32>
    %829 = arith.mulf %814, %799 : vector<2x32xf32>
    %830 = arith.mulf %820, %828 : vector<2x32xf32>
    %831 = arith.addf %829, %830 : vector<2x32xf32>
    %832 = math.tanh %831 : vector<2x32xf32>
    %833 = arith.mulf %832, %826 : vector<2x32xf32>
    %cst_187 = arith.constant dense<0.000000e+00> : vector<2x128xf32>
    %834 = tpu.matmul %767, %30, %cst_187 {dimension_numbers = #tpu.dot_dimension_numbers<[1], [0], [0], [1], [0, 0, 1, 1], [], []>} : vector<2x32xf32>, vector<32x128xf32>, vector<2x128xf32> -> vector<2x128xf32>
    %835 = vector.broadcast %31 : vector<1x128xf32> to vector<2x128xf32>
    %836 = arith.addf %834, %835 : vector<2x128xf32>
    %cst_188 = arith.constant dense<0.000000e+00> : vector<2x128xf32>
    %837 = tpu.matmul %833, %32, %cst_188 {dimension_numbers = #tpu.dot_dimension_numbers<[1], [0], [0], [1], [0, 0, 1, 1], [], []>} : vector<2x32xf32>, vector<32x128xf32>, vector<2x128xf32> -> vector<2x128xf32>
    %838 = arith.addf %836, %837 : vector<2x128xf32>
    %839 = vector.broadcast %33 : vector<1x128xf32> to vector<2x128xf32>
    %840 = arith.addf %838, %839 : vector<2x128xf32>
    %841 = vector.extract_strided_slice %840 {offsets = [0, 0], sizes = [2, 32], strides = [1, 1]} : vector<2x128xf32> to vector<2x32xf32>
    %842 = arith.negf %841 : vector<2x32xf32>
    %843 = math.exp %842 : vector<2x32xf32>
    %cst_189 = arith.constant 1.000000e+00 : f32
    %844 = vector.broadcast %cst_189 : f32 to vector<2x32xf32>
    %845 = arith.addf %844, %843 : vector<2x32xf32>
    %846 = arith.divf %844, %845 : vector<2x32xf32>
    %847 = vector.extract_strided_slice %840 {offsets = [0, 32], sizes = [2, 32], strides = [1, 1]} : vector<2x128xf32> to vector<2x32xf32>
    %848 = arith.negf %847 : vector<2x32xf32>
    %849 = math.exp %848 : vector<2x32xf32>
    %cst_190 = arith.constant 1.000000e+00 : f32
    %850 = vector.broadcast %cst_190 : f32 to vector<2x32xf32>
    %851 = arith.addf %850, %849 : vector<2x32xf32>
    %852 = arith.divf %850, %851 : vector<2x32xf32>
    %853 = vector.extract_strided_slice %840 {offsets = [0, 64], sizes = [2, 32], strides = [1, 1]} : vector<2x128xf32> to vector<2x32xf32>
    %854 = arith.negf %853 : vector<2x32xf32>
    %855 = math.exp %854 : vector<2x32xf32>
    %cst_191 = arith.constant 1.000000e+00 : f32
    %856 = vector.broadcast %cst_191 : f32 to vector<2x32xf32>
    %857 = arith.addf %856, %855 : vector<2x32xf32>
    %858 = arith.divf %856, %857 : vector<2x32xf32>
    %859 = vector.extract_strided_slice %840 {offsets = [0, 96], sizes = [2, 32], strides = [1, 1]} : vector<2x128xf32> to vector<2x32xf32>
    %860 = math.tanh %859 : vector<2x32xf32>
    %861 = arith.mulf %846, %831 : vector<2x32xf32>
    %862 = arith.mulf %852, %860 : vector<2x32xf32>
    %863 = arith.addf %861, %862 : vector<2x32xf32>
    %864 = math.tanh %863 : vector<2x32xf32>
    %865 = arith.mulf %864, %858 : vector<2x32xf32>
    %866 = tpu.concatenate %801, %833, %865 in 1 : vector<2x32xf32>, vector<2x32xf32>, vector<2x32xf32> -> vector<2x96xf32>
    %cst_192 = arith.constant dense<0.000000e+00> : vector<2x24xf32>
    %867 = tpu.matmul %866, %34, %cst_192 {dimension_numbers = #tpu.dot_dimension_numbers<[1], [0], [0], [1], [0, 0, 1, 1], [], []>} : vector<2x96xf32>, vector<96x24xf32>, vector<2x24xf32> -> vector<2x24xf32>
    %868 = vector.broadcast %35 : vector<1x24xf32> to vector<2x24xf32>
    %869 = arith.addf %867, %868 : vector<2x24xf32>
    %cst_193 = arith.constant 0.000000e+00 : f32
    %870 = vector.broadcast %cst_193 : f32 to vector<2x24xf32>
    %871 = arith.maximumf %869, %870 : vector<2x24xf32>
    %cst_194 = arith.constant dense<0.000000e+00> : vector<2x16xf32>
    %872 = tpu.matmul %871, %36, %cst_194 {dimension_numbers = #tpu.dot_dimension_numbers<[1], [0], [0], [1], [0, 0, 1, 1], [], []>} : vector<2x24xf32>, vector<24x16xf32>, vector<2x16xf32> -> vector<2x16xf32>
    %873 = vector.broadcast %37 : vector<1x16xf32> to vector<2x16xf32>
    %874 = arith.addf %872, %873 : vector<2x16xf32>
    %875 = arith.negf %874 : vector<2x16xf32>
    %876 = math.exp %875 : vector<2x16xf32>
    %cst_195 = arith.constant 1.000000e+00 : f32
    %877 = vector.broadcast %cst_195 : f32 to vector<2x16xf32>
    %878 = arith.addf %877, %876 : vector<2x16xf32>
    %879 = arith.divf %877, %878 : vector<2x16xf32>
    %cst_196 = arith.constant dense<0xFF800000> : vector<2xf32>
    %880 = vector.multi_reduction <maximumf>, %879, %cst_196 [1] : vector<2x16xf32> to vector<2xf32>
    %881 = vector.shape_cast %880 : vector<2xf32> to vector<2x1xf32>
    %882 = vector.broadcast %881 : vector<2x1xf32> to vector<2x16xf32>
    %883 = arith.subf %879, %882 : vector<2x16xf32>
    %884 = math.exp %883 : vector<2x16xf32>
    %cst_197 = arith.constant dense<0.000000e+00> : vector<2xf32>
    %885 = vector.multi_reduction <add>, %884, %cst_197 [1] : vector<2x16xf32> to vector<2xf32>
    %886 = vector.shape_cast %885 : vector<2xf32> to vector<2x1xf32>
    %887 = tpu.reciprocal %886 {approx = true} : vector<2x1xf32> -> vector<2x1xf32>
    %888 = vector.broadcast %887 : vector<2x1xf32> to vector<2x16xf32>
    %889 = arith.mulf %884, %888 : vector<2x16xf32>
    %890 = tpu.concatenate %889, %637 in 1 : vector<2x16xf32>, vector<2x32xf32> -> vector<2x48xf32>
    %891 = vector.extract_strided_slice %5 {offsets = [6, 0], sizes = [2, 128], strides = [1, 1]} : vector<8x128xf32> to vector<2x128xf32>
    %cst_198 = arith.constant dense<0.000000e+00> : vector<2x128xf32>
    %892 = tpu.matmul %637, %24, %cst_198 {dimension_numbers = #tpu.dot_dimension_numbers<[1], [0], [0], [1], [0, 0, 1, 1], [], []>} : vector<2x32xf32>, vector<32x128xf32>, vector<2x128xf32> -> vector<2x128xf32>
    %893 = arith.addf %891, %892 : vector<2x128xf32>
    %cst_199 = arith.constant dense<0.000000e+00> : vector<2x128xf32>
    %894 = tpu.matmul %889, %25, %cst_199 {dimension_numbers = #tpu.dot_dimension_numbers<[1], [0], [0], [1], [0, 0, 1, 1], [], []>} : vector<2x16xf32>, vector<16x128xf32>, vector<2x128xf32> -> vector<2x128xf32>
    %895 = arith.addf %893, %894 : vector<2x128xf32>
    %896 = vector.extract_strided_slice %895 {offsets = [0, 0], sizes = [2, 32], strides = [1, 1]} : vector<2x128xf32> to vector<2x32xf32>
    %897 = arith.negf %896 : vector<2x32xf32>
    %898 = math.exp %897 : vector<2x32xf32>
    %cst_200 = arith.constant 1.000000e+00 : f32
    %899 = vector.broadcast %cst_200 : f32 to vector<2x32xf32>
    %900 = arith.addf %899, %898 : vector<2x32xf32>
    %901 = arith.divf %899, %900 : vector<2x32xf32>
    %902 = vector.extract_strided_slice %895 {offsets = [0, 32], sizes = [2, 32], strides = [1, 1]} : vector<2x128xf32> to vector<2x32xf32>
    %903 = arith.negf %902 : vector<2x32xf32>
    %904 = math.exp %903 : vector<2x32xf32>
    %cst_201 = arith.constant 1.000000e+00 : f32
    %905 = vector.broadcast %cst_201 : f32 to vector<2x32xf32>
    %906 = arith.addf %905, %904 : vector<2x32xf32>
    %907 = arith.divf %905, %906 : vector<2x32xf32>
    %908 = vector.extract_strided_slice %895 {offsets = [0, 64], sizes = [2, 32], strides = [1, 1]} : vector<2x128xf32> to vector<2x32xf32>
    %909 = arith.negf %908 : vector<2x32xf32>
    %910 = math.exp %909 : vector<2x32xf32>
    %cst_202 = arith.constant 1.000000e+00 : f32
    %911 = vector.broadcast %cst_202 : f32 to vector<2x32xf32>
    %912 = arith.addf %911, %910 : vector<2x32xf32>
    %913 = arith.divf %911, %912 : vector<2x32xf32>
    %914 = vector.extract_strided_slice %895 {offsets = [0, 96], sizes = [2, 32], strides = [1, 1]} : vector<2x128xf32> to vector<2x32xf32>
    %915 = math.tanh %914 : vector<2x32xf32>
    %916 = arith.mulf %901, %635 : vector<2x32xf32>
    %917 = arith.mulf %907, %915 : vector<2x32xf32>
    %918 = arith.addf %916, %917 : vector<2x32xf32>
    %919 = math.tanh %918 : vector<2x32xf32>
    %920 = arith.mulf %919, %913 : vector<2x32xf32>
    %cst_203 = arith.constant 0.000000e+00 : f32
    %921 = vector.broadcast %cst_203 : f32 to vector<2x32xf32>
    %cst_204 = arith.constant dense<0.000000e+00> : vector<2x128xf32>
    %922 = tpu.matmul %6, %26, %cst_204 {dimension_numbers = #tpu.dot_dimension_numbers<[1], [0], [0], [1], [0, 0, 1, 1], [], []>} : vector<2x32xf32>, vector<32x128xf32>, vector<2x128xf32> -> vector<2x128xf32>
    %923 = vector.broadcast %27 : vector<1x128xf32> to vector<2x128xf32>
    %924 = arith.addf %922, %923 : vector<2x128xf32>
    %cst_205 = arith.constant dense<0.000000e+00> : vector<2x128xf32>
    %925 = tpu.matmul %921, %28, %cst_205 {dimension_numbers = #tpu.dot_dimension_numbers<[1], [0], [0], [1], [0, 0, 1, 1], [], []>} : vector<2x32xf32>, vector<32x128xf32>, vector<2x128xf32> -> vector<2x128xf32>
    %926 = arith.addf %924, %925 : vector<2x128xf32>
    %927 = vector.broadcast %29 : vector<1x128xf32> to vector<2x128xf32>
    %928 = arith.addf %926, %927 : vector<2x128xf32>
    %929 = vector.extract_strided_slice %928 {offsets = [0, 0], sizes = [2, 32], strides = [1, 1]} : vector<2x128xf32> to vector<2x32xf32>
    %930 = arith.negf %929 : vector<2x32xf32>
    %931 = math.exp %930 : vector<2x32xf32>
    %cst_206 = arith.constant 1.000000e+00 : f32
    %932 = vector.broadcast %cst_206 : f32 to vector<2x32xf32>
    %933 = arith.addf %932, %931 : vector<2x32xf32>
    %934 = arith.divf %932, %933 : vector<2x32xf32>
    %935 = vector.extract_strided_slice %928 {offsets = [0, 32], sizes = [2, 32], strides = [1, 1]} : vector<2x128xf32> to vector<2x32xf32>
    %936 = arith.negf %935 : vector<2x32xf32>
    %937 = math.exp %936 : vector<2x32xf32>
    %cst_207 = arith.constant 1.000000e+00 : f32
    %938 = vector.broadcast %cst_207 : f32 to vector<2x32xf32>
    %939 = arith.addf %938, %937 : vector<2x32xf32>
    %940 = arith.divf %938, %939 : vector<2x32xf32>
    %941 = vector.extract_strided_slice %928 {offsets = [0, 64], sizes = [2, 32], strides = [1, 1]} : vector<2x128xf32> to vector<2x32xf32>
    %942 = arith.negf %941 : vector<2x32xf32>
    %943 = math.exp %942 : vector<2x32xf32>
    %cst_208 = arith.constant 1.000000e+00 : f32
    %944 = vector.broadcast %cst_208 : f32 to vector<2x32xf32>
    %945 = arith.addf %944, %943 : vector<2x32xf32>
    %946 = arith.divf %944, %945 : vector<2x32xf32>
    %947 = vector.extract_strided_slice %928 {offsets = [0, 96], sizes = [2, 32], strides = [1, 1]} : vector<2x128xf32> to vector<2x32xf32>
    %948 = math.tanh %947 : vector<2x32xf32>
    %949 = arith.mulf %934, %23 : vector<2x32xf32>
    %950 = arith.mulf %940, %948 : vector<2x32xf32>
    %951 = arith.addf %949, %950 : vector<2x32xf32>
    %952 = math.tanh %951 : vector<2x32xf32>
    %953 = arith.mulf %952, %946 : vector<2x32xf32>
    %cst_209 = arith.constant dense<0xFF800000> : vector<2xf32>
    %954 = vector.multi_reduction <maximumf>, %953, %cst_209 [1] : vector<2x32xf32> to vector<2xf32>
    %955 = vector.shape_cast %954 : vector<2xf32> to vector<2x1xf32>
    %956 = vector.broadcast %955 : vector<2x1xf32> to vector<2x32xf32>
    %957 = arith.subf %953, %956 : vector<2x32xf32>
    %958 = math.exp %957 : vector<2x32xf32>
    %cst_210 = arith.constant dense<0.000000e+00> : vector<2xf32>
    %959 = vector.multi_reduction <add>, %958, %cst_210 [1] : vector<2x32xf32> to vector<2xf32>
    %960 = vector.shape_cast %959 : vector<2xf32> to vector<2x1xf32>
    %961 = tpu.reciprocal %960 {approx = true} : vector<2x1xf32> -> vector<2x1xf32>
    %962 = vector.broadcast %961 : vector<2x1xf32> to vector<2x32xf32>
    %963 = arith.mulf %958, %962 : vector<2x32xf32>
    %964 = arith.mulf %6, %963 : vector<2x32xf32>
    %cst_211 = arith.constant dense<0.000000e+00> : vector<2x128xf32>
    %965 = tpu.matmul %964, %26, %cst_211 {dimension_numbers = #tpu.dot_dimension_numbers<[1], [0], [0], [1], [0, 0, 1, 1], [], []>} : vector<2x32xf32>, vector<32x128xf32>, vector<2x128xf32> -> vector<2x128xf32>
    %966 = vector.broadcast %27 : vector<1x128xf32> to vector<2x128xf32>
    %967 = arith.addf %965, %966 : vector<2x128xf32>
    %cst_212 = arith.constant dense<0.000000e+00> : vector<2x128xf32>
    %968 = tpu.matmul %963, %28, %cst_212 {dimension_numbers = #tpu.dot_dimension_numbers<[1], [0], [0], [1], [0, 0, 1, 1], [], []>} : vector<2x32xf32>, vector<32x128xf32>, vector<2x128xf32> -> vector<2x128xf32>
    %969 = arith.addf %967, %968 : vector<2x128xf32>
    %970 = vector.broadcast %29 : vector<1x128xf32> to vector<2x128xf32>
    %971 = arith.addf %969, %970 : vector<2x128xf32>
    %972 = vector.extract_strided_slice %971 {offsets = [0, 0], sizes = [2, 32], strides = [1, 1]} : vector<2x128xf32> to vector<2x32xf32>
    %973 = arith.negf %972 : vector<2x32xf32>
    %974 = math.exp %973 : vector<2x32xf32>
    %cst_213 = arith.constant 1.000000e+00 : f32
    %975 = vector.broadcast %cst_213 : f32 to vector<2x32xf32>
    %976 = arith.addf %975, %974 : vector<2x32xf32>
    %977 = arith.divf %975, %976 : vector<2x32xf32>
    %978 = vector.extract_strided_slice %971 {offsets = [0, 32], sizes = [2, 32], strides = [1, 1]} : vector<2x128xf32> to vector<2x32xf32>
    %979 = arith.negf %978 : vector<2x32xf32>
    %980 = math.exp %979 : vector<2x32xf32>
    %cst_214 = arith.constant 1.000000e+00 : f32
    %981 = vector.broadcast %cst_214 : f32 to vector<2x32xf32>
    %982 = arith.addf %981, %980 : vector<2x32xf32>
    %983 = arith.divf %981, %982 : vector<2x32xf32>
    %984 = vector.extract_strided_slice %971 {offsets = [0, 64], sizes = [2, 32], strides = [1, 1]} : vector<2x128xf32> to vector<2x32xf32>
    %985 = arith.negf %984 : vector<2x32xf32>
    %986 = math.exp %985 : vector<2x32xf32>
    %cst_215 = arith.constant 1.000000e+00 : f32
    %987 = vector.broadcast %cst_215 : f32 to vector<2x32xf32>
    %988 = arith.addf %987, %986 : vector<2x32xf32>
    %989 = arith.divf %987, %988 : vector<2x32xf32>
    %990 = vector.extract_strided_slice %971 {offsets = [0, 96], sizes = [2, 32], strides = [1, 1]} : vector<2x128xf32> to vector<2x32xf32>
    %991 = math.tanh %990 : vector<2x32xf32>
    %992 = arith.mulf %977, %951 : vector<2x32xf32>
    %993 = arith.mulf %983, %991 : vector<2x32xf32>
    %994 = arith.addf %992, %993 : vector<2x32xf32>
    %995 = math.tanh %994 : vector<2x32xf32>
    %996 = arith.mulf %995, %989 : vector<2x32xf32>
    %cst_216 = arith.constant dense<0xFF800000> : vector<2xf32>
    %997 = vector.multi_reduction <maximumf>, %996, %cst_216 [1] : vector<2x32xf32> to vector<2xf32>
    %998 = vector.shape_cast %997 : vector<2xf32> to vector<2x1xf32>
    %999 = vector.broadcast %998 : vector<2x1xf32> to vector<2x32xf32>
    %1000 = arith.subf %996, %999 : vector<2x32xf32>
    %1001 = math.exp %1000 : vector<2x32xf32>
    %cst_217 = arith.constant dense<0.000000e+00> : vector<2xf32>
    %1002 = vector.multi_reduction <add>, %1001, %cst_217 [1] : vector<2x32xf32> to vector<2xf32>
    %1003 = vector.shape_cast %1002 : vector<2xf32> to vector<2x1xf32>
    %1004 = tpu.reciprocal %1003 {approx = true} : vector<2x1xf32> -> vector<2x1xf32>
    %1005 = vector.broadcast %1004 : vector<2x1xf32> to vector<2x32xf32>
    %1006 = arith.mulf %1001, %1005 : vector<2x32xf32>
    %1007 = arith.mulf %6, %1006 : vector<2x32xf32>
    %cst_218 = arith.constant dense<0.000000e+00> : vector<2x128xf32>
    %1008 = tpu.matmul %1007, %26, %cst_218 {dimension_numbers = #tpu.dot_dimension_numbers<[1], [0], [0], [1], [0, 0, 1, 1], [], []>} : vector<2x32xf32>, vector<32x128xf32>, vector<2x128xf32> -> vector<2x128xf32>
    %1009 = vector.broadcast %27 : vector<1x128xf32> to vector<2x128xf32>
    %1010 = arith.addf %1008, %1009 : vector<2x128xf32>
    %cst_219 = arith.constant dense<0.000000e+00> : vector<2x128xf32>
    %1011 = tpu.matmul %1006, %28, %cst_219 {dimension_numbers = #tpu.dot_dimension_numbers<[1], [0], [0], [1], [0, 0, 1, 1], [], []>} : vector<2x32xf32>, vector<32x128xf32>, vector<2x128xf32> -> vector<2x128xf32>
    %1012 = arith.addf %1010, %1011 : vector<2x128xf32>
    %1013 = vector.broadcast %29 : vector<1x128xf32> to vector<2x128xf32>
    %1014 = arith.addf %1012, %1013 : vector<2x128xf32>
    %1015 = vector.extract_strided_slice %1014 {offsets = [0, 0], sizes = [2, 32], strides = [1, 1]} : vector<2x128xf32> to vector<2x32xf32>
    %1016 = arith.negf %1015 : vector<2x32xf32>
    %1017 = math.exp %1016 : vector<2x32xf32>
    %cst_220 = arith.constant 1.000000e+00 : f32
    %1018 = vector.broadcast %cst_220 : f32 to vector<2x32xf32>
    %1019 = arith.addf %1018, %1017 : vector<2x32xf32>
    %1020 = arith.divf %1018, %1019 : vector<2x32xf32>
    %1021 = vector.extract_strided_slice %1014 {offsets = [0, 32], sizes = [2, 32], strides = [1, 1]} : vector<2x128xf32> to vector<2x32xf32>
    %1022 = arith.negf %1021 : vector<2x32xf32>
    %1023 = math.exp %1022 : vector<2x32xf32>
    %cst_221 = arith.constant 1.000000e+00 : f32
    %1024 = vector.broadcast %cst_221 : f32 to vector<2x32xf32>
    %1025 = arith.addf %1024, %1023 : vector<2x32xf32>
    %1026 = arith.divf %1024, %1025 : vector<2x32xf32>
    %1027 = vector.extract_strided_slice %1014 {offsets = [0, 64], sizes = [2, 32], strides = [1, 1]} : vector<2x128xf32> to vector<2x32xf32>
    %1028 = arith.negf %1027 : vector<2x32xf32>
    %1029 = math.exp %1028 : vector<2x32xf32>
    %cst_222 = arith.constant 1.000000e+00 : f32
    %1030 = vector.broadcast %cst_222 : f32 to vector<2x32xf32>
    %1031 = arith.addf %1030, %1029 : vector<2x32xf32>
    %1032 = arith.divf %1030, %1031 : vector<2x32xf32>
    %1033 = vector.extract_strided_slice %1014 {offsets = [0, 96], sizes = [2, 32], strides = [1, 1]} : vector<2x128xf32> to vector<2x32xf32>
    %1034 = math.tanh %1033 : vector<2x32xf32>
    %1035 = arith.mulf %1020, %994 : vector<2x32xf32>
    %1036 = arith.mulf %1026, %1034 : vector<2x32xf32>
    %1037 = arith.addf %1035, %1036 : vector<2x32xf32>
    %1038 = math.tanh %1037 : vector<2x32xf32>
    %1039 = arith.mulf %1038, %1032 : vector<2x32xf32>
    %cst_223 = arith.constant dense<0xFF800000> : vector<2xf32>
    %1040 = vector.multi_reduction <maximumf>, %1039, %cst_223 [1] : vector<2x32xf32> to vector<2xf32>
    %1041 = vector.shape_cast %1040 : vector<2xf32> to vector<2x1xf32>
    %1042 = vector.broadcast %1041 : vector<2x1xf32> to vector<2x32xf32>
    %1043 = arith.subf %1039, %1042 : vector<2x32xf32>
    %1044 = math.exp %1043 : vector<2x32xf32>
    %cst_224 = arith.constant dense<0.000000e+00> : vector<2xf32>
    %1045 = vector.multi_reduction <add>, %1044, %cst_224 [1] : vector<2x32xf32> to vector<2xf32>
    %1046 = vector.shape_cast %1045 : vector<2xf32> to vector<2x1xf32>
    %1047 = tpu.reciprocal %1046 {approx = true} : vector<2x1xf32> -> vector<2x1xf32>
    %1048 = vector.broadcast %1047 : vector<2x1xf32> to vector<2x32xf32>
    %1049 = arith.mulf %1044, %1048 : vector<2x32xf32>
    %1050 = arith.mulf %6, %1049 : vector<2x32xf32>
    %1051 = vector.extract_strided_slice %38 {offsets = [6, 0], sizes = [2, 32], strides = [1, 1]} : vector<8x32xf32> to vector<2x32xf32>
    %cst_225 = arith.constant 0.000000e+00 : f32
    %1052 = vector.broadcast %cst_225 : f32 to vector<2x32xf32>
    %cst_226 = arith.constant dense<0.000000e+00> : vector<2x128xf32>
    %1053 = tpu.matmul %964, %30, %cst_226 {dimension_numbers = #tpu.dot_dimension_numbers<[1], [0], [0], [1], [0, 0, 1, 1], [], []>} : vector<2x32xf32>, vector<32x128xf32>, vector<2x128xf32> -> vector<2x128xf32>
    %1054 = vector.broadcast %31 : vector<1x128xf32> to vector<2x128xf32>
    %1055 = arith.addf %1053, %1054 : vector<2x128xf32>
    %cst_227 = arith.constant dense<0.000000e+00> : vector<2x128xf32>
    %1056 = tpu.matmul %1052, %32, %cst_227 {dimension_numbers = #tpu.dot_dimension_numbers<[1], [0], [0], [1], [0, 0, 1, 1], [], []>} : vector<2x32xf32>, vector<32x128xf32>, vector<2x128xf32> -> vector<2x128xf32>
    %1057 = arith.addf %1055, %1056 : vector<2x128xf32>
    %1058 = vector.broadcast %33 : vector<1x128xf32> to vector<2x128xf32>
    %1059 = arith.addf %1057, %1058 : vector<2x128xf32>
    %1060 = vector.extract_strided_slice %1059 {offsets = [0, 0], sizes = [2, 32], strides = [1, 1]} : vector<2x128xf32> to vector<2x32xf32>
    %1061 = arith.negf %1060 : vector<2x32xf32>
    %1062 = math.exp %1061 : vector<2x32xf32>
    %cst_228 = arith.constant 1.000000e+00 : f32
    %1063 = vector.broadcast %cst_228 : f32 to vector<2x32xf32>
    %1064 = arith.addf %1063, %1062 : vector<2x32xf32>
    %1065 = arith.divf %1063, %1064 : vector<2x32xf32>
    %1066 = vector.extract_strided_slice %1059 {offsets = [0, 32], sizes = [2, 32], strides = [1, 1]} : vector<2x128xf32> to vector<2x32xf32>
    %1067 = arith.negf %1066 : vector<2x32xf32>
    %1068 = math.exp %1067 : vector<2x32xf32>
    %cst_229 = arith.constant 1.000000e+00 : f32
    %1069 = vector.broadcast %cst_229 : f32 to vector<2x32xf32>
    %1070 = arith.addf %1069, %1068 : vector<2x32xf32>
    %1071 = arith.divf %1069, %1070 : vector<2x32xf32>
    %1072 = vector.extract_strided_slice %1059 {offsets = [0, 64], sizes = [2, 32], strides = [1, 1]} : vector<2x128xf32> to vector<2x32xf32>
    %1073 = arith.negf %1072 : vector<2x32xf32>
    %1074 = math.exp %1073 : vector<2x32xf32>
    %cst_230 = arith.constant 1.000000e+00 : f32
    %1075 = vector.broadcast %cst_230 : f32 to vector<2x32xf32>
    %1076 = arith.addf %1075, %1074 : vector<2x32xf32>
    %1077 = arith.divf %1075, %1076 : vector<2x32xf32>
    %1078 = vector.extract_strided_slice %1059 {offsets = [0, 96], sizes = [2, 32], strides = [1, 1]} : vector<2x128xf32> to vector<2x32xf32>
    %1079 = math.tanh %1078 : vector<2x32xf32>
    %1080 = arith.mulf %1065, %1051 : vector<2x32xf32>
    %1081 = arith.mulf %1071, %1079 : vector<2x32xf32>
    %1082 = arith.addf %1080, %1081 : vector<2x32xf32>
    %1083 = math.tanh %1082 : vector<2x32xf32>
    %1084 = arith.mulf %1083, %1077 : vector<2x32xf32>
    %cst_231 = arith.constant dense<0.000000e+00> : vector<2x128xf32>
    %1085 = tpu.matmul %1007, %30, %cst_231 {dimension_numbers = #tpu.dot_dimension_numbers<[1], [0], [0], [1], [0, 0, 1, 1], [], []>} : vector<2x32xf32>, vector<32x128xf32>, vector<2x128xf32> -> vector<2x128xf32>
    %1086 = vector.broadcast %31 : vector<1x128xf32> to vector<2x128xf32>
    %1087 = arith.addf %1085, %1086 : vector<2x128xf32>
    %cst_232 = arith.constant dense<0.000000e+00> : vector<2x128xf32>
    %1088 = tpu.matmul %1084, %32, %cst_232 {dimension_numbers = #tpu.dot_dimension_numbers<[1], [0], [0], [1], [0, 0, 1, 1], [], []>} : vector<2x32xf32>, vector<32x128xf32>, vector<2x128xf32> -> vector<2x128xf32>
    %1089 = arith.addf %1087, %1088 : vector<2x128xf32>
    %1090 = vector.broadcast %33 : vector<1x128xf32> to vector<2x128xf32>
    %1091 = arith.addf %1089, %1090 : vector<2x128xf32>
    %1092 = vector.extract_strided_slice %1091 {offsets = [0, 0], sizes = [2, 32], strides = [1, 1]} : vector<2x128xf32> to vector<2x32xf32>
    %1093 = arith.negf %1092 : vector<2x32xf32>
    %1094 = math.exp %1093 : vector<2x32xf32>
    %cst_233 = arith.constant 1.000000e+00 : f32
    %1095 = vector.broadcast %cst_233 : f32 to vector<2x32xf32>
    %1096 = arith.addf %1095, %1094 : vector<2x32xf32>
    %1097 = arith.divf %1095, %1096 : vector<2x32xf32>
    %1098 = vector.extract_strided_slice %1091 {offsets = [0, 32], sizes = [2, 32], strides = [1, 1]} : vector<2x128xf32> to vector<2x32xf32>
    %1099 = arith.negf %1098 : vector<2x32xf32>
    %1100 = math.exp %1099 : vector<2x32xf32>
    %cst_234 = arith.constant 1.000000e+00 : f32
    %1101 = vector.broadcast %cst_234 : f32 to vector<2x32xf32>
    %1102 = arith.addf %1101, %1100 : vector<2x32xf32>
    %1103 = arith.divf %1101, %1102 : vector<2x32xf32>
    %1104 = vector.extract_strided_slice %1091 {offsets = [0, 64], sizes = [2, 32], strides = [1, 1]} : vector<2x128xf32> to vector<2x32xf32>
    %1105 = arith.negf %1104 : vector<2x32xf32>
    %1106 = math.exp %1105 : vector<2x32xf32>
    %cst_235 = arith.constant 1.000000e+00 : f32
    %1107 = vector.broadcast %cst_235 : f32 to vector<2x32xf32>
    %1108 = arith.addf %1107, %1106 : vector<2x32xf32>
    %1109 = arith.divf %1107, %1108 : vector<2x32xf32>
    %1110 = vector.extract_strided_slice %1091 {offsets = [0, 96], sizes = [2, 32], strides = [1, 1]} : vector<2x128xf32> to vector<2x32xf32>
    %1111 = math.tanh %1110 : vector<2x32xf32>
    %1112 = arith.mulf %1097, %1082 : vector<2x32xf32>
    %1113 = arith.mulf %1103, %1111 : vector<2x32xf32>
    %1114 = arith.addf %1112, %1113 : vector<2x32xf32>
    %1115 = math.tanh %1114 : vector<2x32xf32>
    %1116 = arith.mulf %1115, %1109 : vector<2x32xf32>
    %cst_236 = arith.constant dense<0.000000e+00> : vector<2x128xf32>
    %1117 = tpu.matmul %1050, %30, %cst_236 {dimension_numbers = #tpu.dot_dimension_numbers<[1], [0], [0], [1], [0, 0, 1, 1], [], []>} : vector<2x32xf32>, vector<32x128xf32>, vector<2x128xf32> -> vector<2x128xf32>
    %1118 = vector.broadcast %31 : vector<1x128xf32> to vector<2x128xf32>
    %1119 = arith.addf %1117, %1118 : vector<2x128xf32>
    %cst_237 = arith.constant dense<0.000000e+00> : vector<2x128xf32>
    %1120 = tpu.matmul %1116, %32, %cst_237 {dimension_numbers = #tpu.dot_dimension_numbers<[1], [0], [0], [1], [0, 0, 1, 1], [], []>} : vector<2x32xf32>, vector<32x128xf32>, vector<2x128xf32> -> vector<2x128xf32>
    %1121 = arith.addf %1119, %1120 : vector<2x128xf32>
    %1122 = vector.broadcast %33 : vector<1x128xf32> to vector<2x128xf32>
    %1123 = arith.addf %1121, %1122 : vector<2x128xf32>
    %1124 = vector.extract_strided_slice %1123 {offsets = [0, 0], sizes = [2, 32], strides = [1, 1]} : vector<2x128xf32> to vector<2x32xf32>
    %1125 = arith.negf %1124 : vector<2x32xf32>
    %1126 = math.exp %1125 : vector<2x32xf32>
    %cst_238 = arith.constant 1.000000e+00 : f32
    %1127 = vector.broadcast %cst_238 : f32 to vector<2x32xf32>
    %1128 = arith.addf %1127, %1126 : vector<2x32xf32>
    %1129 = arith.divf %1127, %1128 : vector<2x32xf32>
    %1130 = vector.extract_strided_slice %1123 {offsets = [0, 32], sizes = [2, 32], strides = [1, 1]} : vector<2x128xf32> to vector<2x32xf32>
    %1131 = arith.negf %1130 : vector<2x32xf32>
    %1132 = math.exp %1131 : vector<2x32xf32>
    %cst_239 = arith.constant 1.000000e+00 : f32
    %1133 = vector.broadcast %cst_239 : f32 to vector<2x32xf32>
    %1134 = arith.addf %1133, %1132 : vector<2x32xf32>
    %1135 = arith.divf %1133, %1134 : vector<2x32xf32>
    %1136 = vector.extract_strided_slice %1123 {offsets = [0, 64], sizes = [2, 32], strides = [1, 1]} : vector<2x128xf32> to vector<2x32xf32>
    %1137 = arith.negf %1136 : vector<2x32xf32>
    %1138 = math.exp %1137 : vector<2x32xf32>
    %cst_240 = arith.constant 1.000000e+00 : f32
    %1139 = vector.broadcast %cst_240 : f32 to vector<2x32xf32>
    %1140 = arith.addf %1139, %1138 : vector<2x32xf32>
    %1141 = arith.divf %1139, %1140 : vector<2x32xf32>
    %1142 = vector.extract_strided_slice %1123 {offsets = [0, 96], sizes = [2, 32], strides = [1, 1]} : vector<2x128xf32> to vector<2x32xf32>
    %1143 = math.tanh %1142 : vector<2x32xf32>
    %1144 = arith.mulf %1129, %1114 : vector<2x32xf32>
    %1145 = arith.mulf %1135, %1143 : vector<2x32xf32>
    %1146 = arith.addf %1144, %1145 : vector<2x32xf32>
    %1147 = math.tanh %1146 : vector<2x32xf32>
    %1148 = arith.mulf %1147, %1141 : vector<2x32xf32>
    %1149 = tpu.concatenate %1084, %1116, %1148 in 1 : vector<2x32xf32>, vector<2x32xf32>, vector<2x32xf32> -> vector<2x96xf32>
    %cst_241 = arith.constant dense<0.000000e+00> : vector<2x24xf32>
    %1150 = tpu.matmul %1149, %34, %cst_241 {dimension_numbers = #tpu.dot_dimension_numbers<[1], [0], [0], [1], [0, 0, 1, 1], [], []>} : vector<2x96xf32>, vector<96x24xf32>, vector<2x24xf32> -> vector<2x24xf32>
    %1151 = vector.broadcast %35 : vector<1x24xf32> to vector<2x24xf32>
    %1152 = arith.addf %1150, %1151 : vector<2x24xf32>
    %cst_242 = arith.constant 0.000000e+00 : f32
    %1153 = vector.broadcast %cst_242 : f32 to vector<2x24xf32>
    %1154 = arith.maximumf %1152, %1153 : vector<2x24xf32>
    %cst_243 = arith.constant dense<0.000000e+00> : vector<2x16xf32>
    %1155 = tpu.matmul %1154, %36, %cst_243 {dimension_numbers = #tpu.dot_dimension_numbers<[1], [0], [0], [1], [0, 0, 1, 1], [], []>} : vector<2x24xf32>, vector<24x16xf32>, vector<2x16xf32> -> vector<2x16xf32>
    %1156 = vector.broadcast %37 : vector<1x16xf32> to vector<2x16xf32>
    %1157 = arith.addf %1155, %1156 : vector<2x16xf32>
    %1158 = arith.negf %1157 : vector<2x16xf32>
    %1159 = math.exp %1158 : vector<2x16xf32>
    %cst_244 = arith.constant 1.000000e+00 : f32
    %1160 = vector.broadcast %cst_244 : f32 to vector<2x16xf32>
    %1161 = arith.addf %1160, %1159 : vector<2x16xf32>
    %1162 = arith.divf %1160, %1161 : vector<2x16xf32>
    %cst_245 = arith.constant dense<0xFF800000> : vector<2xf32>
    %1163 = vector.multi_reduction <maximumf>, %1162, %cst_245 [1] : vector<2x16xf32> to vector<2xf32>
    %1164 = vector.shape_cast %1163 : vector<2xf32> to vector<2x1xf32>
    %1165 = vector.broadcast %1164 : vector<2x1xf32> to vector<2x16xf32>
    %1166 = arith.subf %1162, %1165 : vector<2x16xf32>
    %1167 = math.exp %1166 : vector<2x16xf32>
    %cst_246 = arith.constant dense<0.000000e+00> : vector<2xf32>
    %1168 = vector.multi_reduction <add>, %1167, %cst_246 [1] : vector<2x16xf32> to vector<2xf32>
    %1169 = vector.shape_cast %1168 : vector<2xf32> to vector<2x1xf32>
    %1170 = tpu.reciprocal %1169 {approx = true} : vector<2x1xf32> -> vector<2x1xf32>
    %1171 = vector.broadcast %1170 : vector<2x1xf32> to vector<2x16xf32>
    %1172 = arith.mulf %1167, %1171 : vector<2x16xf32>
    %1173 = tpu.concatenate %1172, %920 in 1 : vector<2x16xf32>, vector<2x32xf32> -> vector<2x48xf32>
    %1174 = tpu.concatenate %324, %607, %890, %1173 in 0 : vector<2x48xf32>, vector<2x48xf32>, vector<2x48xf32>, vector<2x48xf32> -> vector<8x48xf32>
    %c0_247 = arith.constant 0 : index
    %c0_248 = arith.constant 0 : index
    %1175 = vector.load %arg22[%c0_247, %c0_248] : memref<48x24xf32, #tpu.memory_space<vmem>>, vector<48x24xf32>
    %cst_249 = arith.constant dense<0.000000e+00> : vector<8x24xf32>
    %1176 = tpu.matmul %1174, %1175, %cst_249 {dimension_numbers = #tpu.dot_dimension_numbers<[1], [0], [0], [1], [0, 0, 1, 1], [], []>} : vector<8x48xf32>, vector<48x24xf32>, vector<8x24xf32> -> vector<8x24xf32>
    %c0_250 = arith.constant 0 : index
    %c0_251 = arith.constant 0 : index
    %1177 = vector.load %arg23[%c0_250, %c0_251] : memref<1x24xf32, #tpu.memory_space<vmem>>, vector<1x24xf32>
    %1178 = vector.broadcast %1177 : vector<1x24xf32> to vector<8x24xf32>
    %1179 = arith.addf %1176, %1178 : vector<8x24xf32>
    %cst_252 = arith.constant 0.000000e+00 : f32
    %1180 = vector.broadcast %cst_252 : f32 to vector<8x24xf32>
    %1181 = arith.maximumf %1179, %1180 : vector<8x24xf32>
    %c0_253 = arith.constant 0 : index
    %c0_254 = arith.constant 0 : index
    %1182 = vector.load %arg24[%c0_253, %c0_254] : memref<24x4xf32, #tpu.memory_space<vmem>>, vector<24x4xf32>
    %cst_255 = arith.constant dense<0.000000e+00> : vector<8x4xf32>
    %1183 = tpu.matmul %1181, %1182, %cst_255 {dimension_numbers = #tpu.dot_dimension_numbers<[1], [0], [0], [1], [0, 0, 1, 1], [], []>} : vector<8x24xf32>, vector<24x4xf32>, vector<8x4xf32> -> vector<8x4xf32>
    %c0_256 = arith.constant 0 : index
    %c0_257 = arith.constant 0 : index
    %1184 = vector.load %arg25[%c0_256, %c0_257] : memref<1x4xf32, #tpu.memory_space<vmem>>, vector<1x4xf32>
    %1185 = vector.broadcast %1184 : vector<1x4xf32> to vector<8x4xf32>
    %1186 = arith.addf %1183, %1185 : vector<8x4xf32>
    %cst_258 = arith.constant dense<0xFF800000> : vector<8xf32>
    %1187 = vector.multi_reduction <maximumf>, %1186, %cst_258 [1] : vector<8x4xf32> to vector<8xf32>
    %1188 = vector.shape_cast %1187 : vector<8xf32> to vector<8x1xf32>
    %1189 = vector.broadcast %1188 : vector<8x1xf32> to vector<8x4xf32>
    %1190 = arith.subf %1186, %1189 : vector<8x4xf32>
    %1191 = math.exp %1190 : vector<8x4xf32>
    %cst_259 = arith.constant dense<0.000000e+00> : vector<8xf32>
    %1192 = vector.multi_reduction <add>, %1191, %cst_259 [1] : vector<8x4xf32> to vector<8xf32>
    %1193 = vector.shape_cast %1192 : vector<8xf32> to vector<8x1xf32>
    %1194 = math.log %1193 : vector<8x1xf32>
    %1195 = vector.broadcast %1194 : vector<8x1xf32> to vector<8x4xf32>
    %1196 = arith.subf %1190, %1195 : vector<8x4xf32>
    %c0_260 = arith.constant 0 : index
    %c0_261 = arith.constant 0 : index
    %1197 = vector.load %arg26[%c0_260, %c0_261] : memref<8x4xf32, #tpu.memory_space<vmem>>, vector<8x4xf32>
    tpu.vector_store %arg26[%c0_260, %c0_261], %1196 {strides = array<i32>} : memref<8x4xf32, #tpu.memory_space<vmem>>, vector<8x4xf32>,
    return
  }
}

</mosaic_0001>

<llo_original>
// kernel: rmfn_forward.1
$region0: #{rmfn_forward.1}
  #allocation0 [shape = 'u32[]', space=smem, size = 0x4, offset = 0x4, fixed_abs, tag = 'smem constant byte address 0x4 - core index']
  #allocation1 [shape = 'u32[144,128]{1,0:T(1,128)}', space=vmem, size = 0x12000, scoped, tag = 'internal scratch']
  %s0 = inlined_call_operand.vmem [shape: f32[8,16], index: 0, kind: input, shape index: {}]
  %s1 = inlined_call_operand.vmem [shape: f32[8,32], index: 1, kind: input, shape index: {}]
  %s2 = inlined_call_operand.vmem [shape: f32[16,128], index: 2, kind: input, shape index: {}]
  %s3 = inlined_call_operand.vmem [shape: f32[32,128], index: 3, kind: input, shape index: {}]
  %s4 = inlined_call_operand.vmem [shape: f32[16,128], index: 4, kind: input, shape index: {}]
  %s5 = inlined_call_operand.vmem [shape: f32[1,128], index: 5, kind: input, shape index: {}]
  %s6 = inlined_call_operand.vmem [shape: f32[32,24], index: 6, kind: input, shape index: {}]
  %s7 = inlined_call_operand.vmem [shape: f32[1,24], index: 7, kind: input, shape index: {}]
  %s8 = inlined_call_operand.vmem [shape: f32[24,32], index: 8, kind: input, shape index: {}]
  %s9 = inlined_call_operand.vmem [shape: f32[1,32], index: 9, kind: input, shape index: {}]
  %s10 = inlined_call_operand.vmem [shape: f32[32,128], index: 10, kind: input, shape index: {}]
  %s11 = inlined_call_operand.vmem [shape: f32[1,128], index: 11, kind: input, shape index: {}]
  %s12 = inlined_call_operand.vmem [shape: f32[32,128], index: 12, kind: input, shape index: {}]
  %s13 = inlined_call_operand.vmem [shape: f32[1,128], index: 13, kind: input, shape index: {}]
  %s14 = inlined_call_operand.vmem [shape: f32[32,128], index: 14, kind: input, shape index: {}]
  %s15 = inlined_call_operand.vmem [shape: f32[1,128], index: 15, kind: input, shape index: {}]
  %s16 = inlined_call_operand.vmem [shape: f32[32,128], index: 16, kind: input, shape index: {}]
  %s17 = inlined_call_operand.vmem [shape: f32[1,128], index: 17, kind: input, shape index: {}]
  %s18 = inlined_call_operand.vmem [shape: f32[96,24], index: 18, kind: input, shape index: {}]
  %s19 = inlined_call_operand.vmem [shape: f32[1,24], index: 19, kind: input, shape index: {}]
  %s20 = inlined_call_operand.vmem [shape: f32[24,16], index: 20, kind: input, shape index: {}]
  %s21 = inlined_call_operand.vmem [shape: f32[1,16], index: 21, kind: input, shape index: {}]
  %s22 = inlined_call_operand.vmem [shape: f32[48,24], index: 22, kind: input, shape index: {}]
  %s23 = inlined_call_operand.vmem [shape: f32[1,24], index: 23, kind: input, shape index: {}]
  %s24 = inlined_call_operand.vmem [shape: f32[24,4], index: 24, kind: input, shape index: {}]
  %s25 = inlined_call_operand.vmem [shape: f32[1,4], index: 25, kind: input, shape index: {}]
  %s26 = inlined_call_operand.vmem [shape: f32[8,4], index: 26, kind: output, shape index: {}]
  %s27 = sld [smem:[#allocation0]]
  $region114: #{rmfn_forward.1} parent=0
    _
  %s29 = ssub.s32 1, %s27
  %s30 = scalar_select 0, %s29, %s27
  // Predicated region
  $region2: #{rmfn_forward.1} parent=0 // pred_check
    _
  $region3: #{rmfn_forward.1} parent=0 // pred_check_branch
    %32 = sbr.rel (0) target = $region5
  $region4: #{rmfn_forward.1} parent=0 // pred_region
    _
  $region5: #{rmfn_forward.1} parent=0 // pred_fallthru
    _
  // Predicated region
  $region6: #{rmfn_forward.1} parent=0 // pred_check
    _
  $region7: #{rmfn_forward.1} parent=0 // pred_check_branch
    %34 = sbr.rel (0) target = $region9
  $region8: #{rmfn_forward.1} parent=0 // pred_region
    _
  $region9: #{rmfn_forward.1} parent=0 // pred_fallthru
    _
  // Predicated region
  $region10: #{rmfn_forward.1} parent=0 // pred_check
    _
  $region11: #{rmfn_forward.1} parent=0 // pred_check_branch
    %36 = sbr.rel (0) target = $region13
  $region12: #{rmfn_forward.1} parent=0 // pred_region
    _
  $region13: #{rmfn_forward.1} parent=0 // pred_fallthru
    _
  // Predicated region
  $region14: #{rmfn_forward.1} parent=0 // pred_check
    _
  $region15: #{rmfn_forward.1} parent=0 // pred_check_branch
    %38 = sbr.rel (0) target = $region17
  $region16: #{rmfn_forward.1} parent=0 // pred_region
    _
  $region17: #{rmfn_forward.1} parent=0 // pred_fallthru
    _
  // Predicated region
  $region18: #{rmfn_forward.1} parent=0 // pred_check
    _
  $region19: #{rmfn_forward.1} parent=0 // pred_check_branch
    %40 = sbr.rel (0) target = $region21
  $region20: #{rmfn_forward.1} parent=0 // pred_region
    _
  $region21: #{rmfn_forward.1} parent=0 // pred_fallthru
    _
  // Predicated region
  $region22: #{rmfn_forward.1} parent=0 // pred_check
    _
  $region23: #{rmfn_forward.1} parent=0 // pred_check_branch
    %42 = sbr.rel (0) target = $region25
  $region24: #{rmfn_forward.1} parent=0 // pred_region
    _
  $region25: #{rmfn_forward.1} parent=0 // pred_fallthru
    _
  // Predicated region
  $region26: #{rmfn_forward.1} parent=0 // pred_check
    _
  $region27: #{rmfn_forward.1} parent=0 // pred_check_branch
    %44 = sbr.rel (0) target = $region29
  $region28: #{rmfn_forward.1} parent=0 // pred_region
    _
  $region29: #{rmfn_forward.1} parent=0 // pred_fallthru
    _
  // Predicated region
  $region30: #{rmfn_forward.1} parent=0 // pred_check
    _
  $region31: #{rmfn_forward.1} parent=0 // pred_check_branch
    %46 = sbr.rel (0) target = $region33
  $region32: #{rmfn_forward.1} parent=0 // pred_region
    _
  $region33: #{rmfn_forward.1} parent=0 // pred_fallthru
    _
  // Predicated region
  $region34: #{rmfn_forward.1} parent=0 // pred_check
    _
  $region35: #{rmfn_forward.1} parent=0 // pred_check_branch
    %48 = sbr.rel (0) target = $region37
  $region36: #{rmfn_forward.1} parent=0 // pred_region
    _
  $region37: #{rmfn_forward.1} parent=0 // pred_fallthru
    _
  // Predicated region
  $region38: #{rmfn_forward.1} parent=0 // pred_check
    _
  $region39: #{rmfn_forward.1} parent=0 // pred_check_branch
    %50 = sbr.rel (0) target = $region41
  $region40: #{rmfn_forward.1} parent=0 // pred_region
    _
  $region41: #{rmfn_forward.1} parent=0 // pred_fallthru
    _
  // Predicated region
  $region42: #{rmfn_forward.1} parent=0 // pred_check
    _
  $region43: #{rmfn_forward.1} parent=0 // pred_check_branch
    %52 = sbr.rel (0) target = $region45
  $region44: #{rmfn_forward.1} parent=0 // pred_region
    _
  $region45: #{rmfn_forward.1} parent=0 // pred_fallthru
    _
  // Predicated region
  $region46: #{rmfn_forward.1} parent=0 // pred_check
    _
  $region47: #{rmfn_forward.1} parent=0 // pred_check_branch
    %54 = sbr.rel (0) target = $region49
  $region48: #{rmfn_forward.1} parent=0 // pred_region
    _
  $region49: #{rmfn_forward.1} parent=0 // pred_fallthru
    _
  // Predicated region
  $region50: #{rmfn_forward.1} parent=0 // pred_check
    _
  $region51: #{rmfn_forward.1} parent=0 // pred_check_branch
    %56 = sbr.rel (0) target = $region53
  $region52: #{rmfn_forward.1} parent=0 // pred_region
    _
  $region53: #{rmfn_forward.1} parent=0 // pred_fallthru
    _
  // Predicated region
  $region54: #{rmfn_forward.1} parent=0 // pred_check
    _
  $region55: #{rmfn_forward.1} parent=0 // pred_check_branch
    %58 = sbr.rel (0) target = $region57
  $region56: #{rmfn_forward.1} parent=0 // pred_region
    _
  $region57: #{rmfn_forward.1} parent=0 // pred_fallthru
    _
  // Predicated region
  $region58: #{rmfn_forward.1} parent=0 // pred_check
    _
  $region59: #{rmfn_forward.1} parent=0 // pred_check_branch
    %60 = sbr.rel (0) target = $region61
  $region60: #{rmfn_forward.1} parent=0 // pred_region
    _
  $region61: #{rmfn_forward.1} parent=0 // pred_fallthru
    _
  // Predicated region
  $region62: #{rmfn_forward.1} parent=0 // pred_check
    _
  $region63: #{rmfn_forward.1} parent=0 // pred_check_branch
    %62 = sbr.rel (0) target = $region65
  $region64: #{rmfn_forward.1} parent=0 // pred_region
    _
  $region65: #{rmfn_forward.1} parent=0 // pred_fallthru
    _
  // Predicated region
  $region66: #{rmfn_forward.1} parent=0 // pred_check
    _
  $region67: #{rmfn_forward.1} parent=0 // pred_check_branch
    %64 = sbr.rel (0) target = $region69
  $region68: #{rmfn_forward.1} parent=0 // pred_region
    _
  $region69: #{rmfn_forward.1} parent=0 // pred_fallthru
    _
  // Predicated region
  $region70: #{rmfn_forward.1} parent=0 // pred_check
    _
  $region71: #{rmfn_forward.1} parent=0 // pred_check_branch
    %66 = sbr.rel (0) target = $region73
  $region72: #{rmfn_forward.1} parent=0 // pred_region
    _
  $region73: #{rmfn_forward.1} parent=0 // pred_fallthru
    _
  // Predicated region
  $region74: #{rmfn_forward.1} parent=0 // pred_check
    _
  $region75: #{rmfn_forward.1} parent=0 // pred_check_branch
    %68 = sbr.rel (0) target = $region77
  $region76: #{rmfn_forward.1} parent=0 // pred_region
    _
  $region77: #{rmfn_forward.1} parent=0 // pred_fallthru
    _
  // Predicated region
  $region78: #{rmfn_forward.1} parent=0 // pred_check
    _
  $region79: #{rmfn_forward.1} parent=0 // pred_check_branch
    %70 = sbr.rel (0) target = $region81
  $region80: #{rmfn_forward.1} parent=0 // pred_region
    _
  $region81: #{rmfn_forward.1} parent=0 // pred_fallthru
    _
  // Predicated region
  $region82: #{rmfn_forward.1} parent=0 // pred_check
    _
  $region83: #{rmfn_forward.1} parent=0 // pred_check_branch
    %72 = sbr.rel (0) target = $region85
  $region84: #{rmfn_forward.1} parent=0 // pred_region
    _
  $region85: #{rmfn_forward.1} parent=0 // pred_fallthru
    _
  // Predicated region
  $region86: #{rmfn_forward.1} parent=0 // pred_check
    _
  $region87: #{rmfn_forward.1} parent=0 // pred_check_branch
    %74 = sbr.rel (0) target = $region89
  $region88: #{rmfn_forward.1} parent=0 // pred_region
    _
  $region89: #{rmfn_forward.1} parent=0 // pred_fallthru
    _
  // Predicated region
  $region90: #{rmfn_forward.1} parent=0 // pred_check
    _
  $region91: #{rmfn_forward.1} parent=0 // pred_check_branch
    %76 = sbr.rel (0) target = $region93
  $region92: #{rmfn_forward.1} parent=0 // pred_region
    _
  $region93: #{rmfn_forward.1} parent=0 // pred_fallthru
    _
  // Predicated region
  $region94: #{rmfn_forward.1} parent=0 // pred_check
    _
  $region95: #{rmfn_forward.1} parent=0 // pred_check_branch
    %78 = sbr.rel (0) target = $region97
  $region96: #{rmfn_forward.1} parent=0 // pred_region
    _
  $region97: #{rmfn_forward.1} parent=0 // pred_fallthru
    _
  // Predicated region
  $region98: #{rmfn_forward.1} parent=0 // pred_check
    _
  $region99: #{rmfn_forward.1} parent=0 // pred_check_branch
    %80 = sbr.rel (0) target = $region101
  $region100: #{rmfn_forward.1} parent=0 // pred_region
    _
  $region101: #{rmfn_forward.1} parent=0 // pred_fallthru
    _
  // Predicated region
  $region102: #{rmfn_forward.1} parent=0 // pred_check
    _
  $region103: #{rmfn_forward.1} parent=0 // pred_check_branch
    %82 = sbr.rel (0) target = $region105
  $region104: #{rmfn_forward.1} parent=0 // pred_region
    _
  $region105: #{rmfn_forward.1} parent=0 // pred_fallthru
    _
  %v83 = vld [vmem:[%s0] sm:$0xff]
  %v84 = vld [vmem:[%s2] sm:$0xff]
  %v85 = vld [vmem:[%s2 + $0x8] sm:$0xff]
  %v86 = vld [vmem:[%s5] sm:$0x1]
  %v88 = vlaneseq
  %v89 = vshrl.u32 %v88, 7
  %v90 = vsub.s32 0, %v89
  %v91 = vrot.slane %v86, %v90
  %vm93 = vcmask 130048
  %v95 = vsel %vm93, %v83, 0
  %97 = vmatprep.subr.mxu0 0.0
  %98 = vmatpush1.msra.mxu0 %v84
  %99 = vmatprep.subr.mxu0 0.0
  %100 = vmatpush1.msra.mxu0 %v85
  %101 = vmatprep.subr.mxu0 0.0
  %102 = vmatpush1.msra.mxu0 0.0
  %103 = vmatprep.subr.mxu0 0.0
  %104 = vmatpush1.msra.mxu0 0.0
  %105 = vmatprep.subr.mxu0 0.0
  %106 = vmatpush1.msra.mxu0 0.0
  %107 = vmatprep.subr.mxu0 0.0
  %108 = vmatpush1.msra.mxu0 0.0
  %109 = vmatprep.subr.mxu0 0.0
  %110 = vmatpush1.msra.mxu0 0.0
  %111 = vmatprep.subr.mxu0 0.0
  %112 = vmatpush1.msra.mxu0 0.0
  %113 = vmatprep.subr.mxu0 0.0
  %114 = vmatpush1.msra.mxu0 0.0
  %115 = vmatprep.subr.mxu0 0.0
  %116 = vmatpush1.msra.mxu0 0.0
  %117 = vmatprep.subr.mxu0 0.0
  %118 = vmatpush1.msra.mxu0 0.0
  %119 = vmatprep.subr.mxu0 0.0
  %120 = vmatpush1.msra.mxu0 0.0
  %121 = vmatprep.subr.mxu0 0.0
  %122 = vmatpush1.msra.mxu0 0.0
  %123 = vmatprep.subr.mxu0 0.0
  %124 = vmatpush1.msra.mxu0 0.0
  %125 = vmatprep.subr.mxu0 0.0
  %126 = vmatpush1.msra.mxu0 0.0
  %127 = vmatprep.subr.mxu0 0.0
  %128 = vmatpush1.msra.mxu0 0.0
  %129 = vmatprep.subr.mxu0 0.0
  %130 = vmatpush1.msra.mxu0 0.0
  %131 = vmatprep.subr.mxu0 0.0
  %132 = vmatpush1.msra.mxu0 0.0
  %133 = vmatprep.subr.mxu0 0.0
  %134 = vmatpush1.msra.mxu0 0.0
  %135 = vmatprep.subr.mxu0 0.0
  %136 = vmatpush1.msra.mxu0 0.0
  %137 = vmatprep.subr.mxu0 0.0
  %138 = vmatpush1.msra.mxu0 0.0
  %139 = vmatprep.subr.mxu0 0.0
  %140 = vmatpush1.msra.mxu0 0.0
  %141 = vmatprep.subr.mxu0 0.0
  %142 = vmatpush1.msra.mxu0 0.0
  %143 = vmatprep.subr.mxu0 0.0
  %144 = vmatpush1.msra.mxu0 0.0
  %145 = vmatprep.subr.mxu0 0.0
  %146 = vmatpush1.msra.mxu0 0.0
  %147 = vmatprep.subr.mxu0 0.0
  %148 = vmatpush1.msra.mxu0 0.0
  %149 = vmatprep.subr.mxu0 0.0
  %150 = vmatpush1.msra.mxu0 0.0
  %151 = vmatprep.subr.mxu0 0.0
  %152 = vmatpush1.msra.mxu0 0.0
  %153 = vmatprep.subr.mxu0 0.0
  %154 = vmatpush1.msra.mxu0 0.0
  %155 = vmatprep.subr.mxu0 0.0
  %156 = vmatpush1.msra.mxu0 0.0
  %157 = vmatprep.subr.mxu0 0.0
  %158 = vmatpush1.msra.mxu0 0.0
  %159 = vmatprep.subr.mxu0 0.0
  %160 = vmatpush1.msra.mxu0 0.0
  %161 = vmatprep.mubr.f32.mxu0 0.0
  %162 = vmatmul.mubr.f32.gmra.mrb[0].mxu0 %v95
  %v163 = vpop.f32.mrb[0].mxu0
  %v164 = vadd.f32 %v91, %v163
  %v165 = vpop.f32.mrb[0].mxu0
  %166 = vdwg.mxu0
  %v167 = vld [vmem:[%s6] sm:$0xff]
  %v168 = vld [vmem:[%s6 + $0x8] sm:$0xff]
  %v169 = vld [vmem:[%s6 + $0x10] sm:$0xff]
  %v170 = vld [vmem:[%s6 + $0x18] sm:$0xff]
  %v171 = vld [vmem:[%s7] sm:$0x1]
  %v173 = vlaneseq
  %v174 = vshrl.u32 %v173, 7
  %v175 = vsub.s32 0, %v174
  %v176 = vrot.slane %v171, %v175
  %vm178 = vcmask 261120
  %v180 = vsel %vm178, 0.0, 0
  %182 = vmatprep.subr.mxu0 0.0
  %183 = vmatpush1.msra.mxu0 %v167
  %184 = vmatprep.subr.mxu0 0.0
  %185 = vmatpush1.msra.mxu0 %v168
  %186 = vmatprep.subr.mxu0 0.0
  %187 = vmatpush1.msra.mxu0 %v169
  %188 = vmatprep.subr.mxu0 0.0
  %189 = vmatpush1.msra.mxu0 %v170
  %190 = vmatprep.subr.mxu0 0.0
  %191 = vmatpush1.msra.mxu0 0.0
  %192 = vmatprep.subr.mxu0 0.0
  %193 = vmatpush1.msra.mxu0 0.0
  %194 = vmatprep.subr.mxu0 0.0
  %195 = vmatpush1.msra.mxu0 0.0
  %196 = vmatprep.subr.mxu0 0.0
  %197 = vmatpush1.msra.mxu0 0.0
  %198 = vmatprep.subr.mxu0 0.0
  %199 = vmatpush1.msra.mxu0 0.0
  %200 = vmatprep.subr.mxu0 0.0
  %201 = vmatpush1.msra.mxu0 0.0
  %202 = vmatprep.subr.mxu0 0.0
  %203 = vmatpush1.msra.mxu0 0.0
  %204 = vmatprep.subr.mxu0 0.0
  %205 = vmatpush1.msra.mxu0 0.0
  %206 = vmatprep.subr.mxu0 0.0
  %207 = vmatpush1.msra.mxu0 0.0
  %208 = vmatprep.subr.mxu0 0.0
  %209 = vmatpush1.msra.mxu0 0.0
  %210 = vmatprep.subr.mxu0 0.0
  %211 = vmatpush1.msra.mxu0 0.0
  %212 = vmatprep.subr.mxu0 0.0
  %213 = vmatpush1.msra.mxu0 0.0
  %214 = vmatprep.subr.mxu0 0.0
  %215 = vmatpush1.msra.mxu0 0.0
  %216 = vmatprep.subr.mxu0 0.0
  %217 = vmatpush1.msra.mxu0 0.0
  %218 = vmatprep.subr.mxu0 0.0
  %219 = vmatpush1.msra.mxu0 0.0
  %220 = vmatprep.subr.mxu0 0.0
  %221 = vmatpush1.msra.mxu0 0.0
  %222 = vmatprep.subr.mxu0 0.0
  %223 = vmatpush1.msra.mxu0 0.0
  %224 = vmatprep.subr.mxu0 0.0
  %225 = vmatpush1.msra.mxu0 0.0
  %226 = vmatprep.subr.mxu0 0.0
  %227 = vmatpush1.msra.mxu0 0.0
  %228 = vmatprep.subr.mxu0 0.0
  %229 = vmatpush1.msra.mxu0 0.0
  %230 = vmatprep.subr.mxu0 0.0
  %231 = vmatpush1.msra.mxu0 0.0
  %232 = vmatprep.subr.mxu0 0.0
  %233 = vmatpush1.msra.mxu0 0.0
  %234 = vmatprep.subr.mxu0 0.0
  %235 = vmatpush1.msra.mxu0 0.0
  %236 = vmatprep.subr.mxu0 0.0
  %237 = vmatpush1.msra.mxu0 0.0
  %238 = vmatprep.subr.mxu0 0.0
  %239 = vmatpush1.msra.mxu0 0.0
  %240 = vmatprep.subr.mxu0 0.0
  %241 = vmatpush1.msra.mxu0 0.0
  %242 = vmatprep.subr.mxu0 0.0
  %243 = vmatpush1.msra.mxu0 0.0
  %244 = vmatprep.subr.mxu0 0.0
  %245 = vmatpush1.msra.mxu0 0.0
  %246 = vmatprep.mubr.f32.mxu0 0.0
  %247 = vmatmul.mubr.f32.gmra.mrb[0].mxu0 %v180
  %v248 = vpop.f32.mrb[0].mxu0
  %v249 = vadd.f32 %v176, %v248
  %v250 = vpop.f32.mrb[0].mxu0
  %251 = vdwg.mxu0
  %v252 = vmax.f32 %v249, 0.0
  %v253 = vld [vmem:[%s8] sm:$0xff]
  %v254 = vld [vmem:[%s8 + $0x8] sm:$0xff]
  %v255 = vld [vmem:[%s8 + $0x10] sm:$0xff]
  %v256 = vld [vmem:[%s9] sm:$0x1]
  %v258 = vlaneseq
  %v259 = vshrl.u32 %v258, 7
  %v260 = vsub.s32 0, %v259
  %v261 = vrot.slane %v256, %v260
  %vm263 = vcmask 195584
  %v265 = vsel %vm263, %v252, 0
  %267 = vmatprep.subr.mxu0 0.0
  %268 = vmatpush1.msra.mxu0 %v253
  %269 = vmatprep.subr.mxu0 0.0
  %270 = vmatpush1.msra.mxu0 %v254
  %271 = vmatprep.subr.mxu0 0.0
  %272 = vmatpush1.msra.mxu0 %v255
  %273 = vmatprep.subr.mxu0 0.0
  %274 = vmatpush1.msra.mxu0 0.0
  %275 = vmatprep.subr.mxu0 0.0
  %276 = vmatpush1.msra.mxu0 0.0
  %277 = vmatprep.subr.mxu0 0.0
  %278 = vmatpush1.msra.mxu0 0.0
  %279 = vmatprep.subr.mxu0 0.0
  %280 = vmatpush1.msra.mxu0 0.0
  %281 = vmatprep.subr.mxu0 0.0
  %282 = vmatpush1.msra.mxu0 0.0
  %283 = vmatprep.subr.mxu0 0.0
  %284 = vmatpush1.msra.mxu0 0.0
  %285 = vmatprep.subr.mxu0 0.0
  %286 = vmatpush1.msra.mxu0 0.0
  %287 = vmatprep.subr.mxu0 0.0
  %288 = vmatpush1.msra.mxu0 0.0
  %289 = vmatprep.subr.mxu0 0.0
  %290 = vmatpush1.msra.mxu0 0.0
  %291 = vmatprep.subr.mxu0 0.0
  %292 = vmatpush1.msra.mxu0 0.0
  %293 = vmatprep.subr.mxu0 0.0
  %294 = vmatpush1.msra.mxu0 0.0
  %295 = vmatprep.subr.mxu0 0.0
  %296 = vmatpush1.msra.mxu0 0.0
  %297 = vmatprep.subr.mxu0 0.0
  %298 = vmatpush1.msra.mxu0 0.0
  %299 = vmatprep.subr.mxu0 0.0
  %300 = vmatpush1.msra.mxu0 0.0
  %301 = vmatprep.subr.mxu0 0.0
  %302 = vmatpush1.msra.mxu0 0.0
  %303 = vmatprep.subr.mxu0 0.0
  %304 = vmatpush1.msra.mxu0 0.0
  %305 = vmatprep.subr.mxu0 0.0
  %306 = vmatpush1.msra.mxu0 0.0
  %307 = vmatprep.subr.mxu0 0.0
  %308 = vmatpush1.msra.mxu0 0.0
  %309 = vmatprep.subr.mxu0 0.0
  %310 = vmatpush1.msra.mxu0 0.0
  %311 = vmatprep.subr.mxu0 0.0
  %312 = vmatpush1.msra.mxu0 0.0
  %313 = vmatprep.subr.mxu0 0.0
  %314 = vmatpush1.msra.mxu0 0.0
  %315 = vmatprep.subr.mxu0 0.0
  %316 = vmatpush1.msra.mxu0 0.0
  %317 = vmatprep.subr.mxu0 0.0
  %318 = vmatpush1.msra.mxu0 0.0
  %319 = vmatprep.subr.mxu0 0.0
  %320 = vmatpush1.msra.mxu0 0.0
  %321 = vmatprep.subr.mxu0 0.0
  %322 = vmatpush1.msra.mxu0 0.0
  %323 = vmatprep.subr.mxu0 0.0
  %324 = vmatpush1.msra.mxu0 0.0
  %325 = vmatprep.subr.mxu0 0.0
  %326 = vmatpush1.msra.mxu0 0.0
  %327 = vmatprep.subr.mxu0 0.0
  %328 = vmatpush1.msra.mxu0 0.0
  %329 = vmatprep.subr.mxu0 0.0
  %330 = vmatpush1.msra.mxu0 0.0
  %331 = vmatprep.mubr.f32.mxu0 0.0
  %332 = vmatmul.mubr.f32.gmra.mrb[0].mxu0 %v265
  %v333 = vpop.f32.mrb[0].mxu0
  %v334 = vadd.f32 %v261, %v333
  %v335 = vpop.f32.mrb[0].mxu0
  %336 = vdwg.mxu0
  %v337 = vxor.u32 %v334, 2147483648
  %v338 = vmul.f32 %v337, 1.442695
  %v339 = vpow.pop %v338
  %v340 = vadd.f32 %v339, 1.0
  %v341 = vrcp.pop %v340
  %v342 = vmul.f32 1.0, %v341
  %v343 = vld [vmem:[%s3] sm:$0xff]
  %v344 = vld [vmem:[%s3 + $0x8] sm:$0xff]
  %v345 = vld [vmem:[%s3 + $0x10] sm:$0xff]
  %v346 = vld [vmem:[%s3 + $0x18] sm:$0xff]
  %v347 = vld [vmem:[%s4] sm:$0xff]
  %v348 = vld [vmem:[%s4 + $0x8] sm:$0xff]
  %v349 = vld [vmem:[%s10] sm:$0xff]
  %v350 = vld [vmem:[%s10 + $0x8] sm:$0xff]
  %v351 = vld [vmem:[%s10 + $0x10] sm:$0xff]
  %v352 = vld [vmem:[%s10 + $0x18] sm:$0xff]
  %v353 = vld [vmem:[%s11] sm:$0x1]
  %v354 = vld [vmem:[%s12] sm:$0xff]
  %v355 = vld [vmem:[%s12 + $0x8] sm:$0xff]
  %v356 = vld [vmem:[%s12 + $0x10] sm:$0xff]
  %v357 = vld [vmem:[%s12 + $0x18] sm:$0xff]
  %v358 = vld [vmem:[%s13] sm:$0x1]
  %v359 = vld [vmem:[%s14] sm:$0xff]
  %v360 = vld [vmem:[%s14 + $0x8] sm:$0xff]
  %v361 = vld [vmem:[%s14 + $0x10] sm:$0xff]
  %v362 = vld [vmem:[%s14 + $0x18] sm:$0xff]
  %v363 = vld [vmem:[%s15] sm:$0x1]
  %v364 = vld [vmem:[%s16] sm:$0xff]
  %v365 = vld [vmem:[%s16 + $0x8] sm:$0xff]
  %v366 = vld [vmem:[%s16 + $0x10] sm:$0xff]
  %v367 = vld [vmem:[%s16 + $0x18] sm:$0xff]
  %v368 = vld [vmem:[%s17] sm:$0x1]
  %v369 = vld [vmem:[%s18] sm:$0xff]
  %v370 = vld [vmem:[%s18 + $0x8] sm:$0xff]
  %v371 = vld [vmem:[%s18 + $0x10] sm:$0xff]
  %v372 = vld [vmem:[%s18 + $0x18] sm:$0xff]
  %v373 = vld [vmem:[%s18 + $0x20] sm:$0xff]
  %v374 = vld [vmem:[%s18 + $0x28] sm:$0xff]
  %v375 = vld [vmem:[%s18 + $0x30] sm:$0xff]
  %v376 = vld [vmem:[%s18 + $0x38] sm:$0xff]
  %v377 = vld [vmem:[%s18 + $0x40] sm:$0xff]
  %v378 = vld [vmem:[%s18 + $0x48] sm:$0xff]
  %v379 = vld [vmem:[%s18 + $0x50] sm:$0xff]
  %v380 = vld [vmem:[%s18 + $0x58] sm:$0xff]
  %v381 = vld [vmem:[%s19] sm:$0x1]
  %v382 = vld [vmem:[%s20] sm:$0xff]
  %v383 = vld [vmem:[%s20 + $0x8] sm:$0xff]
  %v384 = vld [vmem:[%s20 + $0x10] sm:$0xff]
  %v385 = vld [vmem:[%s21] sm:$0x1]
  %v386 = vld [vmem:[%s1] sm:$0xff]
  %387 = vmatprep.subr.mxu0 0.0
  %388 = vmatpush1.msra.mxu0 %v343
  %389 = vmatprep.subr.mxu0 0.0
  %390 = vmatpush1.msra.mxu0 %v344
  %391 = vmatprep.subr.mxu0 0.0
  %392 = vmatpush1.msra.mxu0 %v345
  %393 = vmatprep.subr.mxu0 0.0
  %394 = vmatpush1.msra.mxu0 %v346
  %395 = vmatprep.subr.mxu0 0.0
  %396 = vmatpush1.msra.mxu0 0.0
  %397 = vmatprep.subr.mxu0 0.0
  %398 = vmatpush1.msra.mxu0 0.0
  %399 = vmatprep.subr.mxu0 0.0
  %400 = vmatpush1.msra.mxu0 0.0
  %401 = vmatprep.subr.mxu0 0.0
  %402 = vmatpush1.msra.mxu0 0.0
  %403 = vmatprep.subr.mxu0 0.0
  %404 = vmatpush1.msra.mxu0 0.0
  %405 = vmatprep.subr.mxu0 0.0
  %406 = vmatpush1.msra.mxu0 0.0
  %407 = vmatprep.subr.mxu0 0.0
  %408 = vmatpush1.msra.mxu0 0.0
  %409 = vmatprep.subr.mxu0 0.0
  %410 = vmatpush1.msra.mxu0 0.0
  %411 = vmatprep.subr.mxu0 0.0
  %412 = vmatpush1.msra.mxu0 0.0
  %413 = vmatprep.subr.mxu0 0.0
  %414 = vmatpush1.msra.mxu0 0.0
  %415 = vmatprep.subr.mxu0 0.0
  %416 = vmatpush1.msra.mxu0 0.0
  %417 = vmatprep.subr.mxu0 0.0
  %418 = vmatpush1.msra.mxu0 0.0
  %419 = vmatprep.subr.mxu0 0.0
  %420 = vmatpush1.msra.mxu0 0.0
  %421 = vmatprep.subr.mxu0 0.0
  %422 = vmatpush1.msra.mxu0 0.0
  %423 = vmatprep.subr.mxu0 0.0
  %424 = vmatpush1.msra.mxu0 0.0
  %425 = vmatprep.subr.mxu0 0.0
  %426 = vmatpush1.msra.mxu0 0.0
  %427 = vmatprep.subr.mxu0 0.0
  %428 = vmatpush1.msra.mxu0 0.0
  %429 = vmatprep.subr.mxu0 0.0
  %430 = vmatpush1.msra.mxu0 0.0
  %431 = vmatprep.subr.mxu0 0.0
  %432 = vmatpush1.msra.mxu0 0.0
  %433 = vmatprep.subr.mxu0 0.0
  %434 = vmatpush1.msra.mxu0 0.0
  %435 = vmatprep.subr.mxu0 0.0
  %436 = vmatpush1.msra.mxu0 0.0
  %437 = vmatprep.subr.mxu0 0.0
  %438 = vmatpush1.msra.mxu0 0.0
  %439 = vmatprep.subr.mxu0 0.0
  %440 = vmatpush1.msra.mxu0 0.0
  %441 = vmatprep.subr.mxu0 0.0
  %442 = vmatpush1.msra.mxu0 0.0
  %443 = vmatprep.subr.mxu0 0.0
  %444 = vmatpush1.msra.mxu0 0.0
  %445 = vmatprep.subr.mxu0 0.0
  %446 = vmatpush1.msra.mxu0 0.0
  %447 = vmatprep.subr.mxu0 0.0
  %448 = vmatpush1.msra.mxu0 0.0
  %449 = vmatprep.subr.mxu0 0.0
  %450 = vmatpush1.msra.mxu0 0.0
  %451 = vmatprep.mubr.f32.mxu0 0.0
  %452 = vmatmul.mubr.f32.gmra.mrb[0].mxu0 %v180
  %v453 = vpop.f32.mrb[0].mxu0
  %v454 = vadd.f32 0.0, %v453
  %v455 = vpop.f32.mrb[0].mxu0
  %456 = vdwg.mxu0
  %v457 = vadd.f32 %v164, %v454
  %v458 = vsel %vm93, 0.0, 0
  %460 = vmatprep.subr.mxu0 0.0
  %461 = vmatpush1.msra.mxu0 %v347
  %462 = vmatprep.subr.mxu0 0.0
  %463 = vmatpush1.msra.mxu0 %v348
  %464 = vmatprep.subr.mxu0 0.0
  %465 = vmatpush1.msra.mxu0 0.0
  %466 = vmatprep.subr.mxu0 0.0
  %467 = vmatpush1.msra.mxu0 0.0
  %468 = vmatprep.subr.mxu0 0.0
  %469 = vmatpush1.msra.mxu0 0.0
  %470 = vmatprep.subr.mxu0 0.0
  %471 = vmatpush1.msra.mxu0 0.0
  %472 = vmatprep.subr.mxu0 0.0
  %473 = vmatpush1.msra.mxu0 0.0
  %474 = vmatprep.subr.mxu0 0.0
  %475 = vmatpush1.msra.mxu0 0.0
  %476 = vmatprep.subr.mxu0 0.0
  %477 = vmatpush1.msra.mxu0 0.0
  %478 = vmatprep.subr.mxu0 0.0
  %479 = vmatpush1.msra.mxu0 0.0
  %480 = vmatprep.subr.mxu0 0.0
  %481 = vmatpush1.msra.mxu0 0.0
  %482 = vmatprep.subr.mxu0 0.0
  %483 = vmatpush1.msra.mxu0 0.0
  %484 = vmatprep.subr.mxu0 0.0
  %485 = vmatpush1.msra.mxu0 0.0
  %486 = vmatprep.subr.mxu0 0.0
  %487 = vmatpush1.msra.mxu0 0.0
  %488 = vmatprep.subr.mxu0 0.0
  %489 = vmatpush1.msra.mxu0 0.0
  %490 = vmatprep.subr.mxu0 0.0
  %491 = vmatpush1.msra.mxu0 0.0
  %492 = vmatprep.subr.mxu0 0.0
  %493 = vmatpush1.msra.mxu0 0.0
  %494 = vmatprep.subr.mxu0 0.0
  %495 = vmatpush1.msra.mxu0 0.0
  %496 = vmatprep.subr.mxu0 0.0
  %497 = vmatpush1.msra.mxu0 0.0
  %498 = vmatprep.subr.mxu0 0.0
  %499 = vmatpush1.msra.mxu0 0.0
  %500 = vmatprep.subr.mxu0 0.0
  %501 = vmatpush1.msra.mxu0 0.0
  %502 = vmatprep.subr.mxu0 0.0
  %503 = vmatpush1.msra.mxu0 0.0
  %504 = vmatprep.subr.mxu0 0.0
  %505 = vmatpush1.msra.mxu0 0.0
  %506 = vmatprep.subr.mxu0 0.0
  %507 = vmatpush1.msra.mxu0 0.0
  %508 = vmatprep.subr.mxu0 0.0
  %509 = vmatpush1.msra.mxu0 0.0
  %510 = vmatprep.subr.mxu0 0.0
  %511 = vmatpush1.msra.mxu0 0.0
  %512 = vmatprep.subr.mxu0 0.0
  %513 = vmatpush1.msra.mxu0 0.0
  %514 = vmatprep.subr.mxu0 0.0
  %515 = vmatpush1.msra.mxu0 0.0
  %516 = vmatprep.subr.mxu0 0.0
  %517 = vmatpush1.msra.mxu0 0.0
  %518 = vmatprep.subr.mxu0 0.0
  %519 = vmatpush1.msra.mxu0 0.0
  %520 = vmatprep.subr.mxu0 0.0
  %521 = vmatpush1.msra.mxu0 0.0
  %522 = vmatprep.subr.mxu0 0.0
  %523 = vmatpush1.msra.mxu0 0.0
  %524 = vmatprep.mubr.f32.mxu0 0.0
  %525 = vmatmul.mubr.f32.gmra.mrb[0].mxu0 %v458
  %v526 = vpop.f32.mrb[0].mxu0
  %v527 = vadd.f32 0.0, %v526
  %v528 = vpop.f32.mrb[0].mxu0
  %529 = vdwg.mxu0
  %v530 = vadd.f32 %v457, %v527
  %v531 = vxor.u32 %v530, 2147483648
  %v532 = vmul.f32 %v531, 1.442695
  %v533 = vpow.pop %v532
  %v534 = vadd.f32 %v533, 1.0
  %v535 = vrcp.pop %v534
  %v536 = vmul.f32 1.0, %v535
  %v537 = vtanh.pop %v530
  %v538 = vmul.f32 %v536, 0.0
  %540 = vrot.lane.b32.xlu0 %v537, 64
  %v541 = vpop.permute.xlu0 %540
  %v543 = vmul.f32 %v536, %v541
  %545 = vrot.lane.b32.xlu0 %v543, 96
  %v546 = vpop.permute.xlu0 %545
  %v548 = vadd.f32 %v538, %v546
  %v549 = vtanh.pop %v548
  %551 = vrot.lane.b32.xlu0 %v536, 64
  %v552 = vpop.permute.xlu0 %551
  %v554 = vmul.f32 %v549, %v552
  %v556 = vlaneseq
  %v557 = vshrl.u32 %v556, 7
  %v558 = vsub.s32 0, %v557
  %v559 = vrot.slane %v353, %v558
  %561 = vmatprep.subr.mxu0 0.0
  %562 = vmatpush1.msra.mxu0 %v349
  %563 = vmatprep.subr.mxu0 0.0
  %564 = vmatpush1.msra.mxu0 %v350
  %565 = vmatprep.subr.mxu0 0.0
  %566 = vmatpush1.msra.mxu0 %v351
  %567 = vmatprep.subr.mxu0 0.0
  %568 = vmatpush1.msra.mxu0 %v352
  %569 = vmatprep.subr.mxu0 0.0
  %570 = vmatpush1.msra.mxu0 0.0
  %571 = vmatprep.subr.mxu0 0.0
  %572 = vmatpush1.msra.mxu0 0.0
  %573 = vmatprep.subr.mxu0 0.0
  %574 = vmatpush1.msra.mxu0 0.0
  %575 = vmatprep.subr.mxu0 0.0
  %576 = vmatpush1.msra.mxu0 0.0
  %577 = vmatprep.subr.mxu0 0.0
  %578 = vmatpush1.msra.mxu0 0.0
  %579 = vmatprep.subr.mxu0 0.0
  %580 = vmatpush1.msra.mxu0 0.0
  %581 = vmatprep.subr.mxu0 0.0
  %582 = vmatpush1.msra.mxu0 0.0
  %583 = vmatprep.subr.mxu0 0.0
  %584 = vmatpush1.msra.mxu0 0.0
  %585 = vmatprep.subr.mxu0 0.0
  %586 = vmatpush1.msra.mxu0 0.0
  %587 = vmatprep.subr.mxu0 0.0
  %588 = vmatpush1.msra.mxu0 0.0
  %589 = vmatprep.subr.mxu0 0.0
  %590 = vmatpush1.msra.mxu0 0.0
  %591 = vmatprep.subr.mxu0 0.0
  %592 = vmatpush1.msra.mxu0 0.0
  %593 = vmatprep.subr.mxu0 0.0
  %594 = vmatpush1.msra.mxu0 0.0
  %595 = vmatprep.subr.mxu0 0.0
  %596 = vmatpush1.msra.mxu0 0.0
  %597 = vmatprep.subr.mxu0 0.0
  %598 = vmatpush1.msra.mxu0 0.0
  %599 = vmatprep.subr.mxu0 0.0
  %600 = vmatpush1.msra.mxu0 0.0
  %601 = vmatprep.subr.mxu0 0.0
  %602 = vmatpush1.msra.mxu0 0.0
  %603 = vmatprep.subr.mxu0 0.0
  %604 = vmatpush1.msra.mxu0 0.0
  %605 = vmatprep.subr.mxu0 0.0
  %606 = vmatpush1.msra.mxu0 0.0
  %607 = vmatprep.subr.mxu0 0.0
  %608 = vmatpush1.msra.mxu0 0.0
  %609 = vmatprep.subr.mxu0 0.0
  %610 = vmatpush1.msra.mxu0 0.0
  %611 = vmatprep.subr.mxu0 0.0
  %612 = vmatpush1.msra.mxu0 0.0
  %613 = vmatprep.subr.mxu0 0.0
  %614 = vmatpush1.msra.mxu0 0.0
  %615 = vmatprep.subr.mxu0 0.0
  %616 = vmatpush1.msra.mxu0 0.0
  %617 = vmatprep.subr.mxu0 0.0
  %618 = vmatpush1.msra.mxu0 0.0
  %619 = vmatprep.subr.mxu0 0.0
  %620 = vmatpush1.msra.mxu0 0.0
  %621 = vmatprep.subr.mxu0 0.0
  %622 = vmatpush1.msra.mxu0 0.0
  %623 = vmatprep.subr.mxu0 0.0
  %624 = vmatpush1.msra.mxu0 0.0
  %625 = vmatprep.mubr.f32.mxu0 0.0
  %626 = vmatmul.mubr.f32.gmra.mrb[0].mxu0 %v180
  %v627 = vpop.f32.mrb[0].mxu0
  %v628 = vadd.f32 %v559, %v627
  %v629 = vpop.f32.mrb[0].mxu0
  %630 = vdwg.mxu0
  %631 = vmatprep.subr.mxu0 0.0
  %632 = vmatpush1.msra.mxu0 %v354
  %633 = vmatprep.subr.mxu0 0.0
  %634 = vmatpush1.msra.mxu0 %v355
  %635 = vmatprep.subr.mxu0 0.0
  %636 = vmatpush1.msra.mxu0 %v356
  %637 = vmatprep.subr.mxu0 0.0
  %638 = vmatpush1.msra.mxu0 %v357
  %639 = vmatprep.subr.mxu0 0.0
  %640 = vmatpush1.msra.mxu0 0.0
  %641 = vmatprep.subr.mxu0 0.0
  %642 = vmatpush1.msra.mxu0 0.0
  %643 = vmatprep.subr.mxu0 0.0
  %644 = vmatpush1.msra.mxu0 0.0
  %645 = vmatprep.subr.mxu0 0.0
  %646 = vmatpush1.msra.mxu0 0.0
  %647 = vmatprep.subr.mxu0 0.0
  %648 = vmatpush1.msra.mxu0 0.0
  %649 = vmatprep.subr.mxu0 0.0
  %650 = vmatpush1.msra.mxu0 0.0
  %651 = vmatprep.subr.mxu0 0.0
  %652 = vmatpush1.msra.mxu0 0.0
  %653 = vmatprep.subr.mxu0 0.0
  %654 = vmatpush1.msra.mxu0 0.0
  %655 = vmatprep.subr.mxu0 0.0
  %656 = vmatpush1.msra.mxu0 0.0
  %657 = vmatprep.subr.mxu0 0.0
  %658 = vmatpush1.msra.mxu0 0.0
  %659 = vmatprep.subr.mxu0 0.0
  %660 = vmatpush1.msra.mxu0 0.0
  %661 = vmatprep.subr.mxu0 0.0
  %662 = vmatpush1.msra.mxu0 0.0
  %663 = vmatprep.subr.mxu0 0.0
  %664 = vmatpush1.msra.mxu0 0.0
  %665 = vmatprep.subr.mxu0 0.0
  %666 = vmatpush1.msra.mxu0 0.0
  %667 = vmatprep.subr.mxu0 0.0
  %668 = vmatpush1.msra.mxu0 0.0
  %669 = vmatprep.subr.mxu0 0.0
  %670 = vmatpush1.msra.mxu0 0.0
  %671 = vmatprep.subr.mxu0 0.0
  %672 = vmatpush1.msra.mxu0 0.0
  %673 = vmatprep.subr.mxu0 0.0
  %674 = vmatpush1.msra.mxu0 0.0
  %675 = vmatprep.subr.mxu0 0.0
  %676 = vmatpush1.msra.mxu0 0.0
  %677 = vmatprep.subr.mxu0 0.0
  %678 = vmatpush1.msra.mxu0 0.0
  %679 = vmatprep.subr.mxu0 0.0
  %680 = vmatpush1.msra.mxu0 0.0
  %681 = vmatprep.subr.mxu0 0.0
  %682 = vmatpush1.msra.mxu0 0.0
  %683 = vmatprep.subr.mxu0 0.0
  %684 = vmatpush1.msra.mxu0 0.0
  %685 = vmatprep.subr.mxu0 0.0
  %686 = vmatpush1.msra.mxu0 0.0
  %687 = vmatprep.subr.mxu0 0.0
  %688 = vmatpush1.msra.mxu0 0.0
  %689 = vmatprep.subr.mxu0 0.0
  %690 = vmatpush1.msra.mxu0 0.0
  %691 = vmatprep.subr.mxu0 0.0
  %692 = vmatpush1.msra.mxu0 0.0
  %693 = vmatprep.subr.mxu0 0.0
  %694 = vmatpush1.msra.mxu0 0.0
  %695 = vmatprep.mubr.f32.mxu0 0.0
  %696 = vmatmul.mubr.f32.gmra.mrb[0].mxu0 %v180
  %v697 = vpop.f32.mrb[0].mxu0
  %v698 = vadd.f32 0.0, %v697
  %v699 = vpop.f32.mrb[0].mxu0
  %700 = vdwg.mxu0
  %v701 = vadd.f32 %v628, %v698
  %v703 = vlaneseq
  %v704 = vshrl.u32 %v703, 7
  %v705 = vsub.s32 0, %v704
  %v706 = vrot.slane %v358, %v705
  %v708 = vadd.f32 %v701, %v706
  %v709 = vxor.u32 %v708, 2147483648
  %v710 = vmul.f32 %v709, 1.442695
  %v711 = vpow.pop %v710
  %v712 = vadd.f32 %v711, 1.0
  %v713 = vrcp.pop %v712
  %v714 = vmul.f32 1.0, %v713
  %v715 = vtanh.pop %v708
  %v716 = vmul.f32 %v714, %v342
  %718 = vrot.lane.b32.xlu0 %v715, 64
  %v719 = vpop.permute.xlu0 %718
  %v721 = vmul.f32 %v714, %v719
  %723 = vrot.lane.b32.xlu0 %v721, 96
  %v724 = vpop.permute.xlu0 %723
  %v726 = vadd.f32 %v716, %v724
  %v727 = vtanh.pop %v726
  %729 = vrot.lane.b32.xlu0 %v714, 64
  %v730 = vpop.permute.xlu0 %729
  %v732 = vmul.f32 %v727, %v730
  %vm733 = vcmask 254976
  %v734 = vsel %vm733, %v732, -inf
  %735 = vmax.xlane.f32.xlu0 %v734
  %v736 = vpop.xlane.xlu0 %735
  %v737 = vsub.f32 %v732, %v736
  %v738 = vmul.f32 %v737, 1.442695
  %v739 = vpow.pop %v738
  %v740 = vsel %vm733, %v739, 0.0
  %741 = vadd.xlane.f32.xlu0 %v740
  %v742 = vpop.xlane.xlu0 %741
  %v743 = vrcp.pop %v742
  %v744 = vmul.f32 %v739, %v743
  %v745 = vmul.f32 %v744, 0.0
  %v747 = vsel %vm178, %v745, 0
  %749 = vmatprep.subr.mxu0 0.0
  %750 = vmatpush1.msra.mxu0 %v349
  %751 = vmatprep.subr.mxu0 0.0
  %752 = vmatpush1.msra.mxu0 %v350
  %753 = vmatprep.subr.mxu0 0.0
  %754 = vmatpush1.msra.mxu0 %v351
  %755 = vmatprep.subr.mxu0 0.0
  %756 = vmatpush1.msra.mxu0 %v352
  %757 = vmatprep.subr.mxu0 0.0
  %758 = vmatpush1.msra.mxu0 0.0
  %759 = vmatprep.subr.mxu0 0.0
  %760 = vmatpush1.msra.mxu0 0.0
  %761 = vmatprep.subr.mxu0 0.0
  %762 = vmatpush1.msra.mxu0 0.0
  %763 = vmatprep.subr.mxu0 0.0
  %764 = vmatpush1.msra.mxu0 0.0
  %765 = vmatprep.subr.mxu0 0.0
  %766 = vmatpush1.msra.mxu0 0.0
  %767 = vmatprep.subr.mxu0 0.0
  %768 = vmatpush1.msra.mxu0 0.0
  %769 = vmatprep.subr.mxu0 0.0
  %770 = vmatpush1.msra.mxu0 0.0
  %771 = vmatprep.subr.mxu0 0.0
  %772 = vmatpush1.msra.mxu0 0.0
  %773 = vmatprep.subr.mxu0 0.0
  %774 = vmatpush1.msra.mxu0 0.0
  %775 = vmatprep.subr.mxu0 0.0
  %776 = vmatpush1.msra.mxu0 0.0
  %777 = vmatprep.subr.mxu0 0.0
  %778 = vmatpush1.msra.mxu0 0.0
  %779 = vmatprep.subr.mxu0 0.0
  %780 = vmatpush1.msra.mxu0 0.0
  %781 = vmatprep.subr.mxu0 0.0
  %782 = vmatpush1.msra.mxu0 0.0
  %783 = vmatprep.subr.mxu0 0.0
  %784 = vmatpush1.msra.mxu0 0.0
  %785 = vmatprep.subr.mxu0 0.0
  %786 = vmatpush1.msra.mxu0 0.0
  %787 = vmatprep.subr.mxu0 0.0
  %788 = vmatpush1.msra.mxu0 0.0
  %789 = vmatprep.subr.mxu0 0.0
  %790 = vmatpush1.msra.mxu0 0.0
  %791 = vmatprep.subr.mxu0 0.0
  %792 = vmatpush1.msra.mxu0 0.0
  %793 = vmatprep.subr.mxu0 0.0
  %794 = vmatpush1.msra.mxu0 0.0
  %795 = vmatprep.subr.mxu0 0.0
  %796 = vmatpush1.msra.mxu0 0.0
  %797 = vmatprep.subr.mxu0 0.0
  %798 = vmatpush1.msra.mxu0 0.0
  %799 = vmatprep.subr.mxu0 0.0
  %800 = vmatpush1.msra.mxu0 0.0
  %801 = vmatprep.subr.mxu0 0.0
  %802 = vmatpush1.msra.mxu0 0.0
  %803 = vmatprep.subr.mxu0 0.0
  %804 = vmatpush1.msra.mxu0 0.0
  %805 = vmatprep.subr.mxu0 0.0
  %806 = vmatpush1.msra.mxu0 0.0
  %807 = vmatprep.subr.mxu0 0.0
  %808 = vmatpush1.msra.mxu0 0.0
  %809 = vmatprep.subr.mxu0 0.0
  %810 = vmatpush1.msra.mxu0 0.0
  %811 = vmatprep.subr.mxu0 0.0
  %812 = vmatpush1.msra.mxu0 0.0
  %813 = vmatprep.mubr.f32.mxu0 0.0
  %814 = vmatmul.mubr.f32.gmra.mrb[0].mxu0 %v747
  %v815 = vpop.f32.mrb[0].mxu0
  %v816 = vadd.f32 %v559, %v815
  %v817 = vpop.f32.mrb[0].mxu0
  %818 = vdwg.mxu0
  %v820 = vsel %vm178, %v744, 0
  %822 = vmatprep.subr.mxu0 0.0
  %823 = vmatpush1.msra.mxu0 %v354
  %824 = vmatprep.subr.mxu0 0.0
  %825 = vmatpush1.msra.mxu0 %v355
  %826 = vmatprep.subr.mxu0 0.0
  %827 = vmatpush1.msra.mxu0 %v356
  %828 = vmatprep.subr.mxu0 0.0
  %829 = vmatpush1.msra.mxu0 %v357
  %830 = vmatprep.subr.mxu0 0.0
  %831 = vmatpush1.msra.mxu0 0.0
  %832 = vmatprep.subr.mxu0 0.0
  %833 = vmatpush1.msra.mxu0 0.0
  %834 = vmatprep.subr.mxu0 0.0
  %835 = vmatpush1.msra.mxu0 0.0
  %836 = vmatprep.subr.mxu0 0.0
  %837 = vmatpush1.msra.mxu0 0.0
  %838 = vmatprep.subr.mxu0 0.0
  %839 = vmatpush1.msra.mxu0 0.0
  %840 = vmatprep.subr.mxu0 0.0
  %841 = vmatpush1.msra.mxu0 0.0
  %842 = vmatprep.subr.mxu0 0.0
  %843 = vmatpush1.msra.mxu0 0.0
  %844 = vmatprep.subr.mxu0 0.0
  %845 = vmatpush1.msra.mxu0 0.0
  %846 = vmatprep.subr.mxu0 0.0
  %847 = vmatpush1.msra.mxu0 0.0
  %848 = vmatprep.subr.mxu0 0.0
  %849 = vmatpush1.msra.mxu0 0.0
  %850 = vmatprep.subr.mxu0 0.0
  %851 = vmatpush1.msra.mxu0 0.0
  %852 = vmatprep.subr.mxu0 0.0
  %853 = vmatpush1.msra.mxu0 0.0
  %854 = vmatprep.subr.mxu0 0.0
  %855 = vmatpush1.msra.mxu0 0.0
  %856 = vmatprep.subr.mxu0 0.0
  %857 = vmatpush1.msra.mxu0 0.0
  %858 = vmatprep.subr.mxu0 0.0
  %859 = vmatpush1.msra.mxu0 0.0
  %860 = vmatprep.subr.mxu0 0.0
  %861 = vmatpush1.msra.mxu0 0.0
  %862 = vmatprep.subr.mxu0 0.0
  %863 = vmatpush1.msra.mxu0 0.0
  %864 = vmatprep.subr.mxu0 0.0
  %865 = vmatpush1.msra.mxu0 0.0
  %866 = vmatprep.subr.mxu0 0.0
  %867 = vmatpush1.msra.mxu0 0.0
  %868 = vmatprep.subr.mxu0 0.0
  %869 = vmatpush1.msra.mxu0 0.0
  %870 = vmatprep.subr.mxu0 0.0
  %871 = vmatpush1.msra.mxu0 0.0
  %872 = vmatprep.subr.mxu0 0.0
  %873 = vmatpush1.msra.mxu0 0.0
  %874 = vmatprep.subr.mxu0 0.0
  %875 = vmatpush1.msra.mxu0 0.0
  %876 = vmatprep.subr.mxu0 0.0
  %877 = vmatpush1.msra.mxu0 0.0
  %878 = vmatprep.subr.mxu0 0.0
  %879 = vmatpush1.msra.mxu0 0.0
  %880 = vmatprep.subr.mxu0 0.0
  %881 = vmatpush1.msra.mxu0 0.0
  %882 = vmatprep.subr.mxu0 0.0
  %883 = vmatpush1.msra.mxu0 0.0
  %884 = vmatprep.subr.mxu0 0.0
  %885 = vmatpush1.msra.mxu0 0.0
  %886 = vmatprep.mubr.f32.mxu0 0.0
  %887 = vmatmul.mubr.f32.gmra.mrb[0].mxu0 %v820
  %v888 = vpop.f32.mrb[0].mxu0
  %v889 = vadd.f32 0.0, %v888
  %v890 = vpop.f32.mrb[0].mxu0
  %891 = vdwg.mxu0
  %v892 = vadd.f32 %v816, %v889
  %v893 = vadd.f32 %v892, %v706
  %v894 = vxor.u32 %v893, 2147483648
  %v895 = vmul.f32 %v894, 1.442695
  %v896 = vpow.pop %v895
  %v897 = vadd.f32 %v896, 1.0
  %v898 = vrcp.pop %v897
  %v899 = vmul.f32 1.0, %v898
  %v900 = vtanh.pop %v893
  %v901 = vmul.f32 %v899, %v726
  %903 = vrot.lane.b32.xlu0 %v900, 64
  %v904 = vpop.permute.xlu0 %903
  %v906 = vmul.f32 %v899, %v904
  %908 = vrot.lane.b32.xlu0 %v906, 96
  %v909 = vpop.permute.xlu0 %908
  %v911 = vadd.f32 %v901, %v909
  %v912 = vtanh.pop %v911
  %914 = vrot.lane.b32.xlu0 %v899, 64
  %v915 = vpop.permute.xlu0 %914
  %v917 = vmul.f32 %v912, %v915
  %v918 = vsel %vm733, %v917, -inf
  %919 = vmax.xlane.f32.xlu0 %v918
  %v920 = vpop.xlane.xlu0 %919
  %v921 = vsub.f32 %v917, %v920
  %v922 = vmul.f32 %v921, 1.442695
  %v923 = vpow.pop %v922
  %v924 = vsel %vm733, %v923, 0.0
  %925 = vadd.xlane.f32.xlu0 %v924
  %v926 = vpop.xlane.xlu0 %925
  %v927 = vrcp.pop %v926
  %v928 = vmul.f32 %v923, %v927
  %v929 = vmul.f32 %v928, 0.0
  %v931 = vsel %vm178, %v929, 0
  %933 = vmatprep.subr.mxu0 0.0
  %934 = vmatpush1.msra.mxu0 %v349
  %935 = vmatprep.subr.mxu0 0.0
  %936 = vmatpush1.msra.mxu0 %v350
  %937 = vmatprep.subr.mxu0 0.0
  %938 = vmatpush1.msra.mxu0 %v351
  %939 = vmatprep.subr.mxu0 0.0
  %940 = vmatpush1.msra.mxu0 %v352
  %941 = vmatprep.subr.mxu0 0.0
  %942 = vmatpush1.msra.mxu0 0.0
  %943 = vmatprep.subr.mxu0 0.0
  %944 = vmatpush1.msra.mxu0 0.0
  %945 = vmatprep.subr.mxu0 0.0
  %946 = vmatpush1.msra.mxu0 0.0
  %947 = vmatprep.subr.mxu0 0.0
  %948 = vmatpush1.msra.mxu0 0.0
  %949 = vmatprep.subr.mxu0 0.0
  %950 = vmatpush1.msra.mxu0 0.0
  %951 = vmatprep.subr.mxu0 0.0
  %952 = vmatpush1.msra.mxu0 0.0
  %953 = vmatprep.subr.mxu0 0.0
  %954 = vmatpush1.msra.mxu0 0.0
  %955 = vmatprep.subr.mxu0 0.0
  %956 = vmatpush1.msra.mxu0 0.0
  %957 = vmatprep.subr.mxu0 0.0
  %958 = vmatpush1.msra.mxu0 0.0
  %959 = vmatprep.subr.mxu0 0.0
  %960 = vmatpush1.msra.mxu0 0.0
  %961 = vmatprep.subr.mxu0 0.0
  %962 = vmatpush1.msra.mxu0 0.0
  %963 = vmatprep.subr.mxu0 0.0
  %964 = vmatpush1.msra.mxu0 0.0
  %965 = vmatprep.subr.mxu0 0.0
  %966 = vmatpush1.msra.mxu0 0.0
  %967 = vmatprep.subr.mxu0 0.0
  %968 = vmatpush1.msra.mxu0 0.0
  %969 = vmatprep.subr.mxu0 0.0
  %970 = vmatpush1.msra.mxu0 0.0
  %971 = vmatprep.subr.mxu0 0.0
  %972 = vmatpush1.msra.mxu0 0.0
  %973 = vmatprep.subr.mxu0 0.0
  %974 = vmatpush1.msra.mxu0 0.0
  %975 = vmatprep.subr.mxu0 0.0
  %976 = vmatpush1.msra.mxu0 0.0
  %977 = vmatprep.subr.mxu0 0.0
  %978 = vmatpush1.msra.mxu0 0.0
  %979 = vmatprep.subr.mxu0 0.0
  %980 = vmatpush1.msra.mxu0 0.0
  %981 = vmatprep.subr.mxu0 0.0
  %982 = vmatpush1.msra.mxu0 0.0
  %983 = vmatprep.subr.mxu0 0.0
  %984 = vmatpush1.msra.mxu0 0.0
  %985 = vmatprep.subr.mxu0 0.0
  %986 = vmatpush1.msra.mxu0 0.0
  %987 = vmatprep.subr.mxu0 0.0
  %988 = vmatpush1.msra.mxu0 0.0
  %989 = vmatprep.subr.mxu0 0.0
  %990 = vmatpush1.msra.mxu0 0.0
  %991 = vmatprep.subr.mxu0 0.0
  %992 = vmatpush1.msra.mxu0 0.0
  %993 = vmatprep.subr.mxu0 0.0
  %994 = vmatpush1.msra.mxu0 0.0
  %995 = vmatprep.subr.mxu0 0.0
  %996 = vmatpush1.msra.mxu0 0.0
  %997 = vmatprep.mubr.f32.mxu0 0.0
  %998 = vmatmul.mubr.f32.gmra.mrb[0].mxu0 %v931
  %v999 = vpop.f32.mrb[0].mxu0
  %v1000 = vadd.f32 %v559, %v999
  %v1001 = vpop.f32.mrb[0].mxu0
  %1002 = vdwg.mxu0
  %v1004 = vsel %vm178, %v928, 0
  %1006 = vmatprep.subr.mxu0 0.0
  %1007 = vmatpush1.msra.mxu0 %v354
  %1008 = vmatprep.subr.mxu0 0.0
  %1009 = vmatpush1.msra.mxu0 %v355
  %1010 = vmatprep.subr.mxu0 0.0
  %1011 = vmatpush1.msra.mxu0 %v356
  %1012 = vmatprep.subr.mxu0 0.0
  %1013 = vmatpush1.msra.mxu0 %v357
  %1014 = vmatprep.subr.mxu0 0.0
  %1015 = vmatpush1.msra.mxu0 0.0
  %1016 = vmatprep.subr.mxu0 0.0
  %1017 = vmatpush1.msra.mxu0 0.0
  %1018 = vmatprep.subr.mxu0 0.0
  %1019 = vmatpush1.msra.mxu0 0.0
  %1020 = vmatprep.subr.mxu0 0.0
  %1021 = vmatpush1.msra.mxu0 0.0
  %1022 = vmatprep.subr.mxu0 0.0
  %1023 = vmatpush1.msra.mxu0 0.0
  %1024 = vmatprep.subr.mxu0 0.0
  %1025 = vmatpush1.msra.mxu0 0.0
  %1026 = vmatprep.subr.mxu0 0.0
  %1027 = vmatpush1.msra.mxu0 0.0
  %1028 = vmatprep.subr.mxu0 0.0
  %1029 = vmatpush1.msra.mxu0 0.0
  %1030 = vmatprep.subr.mxu0 0.0
  %1031 = vmatpush1.msra.mxu0 0.0
  %1032 = vmatprep.subr.mxu0 0.0
  %1033 = vmatpush1.msra.mxu0 0.0
  %1034 = vmatprep.subr.mxu0 0.0
  %1035 = vmatpush1.msra.mxu0 0.0
  %1036 = vmatprep.subr.mxu0 0.0
  %1037 = vmatpush1.msra.mxu0 0.0
  %1038 = vmatprep.subr.mxu0 0.0
  %1039 = vmatpush1.msra.mxu0 0.0
  %1040 = vmatprep.subr.mxu0 0.0
  %1041 = vmatpush1.msra.mxu0 0.0
  %1042 = vmatprep.subr.mxu0 0.0
  %1043 = vmatpush1.msra.mxu0 0.0
  %1044 = vmatprep.subr.mxu0 0.0
  %1045 = vmatpush1.msra.mxu0 0.0
  %1046 = vmatprep.subr.mxu0 0.0
  %1047 = vmatpush1.msra.mxu0 0.0
  %1048 = vmatprep.subr.mxu0 0.0
  %1049 = vmatpush1.msra.mxu0 0.0
  %1050 = vmatprep.subr.mxu0 0.0
  %1051 = vmatpush1.msra.mxu0 0.0
  %1052 = vmatprep.subr.mxu0 0.0
  %1053 = vmatpush1.msra.mxu0 0.0
  %1054 = vmatprep.subr.mxu0 0.0
  %1055 = vmatpush1.msra.mxu0 0.0
  %1056 = vmatprep.subr.mxu0 0.0
  %1057 = vmatpush1.msra.mxu0 0.0
  %1058 = vmatprep.subr.mxu0 0.0
  %1059 = vmatpush1.msra.mxu0 0.0
  %1060 = vmatprep.subr.mxu0 0.0
  %1061 = vmatpush1.msra.mxu0 0.0
  %1062 = vmatprep.subr.mxu0 0.0
  %1063 = vmatpush1.msra.mxu0 0.0
  %1064 = vmatprep.subr.mxu0 0.0
  %1065 = vmatpush1.msra.mxu0 0.0
  %1066 = vmatprep.subr.mxu0 0.0
  %1067 = vmatpush1.msra.mxu0 0.0
  %1068 = vmatprep.subr.mxu0 0.0
  %1069 = vmatpush1.msra.mxu0 0.0
  %1070 = vmatprep.mubr.f32.mxu0 0.0
  %1071 = vmatmul.mubr.f32.gmra.mrb[0].mxu0 %v1004
  %v1072 = vpop.f32.mrb[0].mxu0
  %v1073 = vadd.f32 0.0, %v1072
  %v1074 = vpop.f32.mrb[0].mxu0
  %1075 = vdwg.mxu0
  %v1076 = vadd.f32 %v1000, %v1073
  %v1077 = vadd.f32 %v1076, %v706
  %v1078 = vxor.u32 %v1077, 2147483648
  %v1079 = vmul.f32 %v1078, 1.442695
  %v1080 = vpow.pop %v1079
  %v1081 = vadd.f32 %v1080, 1.0
  %v1082 = vrcp.pop %v1081
  %v1083 = vmul.f32 1.0, %v1082
  %v1084 = vtanh.pop %v1077
  %v1085 = vmul.f32 %v1083, %v911
  %1087 = vrot.lane.b32.xlu0 %v1084, 64
  %v1088 = vpop.permute.xlu0 %1087
  %v1090 = vmul.f32 %v1083, %v1088
  %1092 = vrot.lane.b32.xlu0 %v1090, 96
  %v1093 = vpop.permute.xlu0 %1092
  %v1095 = vadd.f32 %v1085, %v1093
  %v1096 = vtanh.pop %v1095
  %1098 = vrot.lane.b32.xlu0 %v1083, 64
  %v1099 = vpop.permute.xlu0 %1098
  %v1101 = vmul.f32 %v1096, %v1099
  %v1102 = vsel %vm733, %v1101, -inf
  %1103 = vmax.xlane.f32.xlu0 %v1102
  %v1104 = vpop.xlane.xlu0 %1103
  %v1105 = vsub.f32 %v1101, %v1104
  %v1106 = vmul.f32 %v1105, 1.442695
  %v1107 = vpow.pop %v1106
  %v1108 = vsel %vm733, %v1107, 0.0
  %1109 = vadd.xlane.f32.xlu0 %v1108
  %v1110 = vpop.xlane.xlu0 %1109
  %v1111 = vrcp.pop %v1110
  %v1112 = vmul.f32 %v1107, %v1111
  %v1113 = vmul.f32 %v1112, 0.0
  %v1115 = vlaneseq
  %v1116 = vshrl.u32 %v1115, 7
  %v1117 = vsub.s32 0, %v1116
  %v1118 = vrot.slane %v363, %v1117
  %1120 = vmatprep.subr.mxu0 0.0
  %1121 = vmatpush1.msra.mxu0 %v359
  %1122 = vmatprep.subr.mxu0 0.0
  %1123 = vmatpush1.msra.mxu0 %v360
  %1124 = vmatprep.subr.mxu0 0.0
  %1125 = vmatpush1.msra.mxu0 %v361
  %1126 = vmatprep.subr.mxu0 0.0
  %1127 = vmatpush1.msra.mxu0 %v362
  %1128 = vmatprep.subr.mxu0 0.0
  %1129 = vmatpush1.msra.mxu0 0.0
  %1130 = vmatprep.subr.mxu0 0.0
  %1131 = vmatpush1.msra.mxu0 0.0
  %1132 = vmatprep.subr.mxu0 0.0
  %1133 = vmatpush1.msra.mxu0 0.0
  %1134 = vmatprep.subr.mxu0 0.0
  %1135 = vmatpush1.msra.mxu0 0.0
  %1136 = vmatprep.subr.mxu0 0.0
  %1137 = vmatpush1.msra.mxu0 0.0
  %1138 = vmatprep.subr.mxu0 0.0
  %1139 = vmatpush1.msra.mxu0 0.0
  %1140 = vmatprep.subr.mxu0 0.0
  %1141 = vmatpush1.msra.mxu0 0.0
  %1142 = vmatprep.subr.mxu0 0.0
  %1143 = vmatpush1.msra.mxu0 0.0
  %1144 = vmatprep.subr.mxu0 0.0
  %1145 = vmatpush1.msra.mxu0 0.0
  %1146 = vmatprep.subr.mxu0 0.0
  %1147 = vmatpush1.msra.mxu0 0.0
  %1148 = vmatprep.subr.mxu0 0.0
  %1149 = vmatpush1.msra.mxu0 0.0
  %1150 = vmatprep.subr.mxu0 0.0
  %1151 = vmatpush1.msra.mxu0 0.0
  %1152 = vmatprep.subr.mxu0 0.0
  %1153 = vmatpush1.msra.mxu0 0.0
  %1154 = vmatprep.subr.mxu0 0.0
  %1155 = vmatpush1.msra.mxu0 0.0
  %1156 = vmatprep.subr.mxu0 0.0
  %1157 = vmatpush1.msra.mxu0 0.0
  %1158 = vmatprep.subr.mxu0 0.0
  %1159 = vmatpush1.msra.mxu0 0.0
  %1160 = vmatprep.subr.mxu0 0.0
  %1161 = vmatpush1.msra.mxu0 0.0
  %1162 = vmatprep.subr.mxu0 0.0
  %1163 = vmatpush1.msra.mxu0 0.0
  %1164 = vmatprep.subr.mxu0 0.0
  %1165 = vmatpush1.msra.mxu0 0.0
  %1166 = vmatprep.subr.mxu0 0.0
  %1167 = vmatpush1.msra.mxu0 0.0
  %1168 = vmatprep.subr.mxu0 0.0
  %1169 = vmatpush1.msra.mxu0 0.0
  %1170 = vmatprep.subr.mxu0 0.0
  %1171 = vmatpush1.msra.mxu0 0.0
  %1172 = vmatprep.subr.mxu0 0.0
  %1173 = vmatpush1.msra.mxu0 0.0
  %1174 = vmatprep.subr.mxu0 0.0
  %1175 = vmatpush1.msra.mxu0 0.0
  %1176 = vmatprep.subr.mxu0 0.0
  %1177 = vmatpush1.msra.mxu0 0.0
  %1178 = vmatprep.subr.mxu0 0.0
  %1179 = vmatpush1.msra.mxu0 0.0
  %1180 = vmatprep.subr.mxu0 0.0
  %1181 = vmatpush1.msra.mxu0 0.0
  %1182 = vmatprep.subr.mxu0 0.0
  %1183 = vmatpush1.msra.mxu0 0.0
  %1184 = vmatprep.mubr.f32.mxu0 0.0
  %1185 = vmatmul.mubr.f32.gmra.mrb[0].mxu0 %v747
  %v1186 = vpop.f32.mrb[0].mxu0
  %v1187 = vadd.f32 %v1118, %v1186
  %v1188 = vpop.f32.mrb[0].mxu0
  %1189 = vdwg.mxu0
  %1190 = vmatprep.subr.mxu0 0.0
  %1191 = vmatpush1.msra.mxu0 %v364
  %1192 = vmatprep.subr.mxu0 0.0
  %1193 = vmatpush1.msra.mxu0 %v365
  %1194 = vmatprep.subr.mxu0 0.0
  %1195 = vmatpush1.msra.mxu0 %v366
  %1196 = vmatprep.subr.mxu0 0.0
  %1197 = vmatpush1.msra.mxu0 %v367
  %1198 = vmatprep.subr.mxu0 0.0
  %1199 = vmatpush1.msra.mxu0 0.0
  %1200 = vmatprep.subr.mxu0 0.0
  %1201 = vmatpush1.msra.mxu0 0.0
  %1202 = vmatprep.subr.mxu0 0.0
  %1203 = vmatpush1.msra.mxu0 0.0
  %1204 = vmatprep.subr.mxu0 0.0
  %1205 = vmatpush1.msra.mxu0 0.0
  %1206 = vmatprep.subr.mxu0 0.0
  %1207 = vmatpush1.msra.mxu0 0.0
  %1208 = vmatprep.subr.mxu0 0.0
  %1209 = vmatpush1.msra.mxu0 0.0
  %1210 = vmatprep.subr.mxu0 0.0
  %1211 = vmatpush1.msra.mxu0 0.0
  %1212 = vmatprep.subr.mxu0 0.0
  %1213 = vmatpush1.msra.mxu0 0.0
  %1214 = vmatprep.subr.mxu0 0.0
  %1215 = vmatpush1.msra.mxu0 0.0
  %1216 = vmatprep.subr.mxu0 0.0
  %1217 = vmatpush1.msra.mxu0 0.0
  %1218 = vmatprep.subr.mxu0 0.0
  %1219 = vmatpush1.msra.mxu0 0.0
  %1220 = vmatprep.subr.mxu0 0.0
  %1221 = vmatpush1.msra.mxu0 0.0
  %1222 = vmatprep.subr.mxu0 0.0
  %1223 = vmatpush1.msra.mxu0 0.0
  %1224 = vmatprep.subr.mxu0 0.0
  %1225 = vmatpush1.msra.mxu0 0.0
  %1226 = vmatprep.subr.mxu0 0.0
  %1227 = vmatpush1.msra.mxu0 0.0
  %1228 = vmatprep.subr.mxu0 0.0
  %1229 = vmatpush1.msra.mxu0 0.0
  %1230 = vmatprep.subr.mxu0 0.0
  %1231 = vmatpush1.msra.mxu0 0.0
  %1232 = vmatprep.subr.mxu0 0.0
  %1233 = vmatpush1.msra.mxu0 0.0
  %1234 = vmatprep.subr.mxu0 0.0
  %1235 = vmatpush1.msra.mxu0 0.0
  %1236 = vmatprep.subr.mxu0 0.0
  %1237 = vmatpush1.msra.mxu0 0.0
  %1238 = vmatprep.subr.mxu0 0.0
  %1239 = vmatpush1.msra.mxu0 0.0
  %1240 = vmatprep.subr.mxu0 0.0
  %1241 = vmatpush1.msra.mxu0 0.0
  %1242 = vmatprep.subr.mxu0 0.0
  %1243 = vmatpush1.msra.mxu0 0.0
  %1244 = vmatprep.subr.mxu0 0.0
  %1245 = vmatpush1.msra.mxu0 0.0
  %1246 = vmatprep.subr.mxu0 0.0
  %1247 = vmatpush1.msra.mxu0 0.0
  %1248 = vmatprep.subr.mxu0 0.0
  %1249 = vmatpush1.msra.mxu0 0.0
  %1250 = vmatprep.subr.mxu0 0.0
  %1251 = vmatpush1.msra.mxu0 0.0
  %1252 = vmatprep.subr.mxu0 0.0
  %1253 = vmatpush1.msra.mxu0 0.0
  %1254 = vmatprep.mubr.f32.mxu0 0.0
  %1255 = vmatmul.mubr.f32.gmra.mrb[0].mxu0 %v180
  %v1256 = vpop.f32.mrb[0].mxu0
  %v1257 = vadd.f32 0.0, %v1256
  %v1258 = vpop.f32.mrb[0].mxu0
  %1259 = vdwg.mxu0
  %v1260 = vadd.f32 %v1187, %v1257
  %v1262 = vlaneseq
  %v1263 = vshrl.u32 %v1262, 7
  %v1264 = vsub.s32 0, %v1263
  %v1265 = vrot.slane %v368, %v1264
  %v1267 = vadd.f32 %v1260, %v1265
  %v1268 = vxor.u32 %v1267, 2147483648
  %v1269 = vmul.f32 %v1268, 1.442695
  %v1270 = vpow.pop %v1269
  %v1271 = vadd.f32 %v1270, 1.0
  %v1272 = vrcp.pop %v1271
  %v1273 = vmul.f32 1.0, %v1272
  %v1274 = vtanh.pop %v1267
  %v1275 = vmul.f32 %v1273, %v386
  %1277 = vrot.lane.b32.xlu0 %v1274, 64
  %v1278 = vpop.permute.xlu0 %1277
  %v1280 = vmul.f32 %v1273, %v1278
  %1282 = vrot.lane.b32.xlu0 %v1280, 96
  %v1283 = vpop.permute.xlu0 %1282
  %v1285 = vadd.f32 %v1275, %v1283
  %v1286 = vtanh.pop %v1285
  %1288 = vrot.lane.b32.xlu0 %v1273, 64
  %v1289 = vpop.permute.xlu0 %1288
  %v1291 = vmul.f32 %v1286, %v1289
  %1292 = vmatprep.subr.mxu0 0.0
  %1293 = vmatpush1.msra.mxu0 %v359
  %1294 = vmatprep.subr.mxu0 0.0
  %1295 = vmatpush1.msra.mxu0 %v360
  %1296 = vmatprep.subr.mxu0 0.0
  %1297 = vmatpush1.msra.mxu0 %v361
  %1298 = vmatprep.subr.mxu0 0.0
  %1299 = vmatpush1.msra.mxu0 %v362
  %1300 = vmatprep.subr.mxu0 0.0
  %1301 = vmatpush1.msra.mxu0 0.0
  %1302 = vmatprep.subr.mxu0 0.0
  %1303 = vmatpush1.msra.mxu0 0.0
  %1304 = vmatprep.subr.mxu0 0.0
  %1305 = vmatpush1.msra.mxu0 0.0
  %1306 = vmatprep.subr.mxu0 0.0
  %1307 = vmatpush1.msra.mxu0 0.0
  %1308 = vmatprep.subr.mxu0 0.0
  %1309 = vmatpush1.msra.mxu0 0.0
  %1310 = vmatprep.subr.mxu0 0.0
  %1311 = vmatpush1.msra.mxu0 0.0
  %1312 = vmatprep.subr.mxu0 0.0
  %1313 = vmatpush1.msra.mxu0 0.0
  %1314 = vmatprep.subr.mxu0 0.0
  %1315 = vmatpush1.msra.mxu0 0.0
  %1316 = vmatprep.subr.mxu0 0.0
  %1317 = vmatpush1.msra.mxu0 0.0
  %1318 = vmatprep.subr.mxu0 0.0
  %1319 = vmatpush1.msra.mxu0 0.0
  %1320 = vmatprep.subr.mxu0 0.0
  %1321 = vmatpush1.msra.mxu0 0.0
  %1322 = vmatprep.subr.mxu0 0.0
  %1323 = vmatpush1.msra.mxu0 0.0
  %1324 = vmatprep.subr.mxu0 0.0
  %1325 = vmatpush1.msra.mxu0 0.0
  %1326 = vmatprep.subr.mxu0 0.0
  %1327 = vmatpush1.msra.mxu0 0.0
  %1328 = vmatprep.subr.mxu0 0.0
  %1329 = vmatpush1.msra.mxu0 0.0
  %1330 = vmatprep.subr.mxu0 0.0
  %1331 = vmatpush1.msra.mxu0 0.0
  %1332 = vmatprep.subr.mxu0 0.0
  %1333 = vmatpush1.msra.mxu0 0.0
  %1334 = vmatprep.subr.mxu0 0.0
  %1335 = vmatpush1.msra.mxu0 0.0
  %1336 = vmatprep.subr.mxu0 0.0
  %1337 = vmatpush1.msra.mxu0 0.0
  %1338 = vmatprep.subr.mxu0 0.0
  %1339 = vmatpush1.msra.mxu0 0.0
  %1340 = vmatprep.subr.mxu0 0.0
  %1341 = vmatpush1.msra.mxu0 0.0
  %1342 = vmatprep.subr.mxu0 0.0
  %1343 = vmatpush1.msra.mxu0 0.0
  %1344 = vmatprep.subr.mxu0 0.0
  %1345 = vmatpush1.msra.mxu0 0.0
  %1346 = vmatprep.subr.mxu0 0.0
  %1347 = vmatpush1.msra.mxu0 0.0
  %1348 = vmatprep.subr.mxu0 0.0
  %1349 = vmatpush1.msra.mxu0 0.0
  %1350 = vmatprep.subr.mxu0 0.0
  %1351 = vmatpush1.msra.mxu0 0.0
  %1352 = vmatprep.subr.mxu0 0.0
  %1353 = vmatpush1.msra.mxu0 0.0
  %1354 = vmatprep.subr.mxu0 0.0
  %1355 = vmatpush1.msra.mxu0 0.0
  %1356 = vmatprep.mubr.f32.mxu0 0.0
  %1357 = vmatmul.mubr.f32.gmra.mrb[0].mxu0 %v931
  %v1358 = vpop.f32.mrb[0].mxu0
  %v1359 = vadd.f32 %v1118, %v1358
  %v1360 = vpop.f32.mrb[0].mxu0
  %1361 = vdwg.mxu0
  %v1363 = vsel %vm178, %v1291, 0
  %1365 = vmatprep.subr.mxu0 0.0
  %1366 = vmatpush1.msra.mxu0 %v364
  %1367 = vmatprep.subr.mxu0 0.0
  %1368 = vmatpush1.msra.mxu0 %v365
  %1369 = vmatprep.subr.mxu0 0.0
  %1370 = vmatpush1.msra.mxu0 %v366
  %1371 = vmatprep.subr.mxu0 0.0
  %1372 = vmatpush1.msra.mxu0 %v367
  %1373 = vmatprep.subr.mxu0 0.0
  %1374 = vmatpush1.msra.mxu0 0.0
  %1375 = vmatprep.subr.mxu0 0.0
  %1376 = vmatpush1.msra.mxu0 0.0
  %1377 = vmatprep.subr.mxu0 0.0
  %1378 = vmatpush1.msra.mxu0 0.0
  %1379 = vmatprep.subr.mxu0 0.0
  %1380 = vmatpush1.msra.mxu0 0.0
  %1381 = vmatprep.subr.mxu0 0.0
  %1382 = vmatpush1.msra.mxu0 0.0
  %1383 = vmatprep.subr.mxu0 0.0
  %1384 = vmatpush1.msra.mxu0 0.0
  %1385 = vmatprep.subr.mxu0 0.0
  %1386 = vmatpush1.msra.mxu0 0.0
  %1387 = vmatprep.subr.mxu0 0.0
  %1388 = vmatpush1.msra.mxu0 0.0
  %1389 = vmatprep.subr.mxu0 0.0
  %1390 = vmatpush1.msra.mxu0 0.0
  %1391 = vmatprep.subr.mxu0 0.0
  %1392 = vmatpush1.msra.mxu0 0.0
  %1393 = vmatprep.subr.mxu0 0.0
  %1394 = vmatpush1.msra.mxu0 0.0
  %1395 = vmatprep.subr.mxu0 0.0
  %1396 = vmatpush1.msra.mxu0 0.0
  %1397 = vmatprep.subr.mxu0 0.0
  %1398 = vmatpush1.msra.mxu0 0.0
  %1399 = vmatprep.subr.mxu0 0.0
  %1400 = vmatpush1.msra.mxu0 0.0
  %1401 = vmatprep.subr.mxu0 0.0
  %1402 = vmatpush1.msra.mxu0 0.0
  %1403 = vmatprep.subr.mxu0 0.0
  %1404 = vmatpush1.msra.mxu0 0.0
  %1405 = vmatprep.subr.mxu0 0.0
  %1406 = vmatpush1.msra.mxu0 0.0
  %1407 = vmatprep.subr.mxu0 0.0
  %1408 = vmatpush1.msra.mxu0 0.0
  %1409 = vmatprep.subr.mxu0 0.0
  %1410 = vmatpush1.msra.mxu0 0.0
  %1411 = vmatprep.subr.mxu0 0.0
  %1412 = vmatpush1.msra.mxu0 0.0
  %1413 = vmatprep.subr.mxu0 0.0
  %1414 = vmatpush1.msra.mxu0 0.0
  %1415 = vmatprep.subr.mxu0 0.0
  %1416 = vmatpush1.msra.mxu0 0.0
  %1417 = vmatprep.subr.mxu0 0.0
  %1418 = vmatpush1.msra.mxu0 0.0
  %1419 = vmatprep.subr.mxu0 0.0
  %1420 = vmatpush1.msra.mxu0 0.0
  %1421 = vmatprep.subr.mxu0 0.0
  %1422 = vmatpush1.msra.mxu0 0.0
  %1423 = vmatprep.subr.mxu0 0.0
  %1424 = vmatpush1.msra.mxu0 0.0
  %1425 = vmatprep.subr.mxu0 0.0
  %1426 = vmatpush1.msra.mxu0 0.0
  %1427 = vmatprep.subr.mxu0 0.0
  %1428 = vmatpush1.msra.mxu0 0.0
  %1429 = vmatprep.mubr.f32.mxu0 0.0
  %1430 = vmatmul.mubr.f32.gmra.mrb[0].mxu0 %v1363
  %v1431 = vpop.f32.mrb[0].mxu0
  %v1432 = vadd.f32 0.0, %v1431
  %v1433 = vpop.f32.mrb[0].mxu0
  %1434 = vdwg.mxu0
  %v1435 = vadd.f32 %v1359, %v1432
  %v1436 = vadd.f32 %v1435, %v1265
  %v1437 = vxor.u32 %v1436, 2147483648
  %v1438 = vmul.f32 %v1437, 1.442695
  %v1439 = vpow.pop %v1438
  %v1440 = vadd.f32 %v1439, 1.0
  %v1441 = vrcp.pop %v1440
  %v1442 = vmul.f32 1.0, %v1441
  %v1443 = vtanh.pop %v1436
  %v1444 = vmul.f32 %v1442, %v1285
  %1446 = vrot.lane.b32.xlu0 %v1443, 64
  %v1447 = vpop.permute.xlu0 %1446
  %v1449 = vmul.f32 %v1442, %v1447
  %1451 = vrot.lane.b32.xlu0 %v1449, 96
  %v1452 = vpop.permute.xlu0 %1451
  %v1454 = vadd.f32 %v1444, %v1452
  %v1455 = vtanh.pop %v1454
  %1457 = vrot.lane.b32.xlu0 %v1442, 64
  %v1458 = vpop.permute.xlu0 %1457
  %v1460 = vmul.f32 %v1455, %v1458
  %v1462 = vsel %vm178, %v1113, 0
  %1464 = vmatprep.subr.mxu0 0.0
  %1465 = vmatpush1.msra.mxu0 %v359
  %1466 = vmatprep.subr.mxu0 0.0
  %1467 = vmatpush1.msra.mxu0 %v360
  %1468 = vmatprep.subr.mxu0 0.0
  %1469 = vmatpush1.msra.mxu0 %v361
  %1470 = vmatprep.subr.mxu0 0.0
  %1471 = vmatpush1.msra.mxu0 %v362
  %1472 = vmatprep.subr.mxu0 0.0
  %1473 = vmatpush1.msra.mxu0 0.0
  %1474 = vmatprep.subr.mxu0 0.0
  %1475 = vmatpush1.msra.mxu0 0.0
  %1476 = vmatprep.subr.mxu0 0.0
  %1477 = vmatpush1.msra.mxu0 0.0
  %1478 = vmatprep.subr.mxu0 0.0
  %1479 = vmatpush1.msra.mxu0 0.0
  %1480 = vmatprep.subr.mxu0 0.0
  %1481 = vmatpush1.msra.mxu0 0.0
  %1482 = vmatprep.subr.mxu0 0.0
  %1483 = vmatpush1.msra.mxu0 0.0
  %1484 = vmatprep.subr.mxu0 0.0
  %1485 = vmatpush1.msra.mxu0 0.0
  %1486 = vmatprep.subr.mxu0 0.0
  %1487 = vmatpush1.msra.mxu0 0.0
  %1488 = vmatprep.subr.mxu0 0.0
  %1489 = vmatpush1.msra.mxu0 0.0
  %1490 = vmatprep.subr.mxu0 0.0
  %1491 = vmatpush1.msra.mxu0 0.0
  %1492 = vmatprep.subr.mxu0 0.0
  %1493 = vmatpush1.msra.mxu0 0.0
  %1494 = vmatprep.subr.mxu0 0.0
  %1495 = vmatpush1.msra.mxu0 0.0
  %1496 = vmatprep.subr.mxu0 0.0
  %1497 = vmatpush1.msra.mxu0 0.0
  %1498 = vmatprep.subr.mxu0 0.0
  %1499 = vmatpush1.msra.mxu0 0.0
  %1500 = vmatprep.subr.mxu0 0.0
  %1501 = vmatpush1.msra.mxu0 0.0
  %1502 = vmatprep.subr.mxu0 0.0
  %1503 = vmatpush1.msra.mxu0 0.0
  %1504 = vmatprep.subr.mxu0 0.0
  %1505 = vmatpush1.msra.mxu0 0.0
  %1506 = vmatprep.subr.mxu0 0.0
  %1507 = vmatpush1.msra.mxu0 0.0
  %1508 = vmatprep.subr.mxu0 0.0
  %1509 = vmatpush1.msra.mxu0 0.0
  %1510 = vmatprep.subr.mxu0 0.0
  %1511 = vmatpush1.msra.mxu0 0.0
  %1512 = vmatprep.subr.mxu0 0.0
  %1513 = vmatpush1.msra.mxu0 0.0
  %1514 = vmatprep.subr.mxu0 0.0
  %1515 = vmatpush1.msra.mxu0 0.0
  %1516 = vmatprep.subr.mxu0 0.0
  %1517 = vmatpush1.msra.mxu0 0.0
  %1518 = vmatprep.subr.mxu0 0.0
  %1519 = vmatpush1.msra.mxu0 0.0
  %1520 = vmatprep.subr.mxu0 0.0
  %1521 = vmatpush1.msra.mxu0 0.0
  %1522 = vmatprep.subr.mxu0 0.0
  %1523 = vmatpush1.msra.mxu0 0.0
  %1524 = vmatprep.subr.mxu0 0.0
  %1525 = vmatpush1.msra.mxu0 0.0
  %1526 = vmatprep.subr.mxu0 0.0
  %1527 = vmatpush1.msra.mxu0 0.0
  %1528 = vmatprep.mubr.f32.mxu0 0.0
  %1529 = vmatmul.mubr.f32.gmra.mrb[0].mxu0 %v1462
  %v1530 = vpop.f32.mrb[0].mxu0
  %v1531 = vadd.f32 %v1118, %v1530
  %v1532 = vpop.f32.mrb[0].mxu0
  %1533 = vdwg.mxu0
  %v1535 = vsel %vm178, %v1460, 0
  %1537 = vmatprep.subr.mxu0 0.0
  %1538 = vmatpush1.msra.mxu0 %v364
  %1539 = vmatprep.subr.mxu0 0.0
  %1540 = vmatpush1.msra.mxu0 %v365
  %1541 = vmatprep.subr.mxu0 0.0
  %1542 = vmatpush1.msra.mxu0 %v366
  %1543 = vmatprep.subr.mxu0 0.0
  %1544 = vmatpush1.msra.mxu0 %v367
  %1545 = vmatprep.subr.mxu0 0.0
  %1546 = vmatpush1.msra.mxu0 0.0
  %1547 = vmatprep.subr.mxu0 0.0
  %1548 = vmatpush1.msra.mxu0 0.0
  %1549 = vmatprep.subr.mxu0 0.0
  %1550 = vmatpush1.msra.mxu0 0.0
  %1551 = vmatprep.subr.mxu0 0.0
  %1552 = vmatpush1.msra.mxu0 0.0
  %1553 = vmatprep.subr.mxu0 0.0
  %1554 = vmatpush1.msra.mxu0 0.0
  %1555 = vmatprep.subr.mxu0 0.0
  %1556 = vmatpush1.msra.mxu0 0.0
  %1557 = vmatprep.subr.mxu0 0.0
  %1558 = vmatpush1.msra.mxu0 0.0
  %1559 = vmatprep.subr.mxu0 0.0
  %1560 = vmatpush1.msra.mxu0 0.0
  %1561 = vmatprep.subr.mxu0 0.0
  %1562 = vmatpush1.msra.mxu0 0.0
  %1563 = vmatprep.subr.mxu0 0.0
  %1564 = vmatpush1.msra.mxu0 0.0
  %1565 = vmatprep.subr.mxu0 0.0
  %1566 = vmatpush1.msra.mxu0 0.0
  %1567 = vmatprep.subr.mxu0 0.0
  %1568 = vmatpush1.msra.mxu0 0.0
  %1569 = vmatprep.subr.mxu0 0.0
  %1570 = vmatpush1.msra.mxu0 0.0
  %1571 = vmatprep.subr.mxu0 0.0
  %1572 = vmatpush1.msra.mxu0 0.0
  %1573 = vmatprep.subr.mxu0 0.0
  %1574 = vmatpush1.msra.mxu0 0.0
  %1575 = vmatprep.subr.mxu0 0.0
  %1576 = vmatpush1.msra.mxu0 0.0
  %1577 = vmatprep.subr.mxu0 0.0
  %1578 = vmatpush1.msra.mxu0 0.0
  %1579 = vmatprep.subr.mxu0 0.0
  %1580 = vmatpush1.msra.mxu0 0.0
  %1581 = vmatprep.subr.mxu0 0.0
  %1582 = vmatpush1.msra.mxu0 0.0
  %1583 = vmatprep.subr.mxu0 0.0
  %1584 = vmatpush1.msra.mxu0 0.0
  %1585 = vmatprep.subr.mxu0 0.0
  %1586 = vmatpush1.msra.mxu0 0.0
  %1587 = vmatprep.subr.mxu0 0.0
  %1588 = vmatpush1.msra.mxu0 0.0
  %1589 = vmatprep.subr.mxu0 0.0
  %1590 = vmatpush1.msra.mxu0 0.0
  %1591 = vmatprep.subr.mxu0 0.0
  %1592 = vmatpush1.msra.mxu0 0.0
  %1593 = vmatprep.subr.mxu0 0.0
  %1594 = vmatpush1.msra.mxu0 0.0
  %1595 = vmatprep.subr.mxu0 0.0
  %1596 = vmatpush1.msra.mxu0 0.0
  %1597 = vmatprep.subr.mxu0 0.0
  %1598 = vmatpush1.msra.mxu0 0.0
  %1599 = vmatprep.subr.mxu0 0.0
  %1600 = vmatpush1.msra.mxu0 0.0
  %1601 = vmatprep.mubr.f32.mxu0 0.0
  %1602 = vmatmul.mubr.f32.gmra.mrb[0].mxu0 %v1535
  %v1603 = vpop.f32.mrb[0].mxu0
  %v1604 = vadd.f32 0.0, %v1603
  %v1605 = vpop.f32.mrb[0].mxu0
  %1606 = vdwg.mxu0
  %v1607 = vadd.f32 %v1531, %v1604
  %v1608 = vadd.f32 %v1607, %v1265
  %v1609 = vxor.u32 %v1608, 2147483648
  %v1610 = vmul.f32 %v1609, 1.442695
  %v1611 = vpow.pop %v1610
  %v1612 = vadd.f32 %v1611, 1.0
  %v1613 = vrcp.pop %v1612
  %v1614 = vmul.f32 1.0, %v1613
  %v1615 = vtanh.pop %v1608
  %v1616 = vmul.f32 %v1614, %v1454
  %1618 = vrot.lane.b32.xlu0 %v1615, 64
  %v1619 = vpop.permute.xlu0 %1618
  %v1621 = vmul.f32 %v1614, %v1619
  %1623 = vrot.lane.b32.xlu0 %v1621, 96
  %v1624 = vpop.permute.xlu0 %1623
  %v1626 = vadd.f32 %v1616, %v1624
  %v1627 = vtanh.pop %v1626
  %1629 = vrot.lane.b32.xlu0 %v1614, 64
  %v1630 = vpop.permute.xlu0 %1629
  %v1632 = vmul.f32 %v1627, %v1630
  %1633 = vrot.lane.b32.xlu0 %v1460, 32
  %v1634 = vpop.permute.xlu0 %1633
  %1637 = vrot.lane.b32.xlu0 %v1632, 64
  %v1638 = vpop.permute.xlu0 %1637
  %v1640 = vsel %vm178, %v1291, %v1634
  %vm1641 = vcmask 523264
  %v1642 = vsel %vm1641, %v1640, %v1638
  %v1644 = vlaneseq
  %v1645 = vshrl.u32 %v1644, 7
  %v1646 = vsub.s32 0, %v1645
  %v1647 = vrot.slane %v381, %v1646
  %vm1649 = vcmask 785408
  %v1651 = vsel %vm1649, %v1642, 0
  %1653 = vmatprep.subr.mxu0 0.0
  %1654 = vmatpush1.msra.mxu0 %v369
  %1655 = vmatprep.subr.mxu0 0.0
  %1656 = vmatpush1.msra.mxu0 %v370
  %1657 = vmatprep.subr.mxu0 0.0
  %1658 = vmatpush1.msra.mxu0 %v371
  %1659 = vmatprep.subr.mxu0 0.0
  %1660 = vmatpush1.msra.mxu0 %v372
  %1661 = vmatprep.subr.mxu0 0.0
  %1662 = vmatpush1.msra.mxu0 %v373
  %1663 = vmatprep.subr.mxu0 0.0
  %1664 = vmatpush1.msra.mxu0 %v374
  %1665 = vmatprep.subr.mxu0 0.0
  %1666 = vmatpush1.msra.mxu0 %v375
  %1667 = vmatprep.subr.mxu0 0.0
  %1668 = vmatpush1.msra.mxu0 %v376
  %1669 = vmatprep.subr.mxu0 0.0
  %1670 = vmatpush1.msra.mxu0 %v377
  %1671 = vmatprep.subr.mxu0 0.0
  %1672 = vmatpush1.msra.mxu0 %v378
  %1673 = vmatprep.subr.mxu0 0.0
  %1674 = vmatpush1.msra.mxu0 %v379
  %1675 = vmatprep.subr.mxu0 0.0
  %1676 = vmatpush1.msra.mxu0 %v380
  %1677 = vmatprep.subr.mxu0 0.0
  %1678 = vmatpush1.msra.mxu0 0.0
  %1679 = vmatprep.subr.mxu0 0.0
  %1680 = vmatpush1.msra.mxu0 0.0
  %1681 = vmatprep.subr.mxu0 0.0
  %1682 = vmatpush1.msra.mxu0 0.0
  %1683 = vmatprep.subr.mxu0 0.0
  %1684 = vmatpush1.msra.mxu0 0.0
  %1685 = vmatprep.subr.mxu0 0.0
  %1686 = vmatpush1.msra.mxu0 0.0
  %1687 = vmatprep.subr.mxu0 0.0
  %1688 = vmatpush1.msra.mxu0 0.0
  %1689 = vmatprep.subr.mxu0 0.0
  %1690 = vmatpush1.msra.mxu0 0.0
  %1691 = vmatprep.subr.mxu0 0.0
  %1692 = vmatpush1.msra.mxu0 0.0
  %1693 = vmatprep.subr.mxu0 0.0
  %1694 = vmatpush1.msra.mxu0 0.0
  %1695 = vmatprep.subr.mxu0 0.0
  %1696 = vmatpush1.msra.mxu0 0.0
  %1697 = vmatprep.subr.mxu0 0.0
  %1698 = vmatpush1.msra.mxu0 0.0
  %1699 = vmatprep.subr.mxu0 0.0
  %1700 = vmatpush1.msra.mxu0 0.0
  %1701 = vmatprep.subr.mxu0 0.0
  %1702 = vmatpush1.msra.mxu0 0.0
  %1703 = vmatprep.subr.mxu0 0.0
  %1704 = vmatpush1.msra.mxu0 0.0
  %1705 = vmatprep.subr.mxu0 0.0
  %1706 = vmatpush1.msra.mxu0 0.0
  %1707 = vmatprep.subr.mxu0 0.0
  %1708 = vmatpush1.msra.mxu0 0.0
  %1709 = vmatprep.subr.mxu0 0.0
  %1710 = vmatpush1.msra.mxu0 0.0
  %1711 = vmatprep.subr.mxu0 0.0
  %1712 = vmatpush1.msra.mxu0 0.0
  %1713 = vmatprep.subr.mxu0 0.0
  %1714 = vmatpush1.msra.mxu0 0.0
  %1715 = vmatprep.subr.mxu0 0.0
  %1716 = vmatpush1.msra.mxu0 0.0
  %1717 = vmatprep.mubr.f32.mxu0 0.0
  %1718 = vmatmul.mubr.f32.gmra.mrb[0].mxu0 %v1651
  %v1719 = vpop.f32.mrb[0].mxu0
  %v1720 = vadd.f32 %v1647, %v1719
  %v1721 = vpop.f32.mrb[0].mxu0
  %1722 = vdwg.mxu0
  %v1723 = vmax.f32 %v1720, 0.0
  %v1725 = vlaneseq
  %v1726 = vshrl.u32 %v1725, 7
  %v1727 = vsub.s32 0, %v1726
  %v1728 = vrot.slane %v385, %v1727
  %v1731 = vsel %vm263, %v1723, 0
  %1733 = vmatprep.subr.mxu0 0.0
  %1734 = vmatpush1.msra.mxu0 %v382
  %1735 = vmatprep.subr.mxu0 0.0
  %1736 = vmatpush1.msra.mxu0 %v383
  %1737 = vmatprep.subr.mxu0 0.0
  %1738 = vmatpush1.msra.mxu0 %v384
  %1739 = vmatprep.subr.mxu0 0.0
  %1740 = vmatpush1.msra.mxu0 0.0
  %1741 = vmatprep.subr.mxu0 0.0
  %1742 = vmatpush1.msra.mxu0 0.0
  %1743 = vmatprep.subr.mxu0 0.0
  %1744 = vmatpush1.msra.mxu0 0.0
  %1745 = vmatprep.subr.mxu0 0.0
  %1746 = vmatpush1.msra.mxu0 0.0
  %1747 = vmatprep.subr.mxu0 0.0
  %1748 = vmatpush1.msra.mxu0 0.0
  %1749 = vmatprep.subr.mxu0 0.0
  %1750 = vmatpush1.msra.mxu0 0.0
  %1751 = vmatprep.subr.mxu0 0.0
  %1752 = vmatpush1.msra.mxu0 0.0
  %1753 = vmatprep.subr.mxu0 0.0
  %1754 = vmatpush1.msra.mxu0 0.0
  %1755 = vmatprep.subr.mxu0 0.0
  %1756 = vmatpush1.msra.mxu0 0.0
  %1757 = vmatprep.subr.mxu0 0.0
  %1758 = vmatpush1.msra.mxu0 0.0
  %1759 = vmatprep.subr.mxu0 0.0
  %1760 = vmatpush1.msra.mxu0 0.0
  %1761 = vmatprep.subr.mxu0 0.0
  %1762 = vmatpush1.msra.mxu0 0.0
  %1763 = vmatprep.subr.mxu0 0.0
  %1764 = vmatpush1.msra.mxu0 0.0
  %1765 = vmatprep.subr.mxu0 0.0
  %1766 = vmatpush1.msra.mxu0 0.0
  %1767 = vmatprep.subr.mxu0 0.0
  %1768 = vmatpush1.msra.mxu0 0.0
  %1769 = vmatprep.subr.mxu0 0.0
  %1770 = vmatpush1.msra.mxu0 0.0
  %1771 = vmatprep.subr.mxu0 0.0
  %1772 = vmatpush1.msra.mxu0 0.0
  %1773 = vmatprep.subr.mxu0 0.0
  %1774 = vmatpush1.msra.mxu0 0.0
  %1775 = vmatprep.subr.mxu0 0.0
  %1776 = vmatpush1.msra.mxu0 0.0
  %1777 = vmatprep.subr.mxu0 0.0
  %1778 = vmatpush1.msra.mxu0 0.0
  %1779 = vmatprep.subr.mxu0 0.0
  %1780 = vmatpush1.msra.mxu0 0.0
  %1781 = vmatprep.subr.mxu0 0.0
  %1782 = vmatpush1.msra.mxu0 0.0
  %1783 = vmatprep.subr.mxu0 0.0
  %1784 = vmatpush1.msra.mxu0 0.0
  %1785 = vmatprep.subr.mxu0 0.0
  %1786 = vmatpush1.msra.mxu0 0.0
  %1787 = vmatprep.subr.mxu0 0.0
  %1788 = vmatpush1.msra.mxu0 0.0
  %1789 = vmatprep.subr.mxu0 0.0
  %1790 = vmatpush1.msra.mxu0 0.0
  %1791 = vmatprep.subr.mxu0 0.0
  %1792 = vmatpush1.msra.mxu0 0.0
  %1793 = vmatprep.subr.mxu0 0.0
  %1794 = vmatpush1.msra.mxu0 0.0
  %1795 = vmatprep.subr.mxu0 0.0
  %1796 = vmatpush1.msra.mxu0 0.0
  %1797 = vmatprep.mubr.f32.mxu0 0.0
  %1798 = vmatmul.mubr.f32.gmra.mrb[0].mxu0 %v1731
  %v1799 = vpop.f32.mrb[0].mxu0
  %v1800 = vadd.f32 %v1728, %v1799
  %v1801 = vpop.f32.mrb[0].mxu0
  %1802 = vdwg.mxu0
  %v1803 = vxor.u32 %v1800, 2147483648
  %v1804 = vmul.f32 %v1803, 1.442695
  %v1805 = vpow.pop %v1804
  %v1806 = vadd.f32 %v1805, 1.0
  %v1807 = vrcp.pop %v1806
  %v1808 = vmul.f32 1.0, %v1807
  %vm1809 = vcmask 123904
  %v1810 = vsel %vm1809, %v1808, -inf
  %1811 = vmax.xlane.f32.xlu0 %v1810
  %v1812 = vpop.xlane.xlu0 %1811
  %v1813 = vsub.f32 %v1808, %v1812
  %v1814 = vmul.f32 %v1813, 1.442695
  %v1815 = vpow.pop %v1814
  %v1816 = vsel %vm1809, %v1815, 0.0
  %1817 = vadd.xlane.f32.xlu0 %v1816
  %v1818 = vpop.xlane.xlu0 %1817
  %v1819 = vrcp.pop %v1818
  %v1820 = vmul.f32 %v1815, %v1819
  %1822 = vrot.lane.b32.xlu0 %v554, 16
  %v1823 = vpop.permute.xlu0 %1822
  %v1825 = vsel %vm93, %v1820, %v1823
  %v1826 = vsel %vm178, %v554, 0
  %1828 = vmatprep.subr.mxu0 0.0
  %1829 = vmatpush1.msra.mxu0 %v343
  %1830 = vmatprep.subr.mxu0 0.0
  %1831 = vmatpush1.msra.mxu0 %v344
  %1832 = vmatprep.subr.mxu0 0.0
  %1833 = vmatpush1.msra.mxu0 %v345
  %1834 = vmatprep.subr.mxu0 0.0
  %1835 = vmatpush1.msra.mxu0 %v346
  %1836 = vmatprep.subr.mxu0 0.0
  %1837 = vmatpush1.msra.mxu0 0.0
  %1838 = vmatprep.subr.mxu0 0.0
  %1839 = vmatpush1.msra.mxu0 0.0
  %1840 = vmatprep.subr.mxu0 0.0
  %1841 = vmatpush1.msra.mxu0 0.0
  %1842 = vmatprep.subr.mxu0 0.0
  %1843 = vmatpush1.msra.mxu0 0.0
  %1844 = vmatprep.subr.mxu0 0.0
  %1845 = vmatpush1.msra.mxu0 0.0
  %1846 = vmatprep.subr.mxu0 0.0
  %1847 = vmatpush1.msra.mxu0 0.0
  %1848 = vmatprep.subr.mxu0 0.0
  %1849 = vmatpush1.msra.mxu0 0.0
  %1850 = vmatprep.subr.mxu0 0.0
  %1851 = vmatpush1.msra.mxu0 0.0
  %1852 = vmatprep.subr.mxu0 0.0
  %1853 = vmatpush1.msra.mxu0 0.0
  %1854 = vmatprep.subr.mxu0 0.0
  %1855 = vmatpush1.msra.mxu0 0.0
  %1856 = vmatprep.subr.mxu0 0.0
  %1857 = vmatpush1.msra.mxu0 0.0
  %1858 = vmatprep.subr.mxu0 0.0
  %1859 = vmatpush1.msra.mxu0 0.0
  %1860 = vmatprep.subr.mxu0 0.0
  %1861 = vmatpush1.msra.mxu0 0.0
  %1862 = vmatprep.subr.mxu0 0.0
  %1863 = vmatpush1.msra.mxu0 0.0
  %1864 = vmatprep.subr.mxu0 0.0
  %1865 = vmatpush1.msra.mxu0 0.0
  %1866 = vmatprep.subr.mxu0 0.0
  %1867 = vmatpush1.msra.mxu0 0.0
  %1868 = vmatprep.subr.mxu0 0.0
  %1869 = vmatpush1.msra.mxu0 0.0
  %1870 = vmatprep.subr.mxu0 0.0
  %1871 = vmatpush1.msra.mxu0 0.0
  %1872 = vmatprep.subr.mxu0 0.0
  %1873 = vmatpush1.msra.mxu0 0.0
  %1874 = vmatprep.subr.mxu0 0.0
  %1875 = vmatpush1.msra.mxu0 0.0
  %1876 = vmatprep.subr.mxu0 0.0
  %1877 = vmatpush1.msra.mxu0 0.0
  %1878 = vmatprep.subr.mxu0 0.0
  %1879 = vmatpush1.msra.mxu0 0.0
  %1880 = vmatprep.subr.mxu0 0.0
  %1881 = vmatpush1.msra.mxu0 0.0
  %1882 = vmatprep.subr.mxu0 0.0
  %1883 = vmatpush1.msra.mxu0 0.0
  %1884 = vmatprep.subr.mxu0 0.0
  %1885 = vmatpush1.msra.mxu0 0.0
  %1886 = vmatprep.subr.mxu0 0.0
  %1887 = vmatpush1.msra.mxu0 0.0
  %1888 = vmatprep.subr.mxu0 0.0
  %1889 = vmatpush1.msra.mxu0 0.0
  %1890 = vmatprep.subr.mxu0 0.0
  %1891 = vmatpush1.msra.mxu0 0.0
  %1892 = vmatprep.mubr.f32.mxu0 0.0
  %1893 = vmatmul.mubr.f32.gmra.mrb[0].mxu0 %v1826
  %v1894 = vpop.f32.mrb[0].mxu0
  %v1895 = vadd.f32 0.0, %v1894
  %v1896 = vpop.f32.mrb[0].mxu0
  %1897 = vdwg.mxu0
  %v1899 = vrot.slane %v1895, 6
  %v1901 = vadd.f32 %v164, %v1899
  %v1903 = vsel %vm93, %v1820, 0
  %1905 = vmatprep.subr.mxu0 0.0
  %1906 = vmatpush1.msra.mxu0 %v347
  %1907 = vmatprep.subr.mxu0 0.0
  %1908 = vmatpush1.msra.mxu0 %v348
  %1909 = vmatprep.subr.mxu0 0.0
  %1910 = vmatpush1.msra.mxu0 0.0
  %1911 = vmatprep.subr.mxu0 0.0
  %1912 = vmatpush1.msra.mxu0 0.0
  %1913 = vmatprep.subr.mxu0 0.0
  %1914 = vmatpush1.msra.mxu0 0.0
  %1915 = vmatprep.subr.mxu0 0.0
  %1916 = vmatpush1.msra.mxu0 0.0
  %1917 = vmatprep.subr.mxu0 0.0
  %1918 = vmatpush1.msra.mxu0 0.0
  %1919 = vmatprep.subr.mxu0 0.0
  %1920 = vmatpush1.msra.mxu0 0.0
  %1921 = vmatprep.subr.mxu0 0.0
  %1922 = vmatpush1.msra.mxu0 0.0
  %1923 = vmatprep.subr.mxu0 0.0
  %1924 = vmatpush1.msra.mxu0 0.0
  %1925 = vmatprep.subr.mxu0 0.0
  %1926 = vmatpush1.msra.mxu0 0.0
  %1927 = vmatprep.subr.mxu0 0.0
  %1928 = vmatpush1.msra.mxu0 0.0
  %1929 = vmatprep.subr.mxu0 0.0
  %1930 = vmatpush1.msra.mxu0 0.0
  %1931 = vmatprep.subr.mxu0 0.0
  %1932 = vmatpush1.msra.mxu0 0.0
  %1933 = vmatprep.subr.mxu0 0.0
  %1934 = vmatpush1.msra.mxu0 0.0
  %1935 = vmatprep.subr.mxu0 0.0
  %1936 = vmatpush1.msra.mxu0 0.0
  %1937 = vmatprep.subr.mxu0 0.0
  %1938 = vmatpush1.msra.mxu0 0.0
  %1939 = vmatprep.subr.mxu0 0.0
  %1940 = vmatpush1.msra.mxu0 0.0
  %1941 = vmatprep.subr.mxu0 0.0
  %1942 = vmatpush1.msra.mxu0 0.0
  %1943 = vmatprep.subr.mxu0 0.0
  %1944 = vmatpush1.msra.mxu0 0.0
  %1945 = vmatprep.subr.mxu0 0.0
  %1946 = vmatpush1.msra.mxu0 0.0
  %1947 = vmatprep.subr.mxu0 0.0
  %1948 = vmatpush1.msra.mxu0 0.0
  %1949 = vmatprep.subr.mxu0 0.0
  %1950 = vmatpush1.msra.mxu0 0.0
  %1951 = vmatprep.subr.mxu0 0.0
  %1952 = vmatpush1.msra.mxu0 0.0
  %1953 = vmatprep.subr.mxu0 0.0
  %1954 = vmatpush1.msra.mxu0 0.0
  %1955 = vmatprep.subr.mxu0 0.0
  %1956 = vmatpush1.msra.mxu0 0.0
  %1957 = vmatprep.subr.mxu0 0.0
  %1958 = vmatpush1.msra.mxu0 0.0
  %1959 = vmatprep.subr.mxu0 0.0
  %1960 = vmatpush1.msra.mxu0 0.0
  %1961 = vmatprep.subr.mxu0 0.0
  %1962 = vmatpush1.msra.mxu0 0.0
  %1963 = vmatprep.subr.mxu0 0.0
  %1964 = vmatpush1.msra.mxu0 0.0
  %1965 = vmatprep.subr.mxu0 0.0
  %1966 = vmatpush1.msra.mxu0 0.0
  %1967 = vmatprep.subr.mxu0 0.0
  %1968 = vmatpush1.msra.mxu0 0.0
  %1969 = vmatprep.mubr.f32.mxu0 0.0
  %1970 = vmatmul.mubr.f32.gmra.mrb[0].mxu0 %v1903
  %v1971 = vpop.f32.mrb[0].mxu0
  %v1972 = vadd.f32 0.0, %v1971
  %v1973 = vpop.f32.mrb[0].mxu0
  %1974 = vdwg.mxu0
  %v1976 = vrot.slane %v1972, 6
  %v1978 = vadd.f32 %v1901, %v1976
  %v1979 = vxor.u32 %v1978, 2147483648
  %v1980 = vmul.f32 %v1979, 1.442695
  %v1981 = vpow.pop %v1980
  %v1982 = vadd.f32 %v1981, 1.0
  %v1983 = vrcp.pop %v1982
  %v1984 = vmul.f32 1.0, %v1983
  %v1985 = vtanh.pop %v1978
  %v1987 = vrot.slane %v548, 6
  %v1989 = vmul.f32 %v1984, %v1987
  %1991 = vrot.lane.b32.xlu0 %v1985, 64
  %v1992 = vpop.permute.xlu0 %1991
  %v1994 = vmul.f32 %v1984, %v1992
  %1996 = vrot.lane.b32.xlu0 %v1994, 96
  %v1997 = vpop.permute.xlu0 %1996
  %v1999 = vadd.f32 %v1989, %v1997
  %v2000 = vtanh.pop %v1999
  %2002 = vrot.lane.b32.xlu0 %v1984, 64
  %v2003 = vpop.permute.xlu0 %2002
  %v2005 = vmul.f32 %v2000, %v2003
  %v2007 = vrot.slane %v386, 2
  %v2009 = vmul.f32 %v1273, %v2007
  %v2010 = vadd.f32 %v2009, %v1283
  %v2011 = vtanh.pop %v2010
  %v2012 = vmul.f32 %v2011, %v1289
  %v2014 = vsel %vm178, %v2012, 0
  %2016 = vmatprep.subr.mxu0 0.0
  %2017 = vmatpush1.msra.mxu0 %v364
  %2018 = vmatprep.subr.mxu0 0.0
  %2019 = vmatpush1.msra.mxu0 %v365
  %2020 = vmatprep.subr.mxu0 0.0
  %2021 = vmatpush1.msra.mxu0 %v366
  %2022 = vmatprep.subr.mxu0 0.0
  %2023 = vmatpush1.msra.mxu0 %v367
  %2024 = vmatprep.subr.mxu0 0.0
  %2025 = vmatpush1.msra.mxu0 0.0
  %2026 = vmatprep.subr.mxu0 0.0
  %2027 = vmatpush1.msra.mxu0 0.0
  %2028 = vmatprep.subr.mxu0 0.0
  %2029 = vmatpush1.msra.mxu0 0.0
  %2030 = vmatprep.subr.mxu0 0.0
  %2031 = vmatpush1.msra.mxu0 0.0
  %2032 = vmatprep.subr.mxu0 0.0
  %2033 = vmatpush1.msra.mxu0 0.0
  %2034 = vmatprep.subr.mxu0 0.0
  %2035 = vmatpush1.msra.mxu0 0.0
  %2036 = vmatprep.subr.mxu0 0.0
  %2037 = vmatpush1.msra.mxu0 0.0
  %2038 = vmatprep.subr.mxu0 0.0
  %2039 = vmatpush1.msra.mxu0 0.0
  %2040 = vmatprep.subr.mxu0 0.0
  %2041 = vmatpush1.msra.mxu0 0.0
  %2042 = vmatprep.subr.mxu0 0.0
  %2043 = vmatpush1.msra.mxu0 0.0
  %2044 = vmatprep.subr.mxu0 0.0
  %2045 = vmatpush1.msra.mxu0 0.0
  %2046 = vmatprep.subr.mxu0 0.0
  %2047 = vmatpush1.msra.mxu0 0.0
  %2048 = vmatprep.subr.mxu0 0.0
  %2049 = vmatpush1.msra.mxu0 0.0
  %2050 = vmatprep.subr.mxu0 0.0
  %2051 = vmatpush1.msra.mxu0 0.0
  %2052 = vmatprep.subr.mxu0 0.0
  %2053 = vmatpush1.msra.mxu0 0.0
  %2054 = vmatprep.subr.mxu0 0.0
  %2055 = vmatpush1.msra.mxu0 0.0
  %2056 = vmatprep.subr.mxu0 0.0
  %2057 = vmatpush1.msra.mxu0 0.0
  %2058 = vmatprep.subr.mxu0 0.0
  %2059 = vmatpush1.msra.mxu0 0.0
  %2060 = vmatprep.subr.mxu0 0.0
  %2061 = vmatpush1.msra.mxu0 0.0
  %2062 = vmatprep.subr.mxu0 0.0
  %2063 = vmatpush1.msra.mxu0 0.0
  %2064 = vmatprep.subr.mxu0 0.0
  %2065 = vmatpush1.msra.mxu0 0.0
  %2066 = vmatprep.subr.mxu0 0.0
  %2067 = vmatpush1.msra.mxu0 0.0
  %2068 = vmatprep.subr.mxu0 0.0
  %2069 = vmatpush1.msra.mxu0 0.0
  %2070 = vmatprep.subr.mxu0 0.0
  %2071 = vmatpush1.msra.mxu0 0.0
  %2072 = vmatprep.subr.mxu0 0.0
  %2073 = vmatpush1.msra.mxu0 0.0
  %2074 = vmatprep.subr.mxu0 0.0
  %2075 = vmatpush1.msra.mxu0 0.0
  %2076 = vmatprep.subr.mxu0 0.0
  %2077 = vmatpush1.msra.mxu0 0.0
  %2078 = vmatprep.subr.mxu0 0.0
  %2079 = vmatpush1.msra.mxu0 0.0
  %2080 = vmatprep.mubr.f32.mxu0 0.0
  %2081 = vmatmul.mubr.f32.gmra.mrb[0].mxu0 %v2014
  %v2082 = vpop.f32.mrb[0].mxu0
  %v2083 = vadd.f32 0.0, %v2082
  %v2084 = vpop.f32.mrb[0].mxu0
  %2085 = vdwg.mxu0
  %v2086 = vadd.f32 %v1359, %v2083
  %v2087 = vadd.f32 %v2086, %v1265
  %v2088 = vxor.u32 %v2087, 2147483648
  %v2089 = vmul.f32 %v2088, 1.442695
  %v2090 = vpow.pop %v2089
  %v2091 = vadd.f32 %v2090, 1.0
  %v2092 = vrcp.pop %v2091
  %v2093 = vmul.f32 1.0, %v2092
  %v2094 = vtanh.pop %v2087
  %v2095 = vmul.f32 %v2093, %v2010
  %2097 = vrot.lane.b32.xlu0 %v2094, 64
  %v2098 = vpop.permute.xlu0 %2097
  %v2100 = vmul.f32 %v2093, %v2098
  %2102 = vrot.lane.b32.xlu0 %v2100, 96
  %v2103 = vpop.permute.xlu0 %2102
  %v2105 = vadd.f32 %v2095, %v2103
  %v2106 = vtanh.pop %v2105
  %2108 = vrot.lane.b32.xlu0 %v2093, 64
  %v2109 = vpop.permute.xlu0 %2108
  %v2111 = vmul.f32 %v2106, %v2109
  %v2113 = vsel %vm178, %v2111, 0
  %2115 = vmatprep.subr.mxu0 0.0
  %2116 = vmatpush1.msra.mxu0 %v364
  %2117 = vmatprep.subr.mxu0 0.0
  %2118 = vmatpush1.msra.mxu0 %v365
  %2119 = vmatprep.subr.mxu0 0.0
  %2120 = vmatpush1.msra.mxu0 %v366
  %2121 = vmatprep.subr.mxu0 0.0
  %2122 = vmatpush1.msra.mxu0 %v367
  %2123 = vmatprep.subr.mxu0 0.0
  %2124 = vmatpush1.msra.mxu0 0.0
  %2125 = vmatprep.subr.mxu0 0.0
  %2126 = vmatpush1.msra.mxu0 0.0
  %2127 = vmatprep.subr.mxu0 0.0
  %2128 = vmatpush1.msra.mxu0 0.0
  %2129 = vmatprep.subr.mxu0 0.0
  %2130 = vmatpush1.msra.mxu0 0.0
  %2131 = vmatprep.subr.mxu0 0.0
  %2132 = vmatpush1.msra.mxu0 0.0
  %2133 = vmatprep.subr.mxu0 0.0
  %2134 = vmatpush1.msra.mxu0 0.0
  %2135 = vmatprep.subr.mxu0 0.0
  %2136 = vmatpush1.msra.mxu0 0.0
  %2137 = vmatprep.subr.mxu0 0.0
  %2138 = vmatpush1.msra.mxu0 0.0
  %2139 = vmatprep.subr.mxu0 0.0
  %2140 = vmatpush1.msra.mxu0 0.0
  %2141 = vmatprep.subr.mxu0 0.0
  %2142 = vmatpush1.msra.mxu0 0.0
  %2143 = vmatprep.subr.mxu0 0.0
  %2144 = vmatpush1.msra.mxu0 0.0
  %2145 = vmatprep.subr.mxu0 0.0
  %2146 = vmatpush1.msra.mxu0 0.0
  %2147 = vmatprep.subr.mxu0 0.0
  %2148 = vmatpush1.msra.mxu0 0.0
  %2149 = vmatprep.subr.mxu0 0.0
  %2150 = vmatpush1.msra.mxu0 0.0
  %2151 = vmatprep.subr.mxu0 0.0
  %2152 = vmatpush1.msra.mxu0 0.0
  %2153 = vmatprep.subr.mxu0 0.0
  %2154 = vmatpush1.msra.mxu0 0.0
  %2155 = vmatprep.subr.mxu0 0.0
  %2156 = vmatpush1.msra.mxu0 0.0
  %2157 = vmatprep.subr.mxu0 0.0
  %2158 = vmatpush1.msra.mxu0 0.0
  %2159 = vmatprep.subr.mxu0 0.0
  %2160 = vmatpush1.msra.mxu0 0.0
  %2161 = vmatprep.subr.mxu0 0.0
  %2162 = vmatpush1.msra.mxu0 0.0
  %2163 = vmatprep.subr.mxu0 0.0
  %2164 = vmatpush1.msra.mxu0 0.0
  %2165 = vmatprep.subr.mxu0 0.0
  %2166 = vmatpush1.msra.mxu0 0.0
  %2167 = vmatprep.subr.mxu0 0.0
  %2168 = vmatpush1.msra.mxu0 0.0
  %2169 = vmatprep.subr.mxu0 0.0
  %2170 = vmatpush1.msra.mxu0 0.0
  %2171 = vmatprep.subr.mxu0 0.0
  %2172 = vmatpush1.msra.mxu0 0.0
  %2173 = vmatprep.subr.mxu0 0.0
  %2174 = vmatpush1.msra.mxu0 0.0
  %2175 = vmatprep.subr.mxu0 0.0
  %2176 = vmatpush1.msra.mxu0 0.0
  %2177 = vmatprep.subr.mxu0 0.0
  %2178 = vmatpush1.msra.mxu0 0.0
  %2179 = vmatprep.mubr.f32.mxu0 0.0
  %2180 = vmatmul.mubr.f32.gmra.mrb[0].mxu0 %v2113
  %v2181 = vpop.f32.mrb[0].mxu0
  %v2182 = vadd.f32 0.0, %v2181
  %v2183 = vpop.f32.mrb[0].mxu0
  %2184 = vdwg.mxu0
  %v2185 = vadd.f32 %v1531, %v2182
  %v2186 = vadd.f32 %v2185, %v1265
  %v2187 = vxor.u32 %v2186, 2147483648
  %v2188 = vmul.f32 %v2187, 1.442695
  %v2189 = vpow.pop %v2188
  %v2190 = vadd.f32 %v2189, 1.0
  %v2191 = vrcp.pop %v2190
  %v2192 = vmul.f32 1.0, %v2191
  %v2193 = vtanh.pop %v2186
  %v2194 = vmul.f32 %v2192, %v2105
  %2196 = vrot.lane.b32.xlu0 %v2193, 64
  %v2197 = vpop.permute.xlu0 %2196
  %v2199 = vmul.f32 %v2192, %v2197
  %2201 = vrot.lane.b32.xlu0 %v2199, 96
  %v2202 = vpop.permute.xlu0 %2201
  %v2204 = vadd.f32 %v2194, %v2202
  %v2205 = vtanh.pop %v2204
  %2207 = vrot.lane.b32.xlu0 %v2192, 64
  %v2208 = vpop.permute.xlu0 %2207
  %v2210 = vmul.f32 %v2205, %v2208
  %2211 = vrot.lane.b32.xlu0 %v2111, 32
  %v2212 = vpop.permute.xlu0 %2211
  %2215 = vrot.lane.b32.xlu0 %v2210, 64
  %v2216 = vpop.permute.xlu0 %2215
  %v2218 = vsel %vm178, %v2012, %v2212
  %v2219 = vsel %vm1641, %v2218, %v2216
  %v2221 = vsel %vm1649, %v2219, 0
  %2223 = vmatprep.subr.mxu0 0.0
  %2224 = vmatpush1.msra.mxu0 %v369
  %2225 = vmatprep.subr.mxu0 0.0
  %2226 = vmatpush1.msra.mxu0 %v370
  %2227 = vmatprep.subr.mxu0 0.0
  %2228 = vmatpush1.msra.mxu0 %v371
  %2229 = vmatprep.subr.mxu0 0.0
  %2230 = vmatpush1.msra.mxu0 %v372
  %2231 = vmatprep.subr.mxu0 0.0
  %2232 = vmatpush1.msra.mxu0 %v373
  %2233 = vmatprep.subr.mxu0 0.0
  %2234 = vmatpush1.msra.mxu0 %v374
  %2235 = vmatprep.subr.mxu0 0.0
  %2236 = vmatpush1.msra.mxu0 %v375
  %2237 = vmatprep.subr.mxu0 0.0
  %2238 = vmatpush1.msra.mxu0 %v376
  %2239 = vmatprep.subr.mxu0 0.0
  %2240 = vmatpush1.msra.mxu0 %v377
  %2241 = vmatprep.subr.mxu0 0.0
  %2242 = vmatpush1.msra.mxu0 %v378
  %2243 = vmatprep.subr.mxu0 0.0
  %2244 = vmatpush1.msra.mxu0 %v379
  %2245 = vmatprep.subr.mxu0 0.0
  %2246 = vmatpush1.msra.mxu0 %v380
  %2247 = vmatprep.subr.mxu0 0.0
  %2248 = vmatpush1.msra.mxu0 0.0
  %2249 = vmatprep.subr.mxu0 0.0
  %2250 = vmatpush1.msra.mxu0 0.0
  %2251 = vmatprep.subr.mxu0 0.0
  %2252 = vmatpush1.msra.mxu0 0.0
  %2253 = vmatprep.subr.mxu0 0.0
  %2254 = vmatpush1.msra.mxu0 0.0
  %2255 = vmatprep.subr.mxu0 0.0
  %2256 = vmatpush1.msra.mxu0 0.0
  %2257 = vmatprep.subr.mxu0 0.0
  %2258 = vmatpush1.msra.mxu0 0.0
  %2259 = vmatprep.subr.mxu0 0.0
  %2260 = vmatpush1.msra.mxu0 0.0
  %2261 = vmatprep.subr.mxu0 0.0
  %2262 = vmatpush1.msra.mxu0 0.0
  %2263 = vmatprep.subr.mxu0 0.0
  %2264 = vmatpush1.msra.mxu0 0.0
  %2265 = vmatprep.subr.mxu0 0.0
  %2266 = vmatpush1.msra.mxu0 0.0
  %2267 = vmatprep.subr.mxu0 0.0
  %2268 = vmatpush1.msra.mxu0 0.0
  %2269 = vmatprep.subr.mxu0 0.0
  %2270 = vmatpush1.msra.mxu0 0.0
  %2271 = vmatprep.subr.mxu0 0.0
  %2272 = vmatpush1.msra.mxu0 0.0
  %2273 = vmatprep.subr.mxu0 0.0
  %2274 = vmatpush1.msra.mxu0 0.0
  %2275 = vmatprep.subr.mxu0 0.0
  %2276 = vmatpush1.msra.mxu0 0.0
  %2277 = vmatprep.subr.mxu0 0.0
  %2278 = vmatpush1.msra.mxu0 0.0
  %2279 = vmatprep.subr.mxu0 0.0
  %2280 = vmatpush1.msra.mxu0 0.0
  %2281 = vmatprep.subr.mxu0 0.0
  %2282 = vmatpush1.msra.mxu0 0.0
  %2283 = vmatprep.subr.mxu0 0.0
  %2284 = vmatpush1.msra.mxu0 0.0
  %2285 = vmatprep.subr.mxu0 0.0
  %2286 = vmatpush1.msra.mxu0 0.0
  %2287 = vmatprep.mubr.f32.mxu0 0.0
  %2288 = vmatmul.mubr.f32.gmra.mrb[0].mxu0 %v2221
  %v2289 = vpop.f32.mrb[0].mxu0
  %v2290 = vadd.f32 %v1647, %v2289
  %v2291 = vpop.f32.mrb[0].mxu0
  %2292 = vdwg.mxu0
  %v2293 = vmax.f32 %v2290, 0.0
  %v2295 = vsel %vm263, %v2293, 0
  %2297 = vmatprep.subr.mxu0 0.0
  %2298 = vmatpush1.msra.mxu0 %v382
  %2299 = vmatprep.subr.mxu0 0.0
  %2300 = vmatpush1.msra.mxu0 %v383
  %2301 = vmatprep.subr.mxu0 0.0
  %2302 = vmatpush1.msra.mxu0 %v384
  %2303 = vmatprep.subr.mxu0 0.0
  %2304 = vmatpush1.msra.mxu0 0.0
  %2305 = vmatprep.subr.mxu0 0.0
  %2306 = vmatpush1.msra.mxu0 0.0
  %2307 = vmatprep.subr.mxu0 0.0
  %2308 = vmatpush1.msra.mxu0 0.0
  %2309 = vmatprep.subr.mxu0 0.0
  %2310 = vmatpush1.msra.mxu0 0.0
  %2311 = vmatprep.subr.mxu0 0.0
  %2312 = vmatpush1.msra.mxu0 0.0
  %2313 = vmatprep.subr.mxu0 0.0
  %2314 = vmatpush1.msra.mxu0 0.0
  %2315 = vmatprep.subr.mxu0 0.0
  %2316 = vmatpush1.msra.mxu0 0.0
  %2317 = vmatprep.subr.mxu0 0.0
  %2318 = vmatpush1.msra.mxu0 0.0
  %2319 = vmatprep.subr.mxu0 0.0
  %2320 = vmatpush1.msra.mxu0 0.0
  %2321 = vmatprep.subr.mxu0 0.0
  %2322 = vmatpush1.msra.mxu0 0.0
  %2323 = vmatprep.subr.mxu0 0.0
  %2324 = vmatpush1.msra.mxu0 0.0
  %2325 = vmatprep.subr.mxu0 0.0
  %2326 = vmatpush1.msra.mxu0 0.0
  %2327 = vmatprep.subr.mxu0 0.0
  %2328 = vmatpush1.msra.mxu0 0.0
  %2329 = vmatprep.subr.mxu0 0.0
  %2330 = vmatpush1.msra.mxu0 0.0
  %2331 = vmatprep.subr.mxu0 0.0
  %2332 = vmatpush1.msra.mxu0 0.0
  %2333 = vmatprep.subr.mxu0 0.0
  %2334 = vmatpush1.msra.mxu0 0.0
  %2335 = vmatprep.subr.mxu0 0.0
  %2336 = vmatpush1.msra.mxu0 0.0
  %2337 = vmatprep.subr.mxu0 0.0
  %2338 = vmatpush1.msra.mxu0 0.0
  %2339 = vmatprep.subr.mxu0 0.0
  %2340 = vmatpush1.msra.mxu0 0.0
  %2341 = vmatprep.subr.mxu0 0.0
  %2342 = vmatpush1.msra.mxu0 0.0
  %2343 = vmatprep.subr.mxu0 0.0
  %2344 = vmatpush1.msra.mxu0 0.0
  %2345 = vmatprep.subr.mxu0 0.0
  %2346 = vmatpush1.msra.mxu0 0.0
  %2347 = vmatprep.subr.mxu0 0.0
  %2348 = vmatpush1.msra.mxu0 0.0
  %2349 = vmatprep.subr.mxu0 0.0
  %2350 = vmatpush1.msra.mxu0 0.0
  %2351 = vmatprep.subr.mxu0 0.0
  %2352 = vmatpush1.msra.mxu0 0.0
  %2353 = vmatprep.subr.mxu0 0.0
  %2354 = vmatpush1.msra.mxu0 0.0
  %2355 = vmatprep.subr.mxu0 0.0
  %2356 = vmatpush1.msra.mxu0 0.0
  %2357 = vmatprep.subr.mxu0 0.0
  %2358 = vmatpush1.msra.mxu0 0.0
  %2359 = vmatprep.subr.mxu0 0.0
  %2360 = vmatpush1.msra.mxu0 0.0
  %2361 = vmatprep.mubr.f32.mxu0 0.0
  %2362 = vmatmul.mubr.f32.gmra.mrb[0].mxu0 %v2295
  %v2363 = vpop.f32.mrb[0].mxu0
  %v2364 = vadd.f32 %v1728, %v2363
  %v2365 = vpop.f32.mrb[0].mxu0
  %2366 = vdwg.mxu0
  %v2367 = vxor.u32 %v2364, 2147483648
  %v2368 = vmul.f32 %v2367, 1.442695
  %v2369 = vpow.pop %v2368
  %v2370 = vadd.f32 %v2369, 1.0
  %v2371 = vrcp.pop %v2370
  %v2372 = vmul.f32 1.0, %v2371
  %v2373 = vsel %vm1809, %v2372, -inf
  %2374 = vmax.xlane.f32.xlu0 %v2373
  %v2375 = vpop.xlane.xlu0 %2374
  %v2376 = vsub.f32 %v2372, %v2375
  %v2377 = vmul.f32 %v2376, 1.442695
  %v2378 = vpow.pop %v2377
  %v2379 = vsel %vm1809, %v2378, 0.0
  %2380 = vadd.xlane.f32.xlu0 %v2379
  %v2381 = vpop.xlane.xlu0 %2380
  %v2382 = vrcp.pop %v2381
  %v2383 = vmul.f32 %v2378, %v2382
  %v2385 = vrot.slane %v2005, 2
  %2386 = vrot.lane.b32.xlu0 %v2385, 16
  %v2387 = vpop.permute.xlu0 %2386
  %v2389 = vsel %vm93, %v2383, %v2387
  %v2390 = vsel %vm178, %v2385, 0
  %2392 = vmatprep.subr.mxu0 0.0
  %2393 = vmatpush1.msra.mxu0 %v343
  %2394 = vmatprep.subr.mxu0 0.0
  %2395 = vmatpush1.msra.mxu0 %v344
  %2396 = vmatprep.subr.mxu0 0.0
  %2397 = vmatpush1.msra.mxu0 %v345
  %2398 = vmatprep.subr.mxu0 0.0
  %2399 = vmatpush1.msra.mxu0 %v346
  %2400 = vmatprep.subr.mxu0 0.0
  %2401 = vmatpush1.msra.mxu0 0.0
  %2402 = vmatprep.subr.mxu0 0.0
  %2403 = vmatpush1.msra.mxu0 0.0
  %2404 = vmatprep.subr.mxu0 0.0
  %2405 = vmatpush1.msra.mxu0 0.0
  %2406 = vmatprep.subr.mxu0 0.0
  %2407 = vmatpush1.msra.mxu0 0.0
  %2408 = vmatprep.subr.mxu0 0.0
  %2409 = vmatpush1.msra.mxu0 0.0
  %2410 = vmatprep.subr.mxu0 0.0
  %2411 = vmatpush1.msra.mxu0 0.0
  %2412 = vmatprep.subr.mxu0 0.0
  %2413 = vmatpush1.msra.mxu0 0.0
  %2414 = vmatprep.subr.mxu0 0.0
  %2415 = vmatpush1.msra.mxu0 0.0
  %2416 = vmatprep.subr.mxu0 0.0
  %2417 = vmatpush1.msra.mxu0 0.0
  %2418 = vmatprep.subr.mxu0 0.0
  %2419 = vmatpush1.msra.mxu0 0.0
  %2420 = vmatprep.subr.mxu0 0.0
  %2421 = vmatpush1.msra.mxu0 0.0
  %2422 = vmatprep.subr.mxu0 0.0
  %2423 = vmatpush1.msra.mxu0 0.0
  %2424 = vmatprep.subr.mxu0 0.0
  %2425 = vmatpush1.msra.mxu0 0.0
  %2426 = vmatprep.subr.mxu0 0.0
  %2427 = vmatpush1.msra.mxu0 0.0
  %2428 = vmatprep.subr.mxu0 0.0
  %2429 = vmatpush1.msra.mxu0 0.0
  %2430 = vmatprep.subr.mxu0 0.0
  %2431 = vmatpush1.msra.mxu0 0.0
  %2432 = vmatprep.subr.mxu0 0.0
  %2433 = vmatpush1.msra.mxu0 0.0
  %2434 = vmatprep.subr.mxu0 0.0
  %2435 = vmatpush1.msra.mxu0 0.0
  %2436 = vmatprep.subr.mxu0 0.0
  %2437 = vmatpush1.msra.mxu0 0.0
  %2438 = vmatprep.subr.mxu0 0.0
  %2439 = vmatpush1.msra.mxu0 0.0
  %2440 = vmatprep.subr.mxu0 0.0
  %2441 = vmatpush1.msra.mxu0 0.0
  %2442 = vmatprep.subr.mxu0 0.0
  %2443 = vmatpush1.msra.mxu0 0.0
  %2444 = vmatprep.subr.mxu0 0.0
  %2445 = vmatpush1.msra.mxu0 0.0
  %2446 = vmatprep.subr.mxu0 0.0
  %2447 = vmatpush1.msra.mxu0 0.0
  %2448 = vmatprep.subr.mxu0 0.0
  %2449 = vmatpush1.msra.mxu0 0.0
  %2450 = vmatprep.subr.mxu0 0.0
  %2451 = vmatpush1.msra.mxu0 0.0
  %2452 = vmatprep.subr.mxu0 0.0
  %2453 = vmatpush1.msra.mxu0 0.0
  %2454 = vmatprep.subr.mxu0 0.0
  %2455 = vmatpush1.msra.mxu0 0.0
  %2456 = vmatprep.mubr.f32.mxu0 0.0
  %2457 = vmatmul.mubr.f32.gmra.mrb[0].mxu0 %v2390
  %v2458 = vpop.f32.mrb[0].mxu0
  %v2459 = vadd.f32 0.0, %v2458
  %v2460 = vpop.f32.mrb[0].mxu0
  %2461 = vdwg.mxu0
  %v2463 = vrot.slane %v2459, 4
  %v2465 = vadd.f32 %v164, %v2463
  %v2467 = vsel %vm93, %v2383, 0
  %2469 = vmatprep.subr.mxu0 0.0
  %2470 = vmatpush1.msra.mxu0 %v347
  %2471 = vmatprep.subr.mxu0 0.0
  %2472 = vmatpush1.msra.mxu0 %v348
  %2473 = vmatprep.subr.mxu0 0.0
  %2474 = vmatpush1.msra.mxu0 0.0
  %2475 = vmatprep.subr.mxu0 0.0
  %2476 = vmatpush1.msra.mxu0 0.0
  %2477 = vmatprep.subr.mxu0 0.0
  %2478 = vmatpush1.msra.mxu0 0.0
  %2479 = vmatprep.subr.mxu0 0.0
  %2480 = vmatpush1.msra.mxu0 0.0
  %2481 = vmatprep.subr.mxu0 0.0
  %2482 = vmatpush1.msra.mxu0 0.0
  %2483 = vmatprep.subr.mxu0 0.0
  %2484 = vmatpush1.msra.mxu0 0.0
  %2485 = vmatprep.subr.mxu0 0.0
  %2486 = vmatpush1.msra.mxu0 0.0
  %2487 = vmatprep.subr.mxu0 0.0
  %2488 = vmatpush1.msra.mxu0 0.0
  %2489 = vmatprep.subr.mxu0 0.0
  %2490 = vmatpush1.msra.mxu0 0.0
  %2491 = vmatprep.subr.mxu0 0.0
  %2492 = vmatpush1.msra.mxu0 0.0
  %2493 = vmatprep.subr.mxu0 0.0
  %2494 = vmatpush1.msra.mxu0 0.0
  %2495 = vmatprep.subr.mxu0 0.0
  %2496 = vmatpush1.msra.mxu0 0.0
  %2497 = vmatprep.subr.mxu0 0.0
  %2498 = vmatpush1.msra.mxu0 0.0
  %2499 = vmatprep.subr.mxu0 0.0
  %2500 = vmatpush1.msra.mxu0 0.0
  %2501 = vmatprep.subr.mxu0 0.0
  %2502 = vmatpush1.msra.mxu0 0.0
  %2503 = vmatprep.subr.mxu0 0.0
  %2504 = vmatpush1.msra.mxu0 0.0
  %2505 = vmatprep.subr.mxu0 0.0
  %2506 = vmatpush1.msra.mxu0 0.0
  %2507 = vmatprep.subr.mxu0 0.0
  %2508 = vmatpush1.msra.mxu0 0.0
  %2509 = vmatprep.subr.mxu0 0.0
  %2510 = vmatpush1.msra.mxu0 0.0
  %2511 = vmatprep.subr.mxu0 0.0
  %2512 = vmatpush1.msra.mxu0 0.0
  %2513 = vmatprep.subr.mxu0 0.0
  %2514 = vmatpush1.msra.mxu0 0.0
  %2515 = vmatprep.subr.mxu0 0.0
  %2516 = vmatpush1.msra.mxu0 0.0
  %2517 = vmatprep.subr.mxu0 0.0
  %2518 = vmatpush1.msra.mxu0 0.0
  %2519 = vmatprep.subr.mxu0 0.0
  %2520 = vmatpush1.msra.mxu0 0.0
  %2521 = vmatprep.subr.mxu0 0.0
  %2522 = vmatpush1.msra.mxu0 0.0
  %2523 = vmatprep.subr.mxu0 0.0
  %2524 = vmatpush1.msra.mxu0 0.0
  %2525 = vmatprep.subr.mxu0 0.0
  %2526 = vmatpush1.msra.mxu0 0.0
  %2527 = vmatprep.subr.mxu0 0.0
  %2528 = vmatpush1.msra.mxu0 0.0
  %2529 = vmatprep.subr.mxu0 0.0
  %2530 = vmatpush1.msra.mxu0 0.0
  %2531 = vmatprep.subr.mxu0 0.0
  %2532 = vmatpush1.msra.mxu0 0.0
  %2533 = vmatprep.mubr.f32.mxu0 0.0
  %2534 = vmatmul.mubr.f32.gmra.mrb[0].mxu0 %v2467
  %v2535 = vpop.f32.mrb[0].mxu0
  %v2536 = vadd.f32 0.0, %v2535
  %v2537 = vpop.f32.mrb[0].mxu0
  %2538 = vdwg.mxu0
  %v2540 = vrot.slane %v2536, 4
  %v2542 = vadd.f32 %v2465, %v2540
  %v2543 = vxor.u32 %v2542, 2147483648
  %v2544 = vmul.f32 %v2543, 1.442695
  %v2545 = vpow.pop %v2544
  %v2546 = vadd.f32 %v2545, 1.0
  %v2547 = vrcp.pop %v2546
  %v2548 = vmul.f32 1.0, %v2547
  %v2549 = vtanh.pop %v2542
  %v2551 = vrot.slane %v1999, 6
  %v2553 = vmul.f32 %v2548, %v2551
  %2555 = vrot.lane.b32.xlu0 %v2549, 64
  %v2556 = vpop.permute.xlu0 %2555
  %v2558 = vmul.f32 %v2548, %v2556
  %2560 = vrot.lane.b32.xlu0 %v2558, 96
  %v2561 = vpop.permute.xlu0 %2560
  %v2563 = vadd.f32 %v2553, %v2561
  %v2564 = vtanh.pop %v2563
  %2566 = vrot.lane.b32.xlu0 %v2548, 64
  %v2567 = vpop.permute.xlu0 %2566
  %v2569 = vmul.f32 %v2564, %v2567
  %v2570 = vrot.slane %v386, 4
  %v2572 = vmul.f32 %v1273, %v2570
  %v2573 = vadd.f32 %v2572, %v1283
  %v2574 = vtanh.pop %v2573
  %v2575 = vmul.f32 %v2574, %v1289
  %v2577 = vsel %vm178, %v2575, 0
  %2579 = vmatprep.subr.mxu0 0.0
  %2580 = vmatpush1.msra.mxu0 %v364
  %2581 = vmatprep.subr.mxu0 0.0
  %2582 = vmatpush1.msra.mxu0 %v365
  %2583 = vmatprep.subr.mxu0 0.0
  %2584 = vmatpush1.msra.mxu0 %v366
  %2585 = vmatprep.subr.mxu0 0.0
  %2586 = vmatpush1.msra.mxu0 %v367
  %2587 = vmatprep.subr.mxu0 0.0
  %2588 = vmatpush1.msra.mxu0 0.0
  %2589 = vmatprep.subr.mxu0 0.0
  %2590 = vmatpush1.msra.mxu0 0.0
  %2591 = vmatprep.subr.mxu0 0.0
  %2592 = vmatpush1.msra.mxu0 0.0
  %2593 = vmatprep.subr.mxu0 0.0
  %2594 = vmatpush1.msra.mxu0 0.0
  %2595 = vmatprep.subr.mxu0 0.0
  %2596 = vmatpush1.msra.mxu0 0.0
  %2597 = vmatprep.subr.mxu0 0.0
  %2598 = vmatpush1.msra.mxu0 0.0
  %2599 = vmatprep.subr.mxu0 0.0
  %2600 = vmatpush1.msra.mxu0 0.0
  %2601 = vmatprep.subr.mxu0 0.0
  %2602 = vmatpush1.msra.mxu0 0.0
  %2603 = vmatprep.subr.mxu0 0.0
  %2604 = vmatpush1.msra.mxu0 0.0
  %2605 = vmatprep.subr.mxu0 0.0
  %2606 = vmatpush1.msra.mxu0 0.0
  %2607 = vmatprep.subr.mxu0 0.0
  %2608 = vmatpush1.msra.mxu0 0.0
  %2609 = vmatprep.subr.mxu0 0.0
  %2610 = vmatpush1.msra.mxu0 0.0
  %2611 = vmatprep.subr.mxu0 0.0
  %2612 = vmatpush1.msra.mxu0 0.0
  %2613 = vmatprep.subr.mxu0 0.0
  %2614 = vmatpush1.msra.mxu0 0.0
  %2615 = vmatprep.subr.mxu0 0.0
  %2616 = vmatpush1.msra.mxu0 0.0
  %2617 = vmatprep.subr.mxu0 0.0
  %2618 = vmatpush1.msra.mxu0 0.0
  %2619 = vmatprep.subr.mxu0 0.0
  %2620 = vmatpush1.msra.mxu0 0.0
  %2621 = vmatprep.subr.mxu0 0.0
  %2622 = vmatpush1.msra.mxu0 0.0
  %2623 = vmatprep.subr.mxu0 0.0
  %2624 = vmatpush1.msra.mxu0 0.0
  %2625 = vmatprep.subr.mxu0 0.0
  %2626 = vmatpush1.msra.mxu0 0.0
  %2627 = vmatprep.subr.mxu0 0.0
  %2628 = vmatpush1.msra.mxu0 0.0
  %2629 = vmatprep.subr.mxu0 0.0
  %2630 = vmatpush1.msra.mxu0 0.0
  %2631 = vmatprep.subr.mxu0 0.0
  %2632 = vmatpush1.msra.mxu0 0.0
  %2633 = vmatprep.subr.mxu0 0.0
  %2634 = vmatpush1.msra.mxu0 0.0
  %2635 = vmatprep.subr.mxu0 0.0
  %2636 = vmatpush1.msra.mxu0 0.0
  %2637 = vmatprep.subr.mxu0 0.0
  %2638 = vmatpush1.msra.mxu0 0.0
  %2639 = vmatprep.subr.mxu0 0.0
  %2640 = vmatpush1.msra.mxu0 0.0
  %2641 = vmatprep.subr.mxu0 0.0
  %2642 = vmatpush1.msra.mxu0 0.0
  %2643 = vmatprep.mubr.f32.mxu0 0.0
  %2644 = vmatmul.mubr.f32.gmra.mrb[0].mxu0 %v2577
  %v2645 = vpop.f32.mrb[0].mxu0
  %v2646 = vadd.f32 0.0, %v2645
  %v2647 = vpop.f32.mrb[0].mxu0
  %2648 = vdwg.mxu0
  %v2649 = vadd.f32 %v1359, %v2646
  %v2650 = vadd.f32 %v2649, %v1265
  %v2651 = vxor.u32 %v2650, 2147483648
  %v2652 = vmul.f32 %v2651, 1.442695
  %v2653 = vpow.pop %v2652
  %v2654 = vadd.f32 %v2653, 1.0
  %v2655 = vrcp.pop %v2654
  %v2656 = vmul.f32 1.0, %v2655
  %v2657 = vtanh.pop %v2650
  %v2658 = vmul.f32 %v2656, %v2573
  %2660 = vrot.lane.b32.xlu0 %v2657, 64
  %v2661 = vpop.permute.xlu0 %2660
  %v2663 = vmul.f32 %v2656, %v2661
  %2665 = vrot.lane.b32.xlu0 %v2663, 96
  %v2666 = vpop.permute.xlu0 %2665
  %v2668 = vadd.f32 %v2658, %v2666
  %v2669 = vtanh.pop %v2668
  %2671 = vrot.lane.b32.xlu0 %v2656, 64
  %v2672 = vpop.permute.xlu0 %2671
  %v2674 = vmul.f32 %v2669, %v2672
  %v2676 = vsel %vm178, %v2674, 0
  %2678 = vmatprep.subr.mxu0 0.0
  %2679 = vmatpush1.msra.mxu0 %v364
  %2680 = vmatprep.subr.mxu0 0.0
  %2681 = vmatpush1.msra.mxu0 %v365
  %2682 = vmatprep.subr.mxu0 0.0
  %2683 = vmatpush1.msra.mxu0 %v366
  %2684 = vmatprep.subr.mxu0 0.0
  %2685 = vmatpush1.msra.mxu0 %v367
  %2686 = vmatprep.subr.mxu0 0.0
  %2687 = vmatpush1.msra.mxu0 0.0
  %2688 = vmatprep.subr.mxu0 0.0
  %2689 = vmatpush1.msra.mxu0 0.0
  %2690 = vmatprep.subr.mxu0 0.0
  %2691 = vmatpush1.msra.mxu0 0.0
  %2692 = vmatprep.subr.mxu0 0.0
  %2693 = vmatpush1.msra.mxu0 0.0
  %2694 = vmatprep.subr.mxu0 0.0
  %2695 = vmatpush1.msra.mxu0 0.0
  %2696 = vmatprep.subr.mxu0 0.0
  %2697 = vmatpush1.msra.mxu0 0.0
  %2698 = vmatprep.subr.mxu0 0.0
  %2699 = vmatpush1.msra.mxu0 0.0
  %2700 = vmatprep.subr.mxu0 0.0
  %2701 = vmatpush1.msra.mxu0 0.0
  %2702 = vmatprep.subr.mxu0 0.0
  %2703 = vmatpush1.msra.mxu0 0.0
  %2704 = vmatprep.subr.mxu0 0.0
  %2705 = vmatpush1.msra.mxu0 0.0
  %2706 = vmatprep.subr.mxu0 0.0
  %2707 = vmatpush1.msra.mxu0 0.0
  %2708 = vmatprep.subr.mxu0 0.0
  %2709 = vmatpush1.msra.mxu0 0.0
  %2710 = vmatprep.subr.mxu0 0.0
  %2711 = vmatpush1.msra.mxu0 0.0
  %2712 = vmatprep.subr.mxu0 0.0
  %2713 = vmatpush1.msra.mxu0 0.0
  %2714 = vmatprep.subr.mxu0 0.0
  %2715 = vmatpush1.msra.mxu0 0.0
  %2716 = vmatprep.subr.mxu0 0.0
  %2717 = vmatpush1.msra.mxu0 0.0
  %2718 = vmatprep.subr.mxu0 0.0
  %2719 = vmatpush1.msra.mxu0 0.0
  %2720 = vmatprep.subr.mxu0 0.0
  %2721 = vmatpush1.msra.mxu0 0.0
  %2722 = vmatprep.subr.mxu0 0.0
  %2723 = vmatpush1.msra.mxu0 0.0
  %2724 = vmatprep.subr.mxu0 0.0
  %2725 = vmatpush1.msra.mxu0 0.0
  %2726 = vmatprep.subr.mxu0 0.0
  %2727 = vmatpush1.msra.mxu0 0.0
  %2728 = vmatprep.subr.mxu0 0.0
  %2729 = vmatpush1.msra.mxu0 0.0
  %2730 = vmatprep.subr.mxu0 0.0
  %2731 = vmatpush1.msra.mxu0 0.0
  %2732 = vmatprep.subr.mxu0 0.0
  %2733 = vmatpush1.msra.mxu0 0.0
  %2734 = vmatprep.subr.mxu0 0.0
  %2735 = vmatpush1.msra.mxu0 0.0
  %2736 = vmatprep.subr.mxu0 0.0
  %2737 = vmatpush1.msra.mxu0 0.0
  %2738 = vmatprep.subr.mxu0 0.0
  %2739 = vmatpush1.msra.mxu0 0.0
  %2740 = vmatprep.subr.mxu0 0.0
  %2741 = vmatpush1.msra.mxu0 0.0
  %2742 = vmatprep.mubr.f32.mxu0 0.0
  %2743 = vmatmul.mubr.f32.gmra.mrb[0].mxu0 %v2676
  %v2744 = vpop.f32.mrb[0].mxu0
  %v2745 = vadd.f32 0.0, %v2744
  %v2746 = vpop.f32.mrb[0].mxu0
  %2747 = vdwg.mxu0
  %v2748 = vadd.f32 %v1531, %v2745
  %v2749 = vadd.f32 %v2748, %v1265
  %v2750 = vxor.u32 %v2749, 2147483648
  %v2751 = vmul.f32 %v2750, 1.442695
  %v2752 = vpow.pop %v2751
  %v2753 = vadd.f32 %v2752, 1.0
  %v2754 = vrcp.pop %v2753
  %v2755 = vmul.f32 1.0, %v2754
  %v2756 = vtanh.pop %v2749
  %v2757 = vmul.f32 %v2755, %v2668
  %2759 = vrot.lane.b32.xlu0 %v2756, 64
  %v2760 = vpop.permute.xlu0 %2759
  %v2762 = vmul.f32 %v2755, %v2760
  %2764 = vrot.lane.b32.xlu0 %v2762, 96
  %v2765 = vpop.permute.xlu0 %2764
  %v2767 = vadd.f32 %v2757, %v2765
  %v2768 = vtanh.pop %v2767
  %2770 = vrot.lane.b32.xlu0 %v2755, 64
  %v2771 = vpop.permute.xlu0 %2770
  %v2773 = vmul.f32 %v2768, %v2771
  %2774 = vrot.lane.b32.xlu0 %v2674, 32
  %v2775 = vpop.permute.xlu0 %2774
  %2778 = vrot.lane.b32.xlu0 %v2773, 64
  %v2779 = vpop.permute.xlu0 %2778
  %v2781 = vsel %vm178, %v2575, %v2775
  %v2782 = vsel %vm1641, %v2781, %v2779
  %v2784 = vsel %vm1649, %v2782, 0
  %2786 = vmatprep.subr.mxu0 0.0
  %2787 = vmatpush1.msra.mxu0 %v369
  %2788 = vmatprep.subr.mxu0 0.0
  %2789 = vmatpush1.msra.mxu0 %v370
  %2790 = vmatprep.subr.mxu0 0.0
  %2791 = vmatpush1.msra.mxu0 %v371
  %2792 = vmatprep.subr.mxu0 0.0
  %2793 = vmatpush1.msra.mxu0 %v372
  %2794 = vmatprep.subr.mxu0 0.0
  %2795 = vmatpush1.msra.mxu0 %v373
  %2796 = vmatprep.subr.mxu0 0.0
  %2797 = vmatpush1.msra.mxu0 %v374
  %2798 = vmatprep.subr.mxu0 0.0
  %2799 = vmatpush1.msra.mxu0 %v375
  %2800 = vmatprep.subr.mxu0 0.0
  %2801 = vmatpush1.msra.mxu0 %v376
  %2802 = vmatprep.subr.mxu0 0.0
  %2803 = vmatpush1.msra.mxu0 %v377
  %2804 = vmatprep.subr.mxu0 0.0
  %2805 = vmatpush1.msra.mxu0 %v378
  %2806 = vmatprep.subr.mxu0 0.0
  %2807 = vmatpush1.msra.mxu0 %v379
  %2808 = vmatprep.subr.mxu0 0.0
  %2809 = vmatpush1.msra.mxu0 %v380
  %2810 = vmatprep.subr.mxu0 0.0
  %2811 = vmatpush1.msra.mxu0 0.0
  %2812 = vmatprep.subr.mxu0 0.0
  %2813 = vmatpush1.msra.mxu0 0.0
  %2814 = vmatprep.subr.mxu0 0.0
  %2815 = vmatpush1.msra.mxu0 0.0
  %2816 = vmatprep.subr.mxu0 0.0
  %2817 = vmatpush1.msra.mxu0 0.0
  %2818 = vmatprep.subr.mxu0 0.0
  %2819 = vmatpush1.msra.mxu0 0.0
  %2820 = vmatprep.subr.mxu0 0.0
  %2821 = vmatpush1.msra.mxu0 0.0
  %2822 = vmatprep.subr.mxu0 0.0
  %2823 = vmatpush1.msra.mxu0 0.0
  %2824 = vmatprep.subr.mxu0 0.0
  %2825 = vmatpush1.msra.mxu0 0.0
  %2826 = vmatprep.subr.mxu0 0.0
  %2827 = vmatpush1.msra.mxu0 0.0
  %2828 = vmatprep.subr.mxu0 0.0
  %2829 = vmatpush1.msra.mxu0 0.0
  %2830 = vmatprep.subr.mxu0 0.0
  %2831 = vmatpush1.msra.mxu0 0.0
  %2832 = vmatprep.subr.mxu0 0.0
  %2833 = vmatpush1.msra.mxu0 0.0
  %2834 = vmatprep.subr.mxu0 0.0
  %2835 = vmatpush1.msra.mxu0 0.0
  %2836 = vmatprep.subr.mxu0 0.0
  %2837 = vmatpush1.msra.mxu0 0.0
  %2838 = vmatprep.subr.mxu0 0.0
  %2839 = vmatpush1.msra.mxu0 0.0
  %2840 = vmatprep.subr.mxu0 0.0
  %2841 = vmatpush1.msra.mxu0 0.0
  %2842 = vmatprep.subr.mxu0 0.0
  %2843 = vmatpush1.msra.mxu0 0.0
  %2844 = vmatprep.subr.mxu0 0.0
  %2845 = vmatpush1.msra.mxu0 0.0
  %2846 = vmatprep.subr.mxu0 0.0
  %2847 = vmatpush1.msra.mxu0 0.0
  %2848 = vmatprep.subr.mxu0 0.0
  %2849 = vmatpush1.msra.mxu0 0.0
  %2850 = vmatprep.mubr.f32.mxu0 0.0
  %2851 = vmatmul.mubr.f32.gmra.mrb[0].mxu0 %v2784
  %v2852 = vpop.f32.mrb[0].mxu0
  %v2853 = vadd.f32 %v1647, %v2852
  %v2854 = vpop.f32.mrb[0].mxu0
  %2855 = vdwg.mxu0
  %v2856 = vmax.f32 %v2853, 0.0
  %v2858 = vsel %vm263, %v2856, 0
  %2860 = vmatprep.subr.mxu0 0.0
  %2861 = vmatpush1.msra.mxu0 %v382
  %2862 = vmatprep.subr.mxu0 0.0
  %2863 = vmatpush1.msra.mxu0 %v383
  %2864 = vmatprep.subr.mxu0 0.0
  %2865 = vmatpush1.msra.mxu0 %v384
  %2866 = vmatprep.subr.mxu0 0.0
  %2867 = vmatpush1.msra.mxu0 0.0
  %2868 = vmatprep.subr.mxu0 0.0
  %2869 = vmatpush1.msra.mxu0 0.0
  %2870 = vmatprep.subr.mxu0 0.0
  %2871 = vmatpush1.msra.mxu0 0.0
  %2872 = vmatprep.subr.mxu0 0.0
  %2873 = vmatpush1.msra.mxu0 0.0
  %2874 = vmatprep.subr.mxu0 0.0
  %2875 = vmatpush1.msra.mxu0 0.0
  %2876 = vmatprep.subr.mxu0 0.0
  %2877 = vmatpush1.msra.mxu0 0.0
  %2878 = vmatprep.subr.mxu0 0.0
  %2879 = vmatpush1.msra.mxu0 0.0
  %2880 = vmatprep.subr.mxu0 0.0
  %2881 = vmatpush1.msra.mxu0 0.0
  %2882 = vmatprep.subr.mxu0 0.0
  %2883 = vmatpush1.msra.mxu0 0.0
  %2884 = vmatprep.subr.mxu0 0.0
  %2885 = vmatpush1.msra.mxu0 0.0
  %2886 = vmatprep.subr.mxu0 0.0
  %2887 = vmatpush1.msra.mxu0 0.0
  %2888 = vmatprep.subr.mxu0 0.0
  %2889 = vmatpush1.msra.mxu0 0.0
  %2890 = vmatprep.subr.mxu0 0.0
  %2891 = vmatpush1.msra.mxu0 0.0
  %2892 = vmatprep.subr.mxu0 0.0
  %2893 = vmatpush1.msra.mxu0 0.0
  %2894 = vmatprep.subr.mxu0 0.0
  %2895 = vmatpush1.msra.mxu0 0.0
  %2896 = vmatprep.subr.mxu0 0.0
  %2897 = vmatpush1.msra.mxu0 0.0
  %2898 = vmatprep.subr.mxu0 0.0
  %2899 = vmatpush1.msra.mxu0 0.0
  %2900 = vmatprep.subr.mxu0 0.0
  %2901 = vmatpush1.msra.mxu0 0.0
  %2902 = vmatprep.subr.mxu0 0.0
  %2903 = vmatpush1.msra.mxu0 0.0
  %2904 = vmatprep.subr.mxu0 0.0
  %2905 = vmatpush1.msra.mxu0 0.0
  %2906 = vmatprep.subr.mxu0 0.0
  %2907 = vmatpush1.msra.mxu0 0.0
  %2908 = vmatprep.subr.mxu0 0.0
  %2909 = vmatpush1.msra.mxu0 0.0
  %2910 = vmatprep.subr.mxu0 0.0
  %2911 = vmatpush1.msra.mxu0 0.0
  %2912 = vmatprep.subr.mxu0 0.0
  %2913 = vmatpush1.msra.mxu0 0.0
  %2914 = vmatprep.subr.mxu0 0.0
  %2915 = vmatpush1.msra.mxu0 0.0
  %2916 = vmatprep.subr.mxu0 0.0
  %2917 = vmatpush1.msra.mxu0 0.0
  %2918 = vmatprep.subr.mxu0 0.0
  %2919 = vmatpush1.msra.mxu0 0.0
  %2920 = vmatprep.subr.mxu0 0.0
  %2921 = vmatpush1.msra.mxu0 0.0
  %2922 = vmatprep.subr.mxu0 0.0
  %2923 = vmatpush1.msra.mxu0 0.0
  %2924 = vmatprep.mubr.f32.mxu0 0.0
  %2925 = vmatmul.mubr.f32.gmra.mrb[0].mxu0 %v2858
  %v2926 = vpop.f32.mrb[0].mxu0
  %v2927 = vadd.f32 %v1728, %v2926
  %v2928 = vpop.f32.mrb[0].mxu0
  %2929 = vdwg.mxu0
  %v2930 = vxor.u32 %v2927, 2147483648
  %v2931 = vmul.f32 %v2930, 1.442695
  %v2932 = vpow.pop %v2931
  %v2933 = vadd.f32 %v2932, 1.0
  %v2934 = vrcp.pop %v2933
  %v2935 = vmul.f32 1.0, %v2934
  %v2936 = vsel %vm1809, %v2935, -inf
  %2937 = vmax.xlane.f32.xlu0 %v2936
  %v2938 = vpop.xlane.xlu0 %2937
  %v2939 = vsub.f32 %v2935, %v2938
  %v2940 = vmul.f32 %v2939, 1.442695
  %v2941 = vpow.pop %v2940
  %v2942 = vsel %vm1809, %v2941, 0.0
  %2943 = vadd.xlane.f32.xlu0 %v2942
  %v2944 = vpop.xlane.xlu0 %2943
  %v2945 = vrcp.pop %v2944
  %v2946 = vmul.f32 %v2941, %v2945
  %v2948 = vrot.slane %v2569, 4
  %2949 = vrot.lane.b32.xlu0 %v2948, 16
  %v2950 = vpop.permute.xlu0 %2949
  %v2952 = vsel %vm93, %v2946, %v2950
  %v2953 = vsel %vm178, %v2948, 0
  %2955 = vmatprep.subr.mxu0 0.0
  %2956 = vmatpush1.msra.mxu0 %v343
  %2957 = vmatprep.subr.mxu0 0.0
  %2958 = vmatpush1.msra.mxu0 %v344
  %2959 = vmatprep.subr.mxu0 0.0
  %2960 = vmatpush1.msra.mxu0 %v345
  %2961 = vmatprep.subr.mxu0 0.0
  %2962 = vmatpush1.msra.mxu0 %v346
  %2963 = vmatprep.subr.mxu0 0.0
  %2964 = vmatpush1.msra.mxu0 0.0
  %2965 = vmatprep.subr.mxu0 0.0
  %2966 = vmatpush1.msra.mxu0 0.0
  %2967 = vmatprep.subr.mxu0 0.0
  %2968 = vmatpush1.msra.mxu0 0.0
  %2969 = vmatprep.subr.mxu0 0.0
  %2970 = vmatpush1.msra.mxu0 0.0
  %2971 = vmatprep.subr.mxu0 0.0
  %2972 = vmatpush1.msra.mxu0 0.0
  %2973 = vmatprep.subr.mxu0 0.0
  %2974 = vmatpush1.msra.mxu0 0.0
  %2975 = vmatprep.subr.mxu0 0.0
  %2976 = vmatpush1.msra.mxu0 0.0
  %2977 = vmatprep.subr.mxu0 0.0
  %2978 = vmatpush1.msra.mxu0 0.0
  %2979 = vmatprep.subr.mxu0 0.0
  %2980 = vmatpush1.msra.mxu0 0.0
  %2981 = vmatprep.subr.mxu0 0.0
  %2982 = vmatpush1.msra.mxu0 0.0
  %2983 = vmatprep.subr.mxu0 0.0
  %2984 = vmatpush1.msra.mxu0 0.0
  %2985 = vmatprep.subr.mxu0 0.0
  %2986 = vmatpush1.msra.mxu0 0.0
  %2987 = vmatprep.subr.mxu0 0.0
  %2988 = vmatpush1.msra.mxu0 0.0
  %2989 = vmatprep.subr.mxu0 0.0
  %2990 = vmatpush1.msra.mxu0 0.0
  %2991 = vmatprep.subr.mxu0 0.0
  %2992 = vmatpush1.msra.mxu0 0.0
  %2993 = vmatprep.subr.mxu0 0.0
  %2994 = vmatpush1.msra.mxu0 0.0
  %2995 = vmatprep.subr.mxu0 0.0
  %2996 = vmatpush1.msra.mxu0 0.0
  %2997 = vmatprep.subr.mxu0 0.0
  %2998 = vmatpush1.msra.mxu0 0.0
  %2999 = vmatprep.subr.mxu0 0.0
  %3000 = vmatpush1.msra.mxu0 0.0
  %3001 = vmatprep.subr.mxu0 0.0
  %3002 = vmatpush1.msra.mxu0 0.0
  %3003 = vmatprep.subr.mxu0 0.0
  %3004 = vmatpush1.msra.mxu0 0.0
  %3005 = vmatprep.subr.mxu0 0.0
  %3006 = vmatpush1.msra.mxu0 0.0
  %3007 = vmatprep.subr.mxu0 0.0
  %3008 = vmatpush1.msra.mxu0 0.0
  %3009 = vmatprep.subr.mxu0 0.0
  %3010 = vmatpush1.msra.mxu0 0.0
  %3011 = vmatprep.subr.mxu0 0.0
  %3012 = vmatpush1.msra.mxu0 0.0
  %3013 = vmatprep.subr.mxu0 0.0
  %3014 = vmatpush1.msra.mxu0 0.0
  %3015 = vmatprep.subr.mxu0 0.0
  %3016 = vmatpush1.msra.mxu0 0.0
  %3017 = vmatprep.subr.mxu0 0.0
  %3018 = vmatpush1.msra.mxu0 0.0
  %3019 = vmatprep.mubr.f32.mxu0 0.0
  %3020 = vmatmul.mubr.f32.gmra.mrb[0].mxu0 %v2953
  %v3021 = vpop.f32.mrb[0].mxu0
  %v3022 = vadd.f32 0.0, %v3021
  %v3023 = vpop.f32.mrb[0].mxu0
  %3024 = vdwg.mxu0
  %v3026 = vrot.slane %v3022, 2
  %v3028 = vadd.f32 %v164, %v3026
  %v3030 = vsel %vm93, %v2946, 0
  %3032 = vmatprep.subr.mxu0 0.0
  %3033 = vmatpush1.msra.mxu0 %v347
  %3034 = vmatprep.subr.mxu0 0.0
  %3035 = vmatpush1.msra.mxu0 %v348
  %3036 = vmatprep.subr.mxu0 0.0
  %3037 = vmatpush1.msra.mxu0 0.0
  %3038 = vmatprep.subr.mxu0 0.0
  %3039 = vmatpush1.msra.mxu0 0.0
  %3040 = vmatprep.subr.mxu0 0.0
  %3041 = vmatpush1.msra.mxu0 0.0
  %3042 = vmatprep.subr.mxu0 0.0
  %3043 = vmatpush1.msra.mxu0 0.0
  %3044 = vmatprep.subr.mxu0 0.0
  %3045 = vmatpush1.msra.mxu0 0.0
  %3046 = vmatprep.subr.mxu0 0.0
  %3047 = vmatpush1.msra.mxu0 0.0
  %3048 = vmatprep.subr.mxu0 0.0
  %3049 = vmatpush1.msra.mxu0 0.0
  %3050 = vmatprep.subr.mxu0 0.0
  %3051 = vmatpush1.msra.mxu0 0.0
  %3052 = vmatprep.subr.mxu0 0.0
  %3053 = vmatpush1.msra.mxu0 0.0
  %3054 = vmatprep.subr.mxu0 0.0
  %3055 = vmatpush1.msra.mxu0 0.0
  %3056 = vmatprep.subr.mxu0 0.0
  %3057 = vmatpush1.msra.mxu0 0.0
  %3058 = vmatprep.subr.mxu0 0.0
  %3059 = vmatpush1.msra.mxu0 0.0
  %3060 = vmatprep.subr.mxu0 0.0
  %3061 = vmatpush1.msra.mxu0 0.0
  %3062 = vmatprep.subr.mxu0 0.0
  %3063 = vmatpush1.msra.mxu0 0.0
  %3064 = vmatprep.subr.mxu0 0.0
  %3065 = vmatpush1.msra.mxu0 0.0
  %3066 = vmatprep.subr.mxu0 0.0
  %3067 = vmatpush1.msra.mxu0 0.0
  %3068 = vmatprep.subr.mxu0 0.0
  %3069 = vmatpush1.msra.mxu0 0.0
  %3070 = vmatprep.subr.mxu0 0.0
  %3071 = vmatpush1.msra.mxu0 0.0
  %3072 = vmatprep.subr.mxu0 0.0
  %3073 = vmatpush1.msra.mxu0 0.0
  %3074 = vmatprep.subr.mxu0 0.0
  %3075 = vmatpush1.msra.mxu0 0.0
  %3076 = vmatprep.subr.mxu0 0.0
  %3077 = vmatpush1.msra.mxu0 0.0
  %3078 = vmatprep.subr.mxu0 0.0
  %3079 = vmatpush1.msra.mxu0 0.0
  %3080 = vmatprep.subr.mxu0 0.0
  %3081 = vmatpush1.msra.mxu0 0.0
  %3082 = vmatprep.subr.mxu0 0.0
  %3083 = vmatpush1.msra.mxu0 0.0
  %3084 = vmatprep.subr.mxu0 0.0
  %3085 = vmatpush1.msra.mxu0 0.0
  %3086 = vmatprep.subr.mxu0 0.0
  %3087 = vmatpush1.msra.mxu0 0.0
  %3088 = vmatprep.subr.mxu0 0.0
  %3089 = vmatpush1.msra.mxu0 0.0
  %3090 = vmatprep.subr.mxu0 0.0
  %3091 = vmatpush1.msra.mxu0 0.0
  %3092 = vmatprep.subr.mxu0 0.0
  %3093 = vmatpush1.msra.mxu0 0.0
  %3094 = vmatprep.subr.mxu0 0.0
  %3095 = vmatpush1.msra.mxu0 0.0
  %3096 = vmatprep.mubr.f32.mxu0 0.0
  %3097 = vmatmul.mubr.f32.gmra.mrb[0].mxu0 %v3030
  %v3098 = vpop.f32.mrb[0].mxu0
  %v3099 = vadd.f32 0.0, %v3098
  %v3100 = vpop.f32.mrb[0].mxu0
  %3101 = vdwg.mxu0
  %v3103 = vrot.slane %v3099, 2
  %v3105 = vadd.f32 %v3028, %v3103
  %v3106 = vxor.u32 %v3105, 2147483648
  %v3107 = vmul.f32 %v3106, 1.442695
  %v3108 = vpow.pop %v3107
  %v3109 = vadd.f32 %v3108, 1.0
  %v3110 = vrcp.pop %v3109
  %v3111 = vmul.f32 1.0, %v3110
  %v3112 = vtanh.pop %v3105
  %v3114 = vrot.slane %v2563, 6
  %v3116 = vmul.f32 %v3111, %v3114
  %3118 = vrot.lane.b32.xlu0 %v3112, 64
  %v3119 = vpop.permute.xlu0 %3118
  %v3121 = vmul.f32 %v3111, %v3119
  %3123 = vrot.lane.b32.xlu0 %v3121, 96
  %v3124 = vpop.permute.xlu0 %3123
  %v3126 = vadd.f32 %v3116, %v3124
  %v3127 = vtanh.pop %v3126
  %3129 = vrot.lane.b32.xlu0 %v3111, 64
  %v3130 = vpop.permute.xlu0 %3129
  %v3132 = vmul.f32 %v3127, %v3130
  %v3133 = vrot.slane %v386, 6
  %v3135 = vmul.f32 %v1273, %v3133
  %v3136 = vadd.f32 %v3135, %v1283
  %v3137 = vtanh.pop %v3136
  %v3138 = vmul.f32 %v3137, %v1289
  %v3140 = vsel %vm178, %v3138, 0
  %3142 = vmatprep.subr.mxu0 0.0
  %3143 = vmatpush1.msra.mxu0 %v364
  %3144 = vmatprep.subr.mxu0 0.0
  %3145 = vmatpush1.msra.mxu0 %v365
  %3146 = vmatprep.subr.mxu0 0.0
  %3147 = vmatpush1.msra.mxu0 %v366
  %3148 = vmatprep.subr.mxu0 0.0
  %3149 = vmatpush1.msra.mxu0 %v367
  %3150 = vmatprep.subr.mxu0 0.0
  %3151 = vmatpush1.msra.mxu0 0.0
  %3152 = vmatprep.subr.mxu0 0.0
  %3153 = vmatpush1.msra.mxu0 0.0
  %3154 = vmatprep.subr.mxu0 0.0
  %3155 = vmatpush1.msra.mxu0 0.0
  %3156 = vmatprep.subr.mxu0 0.0
  %3157 = vmatpush1.msra.mxu0 0.0
  %3158 = vmatprep.subr.mxu0 0.0
  %3159 = vmatpush1.msra.mxu0 0.0
  %3160 = vmatprep.subr.mxu0 0.0
  %3161 = vmatpush1.msra.mxu0 0.0
  %3162 = vmatprep.subr.mxu0 0.0
  %3163 = vmatpush1.msra.mxu0 0.0
  %3164 = vmatprep.subr.mxu0 0.0
  %3165 = vmatpush1.msra.mxu0 0.0
  %3166 = vmatprep.subr.mxu0 0.0
  %3167 = vmatpush1.msra.mxu0 0.0
  %3168 = vmatprep.subr.mxu0 0.0
  %3169 = vmatpush1.msra.mxu0 0.0
  %3170 = vmatprep.subr.mxu0 0.0
  %3171 = vmatpush1.msra.mxu0 0.0
  %3172 = vmatprep.subr.mxu0 0.0
  %3173 = vmatpush1.msra.mxu0 0.0
  %3174 = vmatprep.subr.mxu0 0.0
  %3175 = vmatpush1.msra.mxu0 0.0
  %3176 = vmatprep.subr.mxu0 0.0
  %3177 = vmatpush1.msra.mxu0 0.0
  %3178 = vmatprep.subr.mxu0 0.0
  %3179 = vmatpush1.msra.mxu0 0.0
  %3180 = vmatprep.subr.mxu0 0.0
  %3181 = vmatpush1.msra.mxu0 0.0
  %3182 = vmatprep.subr.mxu0 0.0
  %3183 = vmatpush1.msra.mxu0 0.0
  %3184 = vmatprep.subr.mxu0 0.0
  %3185 = vmatpush1.msra.mxu0 0.0
  %3186 = vmatprep.subr.mxu0 0.0
  %3187 = vmatpush1.msra.mxu0 0.0
  %3188 = vmatprep.subr.mxu0 0.0
  %3189 = vmatpush1.msra.mxu0 0.0
  %3190 = vmatprep.subr.mxu0 0.0
  %3191 = vmatpush1.msra.mxu0 0.0
  %3192 = vmatprep.subr.mxu0 0.0
  %3193 = vmatpush1.msra.mxu0 0.0
  %3194 = vmatprep.subr.mxu0 0.0
  %3195 = vmatpush1.msra.mxu0 0.0
  %3196 = vmatprep.subr.mxu0 0.0
  %3197 = vmatpush1.msra.mxu0 0.0
  %3198 = vmatprep.subr.mxu0 0.0
  %3199 = vmatpush1.msra.mxu0 0.0
  %3200 = vmatprep.subr.mxu0 0.0
  %3201 = vmatpush1.msra.mxu0 0.0
  %3202 = vmatprep.subr.mxu0 0.0
  %3203 = vmatpush1.msra.mxu0 0.0
  %3204 = vmatprep.subr.mxu0 0.0
  %3205 = vmatpush1.msra.mxu0 0.0
  %3206 = vmatprep.mubr.f32.mxu0 0.0
  %3207 = vmatmul.mubr.f32.gmra.mrb[0].mxu0 %v3140
  %v3208 = vpop.f32.mrb[0].mxu0
  %v3209 = vadd.f32 0.0, %v3208
  %v3210 = vpop.f32.mrb[0].mxu0
  %3211 = vdwg.mxu0
  %v3212 = vadd.f32 %v1359, %v3209
  %v3213 = vadd.f32 %v3212, %v1265
  %v3214 = vxor.u32 %v3213, 2147483648
  %v3215 = vmul.f32 %v3214, 1.442695
  %v3216 = vpow.pop %v3215
  %v3217 = vadd.f32 %v3216, 1.0
  %v3218 = vrcp.pop %v3217
  %v3219 = vmul.f32 1.0, %v3218
  %v3220 = vtanh.pop %v3213
  %v3221 = vmul.f32 %v3219, %v3136
  %3223 = vrot.lane.b32.xlu0 %v3220, 64
  %v3224 = vpop.permute.xlu0 %3223
  %v3226 = vmul.f32 %v3219, %v3224
  %3228 = vrot.lane.b32.xlu0 %v3226, 96
  %v3229 = vpop.permute.xlu0 %3228
  %v3231 = vadd.f32 %v3221, %v3229
  %v3232 = vtanh.pop %v3231
  %3234 = vrot.lane.b32.xlu0 %v3219, 64
  %v3235 = vpop.permute.xlu0 %3234
  %v3237 = vmul.f32 %v3232, %v3235
  %v3239 = vsel %vm178, %v3237, 0
  %3241 = vmatprep.subr.mxu0 0.0
  %3242 = vmatpush1.msra.mxu0 %v364
  %3243 = vmatprep.subr.mxu0 0.0
  %3244 = vmatpush1.msra.mxu0 %v365
  %3245 = vmatprep.subr.mxu0 0.0
  %3246 = vmatpush1.msra.mxu0 %v366
  %3247 = vmatprep.subr.mxu0 0.0
  %3248 = vmatpush1.msra.mxu0 %v367
  %3249 = vmatprep.subr.mxu0 0.0
  %3250 = vmatpush1.msra.mxu0 0.0
  %3251 = vmatprep.subr.mxu0 0.0
  %3252 = vmatpush1.msra.mxu0 0.0
  %3253 = vmatprep.subr.mxu0 0.0
  %3254 = vmatpush1.msra.mxu0 0.0
  %3255 = vmatprep.subr.mxu0 0.0
  %3256 = vmatpush1.msra.mxu0 0.0
  %3257 = vmatprep.subr.mxu0 0.0
  %3258 = vmatpush1.msra.mxu0 0.0
  %3259 = vmatprep.subr.mxu0 0.0
  %3260 = vmatpush1.msra.mxu0 0.0
  %3261 = vmatprep.subr.mxu0 0.0
  %3262 = vmatpush1.msra.mxu0 0.0
  %3263 = vmatprep.subr.mxu0 0.0
  %3264 = vmatpush1.msra.mxu0 0.0
  %3265 = vmatprep.subr.mxu0 0.0
  %3266 = vmatpush1.msra.mxu0 0.0
  %3267 = vmatprep.subr.mxu0 0.0
  %3268 = vmatpush1.msra.mxu0 0.0
  %3269 = vmatprep.subr.mxu0 0.0
  %3270 = vmatpush1.msra.mxu0 0.0
  %3271 = vmatprep.subr.mxu0 0.0
  %3272 = vmatpush1.msra.mxu0 0.0
  %3273 = vmatprep.subr.mxu0 0.0
  %3274 = vmatpush1.msra.mxu0 0.0
  %3275 = vmatprep.subr.mxu0 0.0
  %3276 = vmatpush1.msra.mxu0 0.0
  %3277 = vmatprep.subr.mxu0 0.0
  %3278 = vmatpush1.msra.mxu0 0.0
  %3279 = vmatprep.subr.mxu0 0.0
  %3280 = vmatpush1.msra.mxu0 0.0
  %3281 = vmatprep.subr.mxu0 0.0
  %3282 = vmatpush1.msra.mxu0 0.0
  %3283 = vmatprep.subr.mxu0 0.0
  %3284 = vmatpush1.msra.mxu0 0.0
  %3285 = vmatprep.subr.mxu0 0.0
  %3286 = vmatpush1.msra.mxu0 0.0
  %3287 = vmatprep.subr.mxu0 0.0
  %3288 = vmatpush1.msra.mxu0 0.0
  %3289 = vmatprep.subr.mxu0 0.0
  %3290 = vmatpush1.msra.mxu0 0.0
  %3291 = vmatprep.subr.mxu0 0.0
  %3292 = vmatpush1.msra.mxu0 0.0
  %3293 = vmatprep.subr.mxu0 0.0
  %3294 = vmatpush1.msra.mxu0 0.0
  %3295 = vmatprep.subr.mxu0 0.0
  %3296 = vmatpush1.msra.mxu0 0.0
  %3297 = vmatprep.subr.mxu0 0.0
  %3298 = vmatpush1.msra.mxu0 0.0
  %3299 = vmatprep.subr.mxu0 0.0
  %3300 = vmatpush1.msra.mxu0 0.0
  %3301 = vmatprep.subr.mxu0 0.0
  %3302 = vmatpush1.msra.mxu0 0.0
  %3303 = vmatprep.subr.mxu0 0.0
  %3304 = vmatpush1.msra.mxu0 0.0
  %3305 = vmatprep.mubr.f32.mxu0 0.0
  %3306 = vmatmul.mubr.f32.gmra.mrb[0].mxu0 %v3239
  %v3307 = vpop.f32.mrb[0].mxu0
  %v3308 = vadd.f32 0.0, %v3307
  %v3309 = vpop.f32.mrb[0].mxu0
  %3310 = vdwg.mxu0
  %v3311 = vadd.f32 %v1531, %v3308
  %v3312 = vadd.f32 %v3311, %v1265
  %v3313 = vxor.u32 %v3312, 2147483648
  %v3314 = vmul.f32 %v3313, 1.442695
  %v3315 = vpow.pop %v3314
  %v3316 = vadd.f32 %v3315, 1.0
  %v3317 = vrcp.pop %v3316
  %v3318 = vmul.f32 1.0, %v3317
  %v3319 = vtanh.pop %v3312
  %v3320 = vmul.f32 %v3318, %v3231
  %3322 = vrot.lane.b32.xlu0 %v3319, 64
  %v3323 = vpop.permute.xlu0 %3322
  %v3325 = vmul.f32 %v3318, %v3323
  %3327 = vrot.lane.b32.xlu0 %v3325, 96
  %v3328 = vpop.permute.xlu0 %3327
  %v3330 = vadd.f32 %v3320, %v3328
  %v3331 = vtanh.pop %v3330
  %3333 = vrot.lane.b32.xlu0 %v3318, 64
  %v3334 = vpop.permute.xlu0 %3333
  %v3336 = vmul.f32 %v3331, %v3334
  %3337 = vrot.lane.b32.xlu0 %v3237, 32
  %v3338 = vpop.permute.xlu0 %3337
  %3341 = vrot.lane.b32.xlu0 %v3336, 64
  %v3342 = vpop.permute.xlu0 %3341
  %v3344 = vsel %vm178, %v3138, %v3338
  %v3345 = vsel %vm1641, %v3344, %v3342
  %v3347 = vsel %vm1649, %v3345, 0
  %3349 = vmatprep.subr.mxu0 0.0
  %3350 = vmatpush1.msra.mxu0 %v369
  %3351 = vmatprep.subr.mxu0 0.0
  %3352 = vmatpush1.msra.mxu0 %v370
  %3353 = vmatprep.subr.mxu0 0.0
  %3354 = vmatpush1.msra.mxu0 %v371
  %3355 = vmatprep.subr.mxu0 0.0
  %3356 = vmatpush1.msra.mxu0 %v372
  %3357 = vmatprep.subr.mxu0 0.0
  %3358 = vmatpush1.msra.mxu0 %v373
  %3359 = vmatprep.subr.mxu0 0.0
  %3360 = vmatpush1.msra.mxu0 %v374
  %3361 = vmatprep.subr.mxu0 0.0
  %3362 = vmatpush1.msra.mxu0 %v375
  %3363 = vmatprep.subr.mxu0 0.0
  %3364 = vmatpush1.msra.mxu0 %v376
  %3365 = vmatprep.subr.mxu0 0.0
  %3366 = vmatpush1.msra.mxu0 %v377
  %3367 = vmatprep.subr.mxu0 0.0
  %3368 = vmatpush1.msra.mxu0 %v378
  %3369 = vmatprep.subr.mxu0 0.0
  %3370 = vmatpush1.msra.mxu0 %v379
  %3371 = vmatprep.subr.mxu0 0.0
  %3372 = vmatpush1.msra.mxu0 %v380
  %3373 = vmatprep.subr.mxu0 0.0
  %3374 = vmatpush1.msra.mxu0 0.0
  %3375 = vmatprep.subr.mxu0 0.0
  %3376 = vmatpush1.msra.mxu0 0.0
  %3377 = vmatprep.subr.mxu0 0.0
  %3378 = vmatpush1.msra.mxu0 0.0
  %3379 = vmatprep.subr.mxu0 0.0
  %3380 = vmatpush1.msra.mxu0 0.0
  %3381 = vmatprep.subr.mxu0 0.0
  %3382 = vmatpush1.msra.mxu0 0.0
  %3383 = vmatprep.subr.mxu0 0.0
  %3384 = vmatpush1.msra.mxu0 0.0
  %3385 = vmatprep.subr.mxu0 0.0
  %3386 = vmatpush1.msra.mxu0 0.0
  %3387 = vmatprep.subr.mxu0 0.0
  %3388 = vmatpush1.msra.mxu0 0.0
  %3389 = vmatprep.subr.mxu0 0.0
  %3390 = vmatpush1.msra.mxu0 0.0
  %3391 = vmatprep.subr.mxu0 0.0
  %3392 = vmatpush1.msra.mxu0 0.0
  %3393 = vmatprep.subr.mxu0 0.0
  %3394 = vmatpush1.msra.mxu0 0.0
  %3395 = vmatprep.subr.mxu0 0.0
  %3396 = vmatpush1.msra.mxu0 0.0
  %3397 = vmatprep.subr.mxu0 0.0
  %3398 = vmatpush1.msra.mxu0 0.0
  %3399 = vmatprep.subr.mxu0 0.0
  %3400 = vmatpush1.msra.mxu0 0.0
  %3401 = vmatprep.subr.mxu0 0.0
  %3402 = vmatpush1.msra.mxu0 0.0
  %3403 = vmatprep.subr.mxu0 0.0
  %3404 = vmatpush1.msra.mxu0 0.0
  %3405 = vmatprep.subr.mxu0 0.0
  %3406 = vmatpush1.msra.mxu0 0.0
  %3407 = vmatprep.subr.mxu0 0.0
  %3408 = vmatpush1.msra.mxu0 0.0
  %3409 = vmatprep.subr.mxu0 0.0
  %3410 = vmatpush1.msra.mxu0 0.0
  %3411 = vmatprep.subr.mxu0 0.0
  %3412 = vmatpush1.msra.mxu0 0.0
  %3413 = vmatprep.mubr.f32.mxu0 0.0
  %3414 = vmatmul.mubr.f32.gmra.mrb[0].mxu0 %v3347
  %v3415 = vpop.f32.mrb[0].mxu0
  %v3416 = vadd.f32 %v1647, %v3415
  %v3417 = vpop.f32.mrb[0].mxu0
  %3418 = vdwg.mxu0
  %v3419 = vmax.f32 %v3416, 0.0
  %v3421 = vsel %vm263, %v3419, 0
  %3423 = vmatprep.subr.mxu0 0.0
  %3424 = vmatpush1.msra.mxu0 %v382
  %3425 = vmatprep.subr.mxu0 0.0
  %3426 = vmatpush1.msra.mxu0 %v383
  %3427 = vmatprep.subr.mxu0 0.0
  %3428 = vmatpush1.msra.mxu0 %v384
  %3429 = vmatprep.subr.mxu0 0.0
  %3430 = vmatpush1.msra.mxu0 0.0
  %3431 = vmatprep.subr.mxu0 0.0
  %3432 = vmatpush1.msra.mxu0 0.0
  %3433 = vmatprep.subr.mxu0 0.0
  %3434 = vmatpush1.msra.mxu0 0.0
  %3435 = vmatprep.subr.mxu0 0.0
  %3436 = vmatpush1.msra.mxu0 0.0
  %3437 = vmatprep.subr.mxu0 0.0
  %3438 = vmatpush1.msra.mxu0 0.0
  %3439 = vmatprep.subr.mxu0 0.0
  %3440 = vmatpush1.msra.mxu0 0.0
  %3441 = vmatprep.subr.mxu0 0.0
  %3442 = vmatpush1.msra.mxu0 0.0
  %3443 = vmatprep.subr.mxu0 0.0
  %3444 = vmatpush1.msra.mxu0 0.0
  %3445 = vmatprep.subr.mxu0 0.0
  %3446 = vmatpush1.msra.mxu0 0.0
  %3447 = vmatprep.subr.mxu0 0.0
  %3448 = vmatpush1.msra.mxu0 0.0
  %3449 = vmatprep.subr.mxu0 0.0
  %3450 = vmatpush1.msra.mxu0 0.0
  %3451 = vmatprep.subr.mxu0 0.0
  %3452 = vmatpush1.msra.mxu0 0.0
  %3453 = vmatprep.subr.mxu0 0.0
  %3454 = vmatpush1.msra.mxu0 0.0
  %3455 = vmatprep.subr.mxu0 0.0
  %3456 = vmatpush1.msra.mxu0 0.0
  %3457 = vmatprep.subr.mxu0 0.0
  %3458 = vmatpush1.msra.mxu0 0.0
  %3459 = vmatprep.subr.mxu0 0.0
  %3460 = vmatpush1.msra.mxu0 0.0
  %3461 = vmatprep.subr.mxu0 0.0
  %3462 = vmatpush1.msra.mxu0 0.0
  %3463 = vmatprep.subr.mxu0 0.0
  %3464 = vmatpush1.msra.mxu0 0.0
  %3465 = vmatprep.subr.mxu0 0.0
  %3466 = vmatpush1.msra.mxu0 0.0
  %3467 = vmatprep.subr.mxu0 0.0
  %3468 = vmatpush1.msra.mxu0 0.0
  %3469 = vmatprep.subr.mxu0 0.0
  %3470 = vmatpush1.msra.mxu0 0.0
  %3471 = vmatprep.subr.mxu0 0.0
  %3472 = vmatpush1.msra.mxu0 0.0
  %3473 = vmatprep.subr.mxu0 0.0
  %3474 = vmatpush1.msra.mxu0 0.0
  %3475 = vmatprep.subr.mxu0 0.0
  %3476 = vmatpush1.msra.mxu0 0.0
  %3477 = vmatprep.subr.mxu0 0.0
  %3478 = vmatpush1.msra.mxu0 0.0
  %3479 = vmatprep.subr.mxu0 0.0
  %3480 = vmatpush1.msra.mxu0 0.0
  %3481 = vmatprep.subr.mxu0 0.0
  %3482 = vmatpush1.msra.mxu0 0.0
  %3483 = vmatprep.subr.mxu0 0.0
  %3484 = vmatpush1.msra.mxu0 0.0
  %3485 = vmatprep.subr.mxu0 0.0
  %3486 = vmatpush1.msra.mxu0 0.0
  %3487 = vmatprep.mubr.f32.mxu0 0.0
  %3488 = vmatmul.mubr.f32.gmra.mrb[0].mxu0 %v3421
  %v3489 = vpop.f32.mrb[0].mxu0
  %v3490 = vadd.f32 %v1728, %v3489
  %v3491 = vpop.f32.mrb[0].mxu0
  %3492 = vdwg.mxu0
  %v3493 = vxor.u32 %v3490, 2147483648
  %v3494 = vmul.f32 %v3493, 1.442695
  %v3495 = vpow.pop %v3494
  %v3496 = vadd.f32 %v3495, 1.0
  %v3497 = vrcp.pop %v3496
  %v3498 = vmul.f32 1.0, %v3497
  %v3499 = vsel %vm1809, %v3498, -inf
  %3500 = vmax.xlane.f32.xlu0 %v3499
  %v3501 = vpop.xlane.xlu0 %3500
  %v3502 = vsub.f32 %v3498, %v3501
  %v3503 = vmul.f32 %v3502, 1.442695
  %v3504 = vpow.pop %v3503
  %v3505 = vsel %vm1809, %v3504, 0.0
  %3506 = vadd.xlane.f32.xlu0 %v3505
  %v3507 = vpop.xlane.xlu0 %3506
  %v3508 = vrcp.pop %v3507
  %v3509 = vmul.f32 %v3504, %v3508
  %v3511 = vrot.slane %v3132, 6
  %3512 = vrot.lane.b32.xlu0 %v3511, 16
  %v3513 = vpop.permute.xlu0 %3512
  %v3515 = vsel %vm93, %v3509, %v3513
  %v3517 = vrot.slane %v2389, 6
  %v3520 = vrot.slane %v2952, 4
  %v3523 = vrot.slane %v3515, 2
  %vm3525 = vcmask 1041408
  %v3526 = vsel %vm3525, %v1825, %v3517
  %vm3527 = vcmask 1043456
  %v3528 = vsel %vm3527, %v3526, %v3520
  %vm3529 = vcmask 1045504
  %v3530 = vsel %vm3529, %v3528, %v3523
  %v3531 = vld [vmem:[%s22] sm:$0xff]
  %v3532 = vld [vmem:[%s22 + $0x8] sm:$0xff]
  %v3533 = vld [vmem:[%s22 + $0x10] sm:$0xff]
  %v3534 = vld [vmem:[%s22 + $0x18] sm:$0xff]
  %v3535 = vld [vmem:[%s22 + $0x20] sm:$0xff]
  %v3536 = vld [vmem:[%s22 + $0x28] sm:$0xff]
  %v3537 = vld [vmem:[%s23] sm:$0x1]
  %v3539 = vlaneseq
  %v3540 = vshrl.u32 %v3539, 7
  %v3541 = vsub.s32 0, %v3540
  %v3542 = vrot.slane %v3537, %v3541
  %vm3544 = vcmask 392192
  %v3546 = vsel %vm3544, %v3530, 0
  %3548 = vmatprep.subr.mxu0 0.0
  %3549 = vmatpush1.msra.mxu0 %v3531
  %3550 = vmatprep.subr.mxu0 0.0
  %3551 = vmatpush1.msra.mxu0 %v3532
  %3552 = vmatprep.subr.mxu0 0.0
  %3553 = vmatpush1.msra.mxu0 %v3533
  %3554 = vmatprep.subr.mxu0 0.0
  %3555 = vmatpush1.msra.mxu0 %v3534
  %3556 = vmatprep.subr.mxu0 0.0
  %3557 = vmatpush1.msra.mxu0 %v3535
  %3558 = vmatprep.subr.mxu0 0.0
  %3559 = vmatpush1.msra.mxu0 %v3536
  %3560 = vmatprep.subr.mxu0 0.0
  %3561 = vmatpush1.msra.mxu0 0.0
  %3562 = vmatprep.subr.mxu0 0.0
  %3563 = vmatpush1.msra.mxu0 0.0
  %3564 = vmatprep.subr.mxu0 0.0
  %3565 = vmatpush1.msra.mxu0 0.0
  %3566 = vmatprep.subr.mxu0 0.0
  %3567 = vmatpush1.msra.mxu0 0.0
  %3568 = vmatprep.subr.mxu0 0.0
  %3569 = vmatpush1.msra.mxu0 0.0
  %3570 = vmatprep.subr.mxu0 0.0
  %3571 = vmatpush1.msra.mxu0 0.0
  %3572 = vmatprep.subr.mxu0 0.0
  %3573 = vmatpush1.msra.mxu0 0.0
  %3574 = vmatprep.subr.mxu0 0.0
  %3575 = vmatpush1.msra.mxu0 0.0
  %3576 = vmatprep.subr.mxu0 0.0
  %3577 = vmatpush1.msra.mxu0 0.0
  %3578 = vmatprep.subr.mxu0 0.0
  %3579 = vmatpush1.msra.mxu0 0.0
  %3580 = vmatprep.subr.mxu0 0.0
  %3581 = vmatpush1.msra.mxu0 0.0
  %3582 = vmatprep.subr.mxu0 0.0
  %3583 = vmatpush1.msra.mxu0 0.0
  %3584 = vmatprep.subr.mxu0 0.0
  %3585 = vmatpush1.msra.mxu0 0.0
  %3586 = vmatprep.subr.mxu0 0.0
  %3587 = vmatpush1.msra.mxu0 0.0
  %3588 = vmatprep.subr.mxu0 0.0
  %3589 = vmatpush1.msra.mxu0 0.0
  %3590 = vmatprep.subr.mxu0 0.0
  %3591 = vmatpush1.msra.mxu0 0.0
  %3592 = vmatprep.subr.mxu0 0.0
  %3593 = vmatpush1.msra.mxu0 0.0
  %3594 = vmatprep.subr.mxu0 0.0
  %3595 = vmatpush1.msra.mxu0 0.0
  %3596 = vmatprep.subr.mxu0 0.0
  %3597 = vmatpush1.msra.mxu0 0.0
  %3598 = vmatprep.subr.mxu0 0.0
  %3599 = vmatpush1.msra.mxu0 0.0
  %3600 = vmatprep.subr.mxu0 0.0
  %3601 = vmatpush1.msra.mxu0 0.0
  %3602 = vmatprep.subr.mxu0 0.0
  %3603 = vmatpush1.msra.mxu0 0.0
  %3604 = vmatprep.subr.mxu0 0.0
  %3605 = vmatpush1.msra.mxu0 0.0
  %3606 = vmatprep.subr.mxu0 0.0
  %3607 = vmatpush1.msra.mxu0 0.0
  %3608 = vmatprep.subr.mxu0 0.0
  %3609 = vmatpush1.msra.mxu0 0.0
  %3610 = vmatprep.subr.mxu0 0.0
  %3611 = vmatpush1.msra.mxu0 0.0
  %3612 = vmatprep.mubr.f32.mxu0 0.0
  %3613 = vmatmul.mubr.f32.gmra.mrb[0].mxu0 %v3546
  %v3614 = vpop.f32.mrb[0].mxu0
  %v3615 = vadd.f32 %v3542, %v3614
  %v3616 = vpop.f32.mrb[0].mxu0
  %3617 = vdwg.mxu0
  %v3618 = vmax.f32 %v3615, 0.0
  %v3619 = vld [vmem:[%s24] sm:$0xff]
  %v3620 = vld [vmem:[%s24 + $0x8] sm:$0xff]
  %v3621 = vld [vmem:[%s24 + $0x10] sm:$0xff]
  %v3622 = vld [vmem:[%s25] sm:$0x1]
  %v3624 = vlaneseq
  %v3625 = vshrl.u32 %v3624, 7
  %v3626 = vsub.s32 0, %v3625
  %v3627 = vrot.slane %v3622, %v3626
  %v3630 = vsel %vm263, %v3618, 0
  %3632 = vmatprep.subr.mxu0 0.0
  %3633 = vmatpush1.msra.mxu0 %v3619
  %3634 = vmatprep.subr.mxu0 0.0
  %3635 = vmatpush1.msra.mxu0 %v3620
  %3636 = vmatprep.subr.mxu0 0.0
  %3637 = vmatpush1.msra.mxu0 %v3621
  %3638 = vmatprep.subr.mxu0 0.0
  %3639 = vmatpush1.msra.mxu0 0.0
  %3640 = vmatprep.subr.mxu0 0.0
  %3641 = vmatpush1.msra.mxu0 0.0
  %3642 = vmatprep.subr.mxu0 0.0
  %3643 = vmatpush1.msra.mxu0 0.0
  %3644 = vmatprep.subr.mxu0 0.0
  %3645 = vmatpush1.msra.mxu0 0.0
  %3646 = vmatprep.subr.mxu0 0.0
  %3647 = vmatpush1.msra.mxu0 0.0
  %3648 = vmatprep.subr.mxu0 0.0
  %3649 = vmatpush1.msra.mxu0 0.0
  %3650 = vmatprep.subr.mxu0 0.0
  %3651 = vmatpush1.msra.mxu0 0.0
  %3652 = vmatprep.subr.mxu0 0.0
  %3653 = vmatpush1.msra.mxu0 0.0
  %3654 = vmatprep.subr.mxu0 0.0
  %3655 = vmatpush1.msra.mxu0 0.0
  %3656 = vmatprep.subr.mxu0 0.0
  %3657 = vmatpush1.msra.mxu0 0.0
  %3658 = vmatprep.subr.mxu0 0.0
  %3659 = vmatpush1.msra.mxu0 0.0
  %3660 = vmatprep.subr.mxu0 0.0
  %3661 = vmatpush1.msra.mxu0 0.0
  %3662 = vmatprep.subr.mxu0 0.0
  %3663 = vmatpush1.msra.mxu0 0.0
  %3664 = vmatprep.subr.mxu0 0.0
  %3665 = vmatpush1.msra.mxu0 0.0
  %3666 = vmatprep.subr.mxu0 0.0
  %3667 = vmatpush1.msra.mxu0 0.0
  %3668 = vmatprep.subr.mxu0 0.0
  %3669 = vmatpush1.msra.mxu0 0.0
  %3670 = vmatprep.subr.mxu0 0.0
  %3671 = vmatpush1.msra.mxu0 0.0
  %3672 = vmatprep.subr.mxu0 0.0
  %3673 = vmatpush1.msra.mxu0 0.0
  %3674 = vmatprep.subr.mxu0 0.0
  %3675 = vmatpush1.msra.mxu0 0.0
  %3676 = vmatprep.subr.mxu0 0.0
  %3677 = vmatpush1.msra.mxu0 0.0
  %3678 = vmatprep.subr.mxu0 0.0
  %3679 = vmatpush1.msra.mxu0 0.0
  %3680 = vmatprep.subr.mxu0 0.0
  %3681 = vmatpush1.msra.mxu0 0.0
  %3682 = vmatprep.subr.mxu0 0.0
  %3683 = vmatpush1.msra.mxu0 0.0
  %3684 = vmatprep.subr.mxu0 0.0
  %3685 = vmatpush1.msra.mxu0 0.0
  %3686 = vmatprep.subr.mxu0 0.0
  %3687 = vmatpush1.msra.mxu0 0.0
  %3688 = vmatprep.subr.mxu0 0.0
  %3689 = vmatpush1.msra.mxu0 0.0
  %3690 = vmatprep.subr.mxu0 0.0
  %3691 = vmatpush1.msra.mxu0 0.0
  %3692 = vmatprep.subr.mxu0 0.0
  %3693 = vmatpush1.msra.mxu0 0.0
  %3694 = vmatprep.subr.mxu0 0.0
  %3695 = vmatpush1.msra.mxu0 0.0
  %3696 = vmatprep.mubr.f32.mxu0 0.0
  %3697 = vmatmul.mubr.f32.gmra.mrb[0].mxu0 %v3630
  %v3698 = vpop.f32.mrb[0].mxu0
  %v3699 = vadd.f32 %v3627, %v3698
  %v3700 = vpop.f32.mrb[0].mxu0
  %3701 = vdwg.mxu0
  %vm3702 = vcmask 31744
  %v3703 = vsel %vm3702, %v3699, -inf
  %3704 = vmax.xlane.f32.xlu0 %v3703
  %v3705 = vpop.xlane.xlu0 %3704
  %v3706 = vsub.f32 %v3699, %v3705
  %v3707 = vmul.f32 %v3706, 1.442695
  %v3708 = vpow.pop %v3707
  %v3709 = vsel %vm3702, %v3708, 0.0
  %3710 = vadd.xlane.f32.xlu0 %v3709
  %v3711 = vpop.xlane.xlu0 %3710
  %v3712 = vlog2.pop %v3711
  %v3713 = vmul.f32 %v3712, 0.6931472
  %v3714 = vsub.f32 %v3706, %v3713
  %3715 = vst.msk [vmem:[%s26] sm:$0xff] %vm3702, %v3714
  // Predicated region
  $region106: #{rmfn_forward.1} parent=0 // pred_check
    _
  $region107: #{rmfn_forward.1} parent=0 // pred_check_branch
    %3717 = sbr.rel (0) target = $region109
  $region108: #{rmfn_forward.1} parent=0 // pred_region
    _
  $region109: #{rmfn_forward.1} parent=0 // pred_fallthru
    _
  // Predicated region
  $region110: #{rmfn_forward.1} parent=0 // pred_check
    _
  $region111: #{rmfn_forward.1} parent=0 // pred_check_branch
    %3719 = sbr.rel (0) target = $region113
  $region112: #{rmfn_forward.1} parent=0 // pred_region
    _
  $region113: #{rmfn_forward.1} parent=0 // pred_fallthru
    _

</llo_original>
